<compile_context>
chip_gen: v7x
topology: tpu7x:2x2x1
jax: 0.10.0
libtpu: 0.0.40
codegen_flags: <defaults>
</compile_context>

<pallas_src>
import functools
import math

import jax
import jax.numpy as jnp
from jax import lax
from jax.experimental import pallas as pl
from jax.experimental.pallas import tpu as pltpu

FEATURE_DIM = 32          # feature_dim   (scaled down from 256)
AUDIO_DIM = 48            # audio_dim     (scaled down from 384)
PERIOD = 25
MAX_SEQ_LEN = 64
WINDOW_SIZE = 4           # window_size   (scaled down from 16)
MOMENTUM = 0.9
HEAD_DIMS = (("landmarks", 136), ("au", 17), ("pose", 3), ("gaze", 2))
REACTION_DIM = 158        # 136 + 17 + 3 + 2

# Lane-dense padded widths (all multiples of 128).
DP = 128                  # padded feature dim in the kernel datapath (32 -> 128)
MKP = 256                 # padded motion / reaction input width      (158 -> 256)
AKP = 128                 # padded audio input width                  (48 -> 128)
SK = MKP + AKP            # stacked motion|audio column width         (384)
RP = 256                  # padded reaction output width              (158 -> 256)
FRONT_K = SK + RP         # block-diagonal front-end K                (640)


# --------------------------- fused whole-forward kernel ---------------------

def _make_kernel(B, W, n_win, fbar):
    BW = B * W

    def kernel(stacked_ref, sel_ref, rep_ref, frac_ref, scale_ref, const_ref,
               wbd_ref, genw_ref, genb_ref, decw_ref, decb_ref,
               spkw_ref, spkb_ref,
               preds_ref, musd_ref, spkrec_ref):
        f32 = jnp.float32

        # Loop-invariant operands: loaded once, closed over by the loop body.
        sel = sel_ref[...]          # (B, 3*BW)   per-batch window-sum selector
        rep = rep_ref[...]          # (BW, B)     batch -> window-row replicator
        frac = frac_ref[...]        # (BW, DP)    2-point interpolation fractions
        wbd = wbd_ref[...]          # (FRONT_K, 3*DP) block-diag front end
        genw = genw_ref[...]        # (3*DP, 2*DP)    mu | logvar generator
        genb = genb_ref[...]        # (1, 2*DP)
        decw = decw_ref[...]        # (DP, RP)        listener decoder head
        decb = decb_ref[...]        # (1, RP)

        def body(i, carry):
            raw_ma, past_mean, prev_ms, _sm_last = carry
            first = jnp.where(i == 0, 1.0, 0.0)

            # -- running raw sums replace the O(T^2) prefix means -----------
            win = stacked_ref[i]                                   # (3BW, SK)
            raw_ma = raw_ma + jnp.dot(sel, win, preferred_element_type=f32)

            # -- block-diag front end: motion enc + audio enc + past linear --
            front = jnp.concatenate([raw_ma * scale_ref[i], past_mean], axis=-1)
            gen_in = (jnp.dot(front, wbd, preferred_element_type=f32)
                      + const_ref[i])                              # (B, 3DP)
            sm_mean = gen_in[:, :DP]
            smsa = sm_mean + gen_in[:, DP:2 * DP]

            # -- motion sample generator: mu | logvar in one matmul ----------
            gen_out = jnp.dot(gen_in, genw, preferred_element_type=f32) + genb
            mu = gen_out[:, :DP]
            std = jnp.exp(0.5 * gen_out[:, DP:])
            musd_ref[i] = jnp.concatenate([mu, std], axis=-1)      # (B, 2DP)
            # TODO(synk): torch samples Normal(mu, std); deterministic mean kept.
            ms = mu

            # -- momentum blend + 2-point linear interpolation ---------------
            blended = (first * ms
                       + (1.0 - first) * (MOMENTUM * prev_ms
                                          + (1.0 - MOMENTUM) * ms))
            rep_src = jnp.concatenate([prev_ms, blended, smsa], axis=-1)  # (B, 3DP)
            rep_rows = jnp.dot(rep, rep_src, preferred_element_type=f32)  # (BW, 3DP)
            prev_rows = rep_rows[:, :DP]
            blend_rows = rep_rows[:, DP:2 * DP]
            smsa_rows = rep_rows[:, 2 * DP:]
            interp = prev_rows * (1.0 - frac) + blend_rows * frac
            msi_rows = first * blend_rows + (1.0 - first) * interp
            fused_rows = msi_rows + smsa_rows                             # (BW, DP)

            # -- decoder head; B extra rows compute the next past-window mean
            #    in the same matmul (the window mean is linear in fused).
            msi_mean = (first * blended
                        + (1.0 - first) * (prev_ms * (1.0 - fbar)
                                           + blended * fbar))
            dec_in = jnp.concatenate([fused_rows, msi_mean + smsa], axis=0)
            dec_out = jnp.dot(dec_in, decw, preferred_element_type=f32) + decb
            preds_ref[i] = dec_out[:BW]                                   # (BW, RP)
            past_mean = dec_out[BW:]                                      # (B, RP)
            return raw_ma, past_mean, blended, sm_mean

        carry0 = (jnp.zeros((B, SK), f32), jnp.zeros((B, RP), f32),
                  jnp.zeros((B, DP), f32), jnp.zeros((B, DP), f32))
        *_, sm_last = lax.fori_loop(0, n_win, body, carry0,
                                    unroll=(n_win <= 8))

        # Speaker vector == cumulative motion mean at the last window.
        spkrec_ref[...] = (jnp.dot(sm_last, spkw_ref[...],
                                   preferred_element_type=f32) + spkb_ref[...])

    return kernel


# ------------------------------- JAX wrapper -------------------------------

def make_ppe_table(d_model, period, max_seq_len):
    pos = jnp.arange(period, dtype=jnp.float32)[:, None]
    div = jnp.exp(jnp.arange(0, d_model, 2, dtype=jnp.float32)
                  * (-math.log(10000.0) / d_model))
    pe = jnp.zeros((period, d_model), dtype=jnp.float32)
    pe = pe.at[:, 0::2].set(jnp.sin(pos * div))
    pe = pe.at[:, 1::2].set(jnp.cos(pos * div))
    reps = math.ceil(max_seq_len / period)
    return jnp.tile(pe, (reps, 1))[:max_seq_len]          # (max_seq_len, d_model)


@functools.partial(jax.jit, static_argnames=("speaker_out",))
def facial_reaction_forward(params, ppe_table, speaker_data, speaker_out=False):
    f32 = jnp.float32
    motion = jnp.concatenate(
        [speaker_data["landmarks"], speaker_data["au"],
         speaker_data["pose"], speaker_data["gaze"]], axis=-1).astype(f32)
    audio = speaker_data["audio"].astype(f32)

    B, T, _ = motion.shape
    TA = audio.shape[1]
    W, D = WINDOW_SIZE, FEATURE_DIM
    n_win = math.ceil(T / W)
    BW = B * W
    T_pad, TA_pad = n_win * W, 2 * n_win * W
    assert ppe_table.shape[0] >= max(T_pad, TA_pad), "increase MAX_SEQ_LEN"

    # ---- window-major, lane-padded inputs (layout plumbing only) ----------
    mo = jnp.zeros((B, T_pad, MKP), f32).at[:, :T, :REACTION_DIM].set(motion)
    au = jnp.zeros((B, TA_pad, AKP), f32).at[:, :TA, :AUDIO_DIM].set(audio)
    mo_w = (mo.reshape(B, n_win, W, MKP).transpose(1, 0, 2, 3)
            .reshape(n_win, BW, MKP))
    au_w = (au.reshape(B, n_win, 2 * W, AKP).transpose(1, 0, 2, 3)
            .reshape(n_win, 2 * BW, AKP))
    stacked = jnp.zeros((n_win, 3 * BW, SK), f32)
    stacked = stacked.at[:, :BW, :MKP].set(mo_w)
    stacked = stacked.at[:, BW:, MKP:].set(au_w)

    # ---- tiny constant tables (hoisted out of the per-window loop) --------
    r = jnp.arange(3 * BW)
    row_batch = jnp.where(r < BW, r // W, (r - BW) // (2 * W))
    sel = (row_batch[None, :] == jnp.arange(B)[:, None]).astype(f32)   # (B, 3BW)
    rep = (jnp.arange(BW)[:, None] // W
           == jnp.arange(B)[None, :]).astype(f32)                      # (BW, B)

    # F.interpolate(mode='linear', align_corners=False) between 2 samples.
    frac_vals = [min(max((j + 0.5) * 2.0 / W - 0.5, 0.0), 1.0) for j in range(W)]
    fbar = float(sum(frac_vals) / W)
    fr = jnp.asarray(frac_vals, f32)[jnp.arange(BW) % W]
    frac = jnp.broadcast_to(fr[:, None], (BW, DP))

    idx = jnp.arange(n_win)
    cnt_m = jnp.minimum((idx + 1) * W, T)
    cnt_a = jnp.minimum((idx + 1) * 2 * W, TA)
    inv_m = 1.0 / cnt_m.astype(f32)
    inv_a = 1.0 / cnt_a.astype(f32)
    scale = jnp.concatenate(
        [jnp.broadcast_to(inv_m[:, None], (n_win, MKP)),
         jnp.broadcast_to(inv_a[:, None], (n_win, AKP))], axis=1)[:, None, :]

    ppe_cum = jnp.cumsum(ppe_table, axis=0)
    ppe_mean_m = ppe_cum[cnt_m - 1] / cnt_m[:, None].astype(f32)
    ppe_mean_a = ppe_cum[cnt_a - 1] / cnt_a[:, None].astype(f32)
    ppe_p_mean = jnp.mean(ppe_table[:W], axis=0)
    # TODO(synk): PPE phase for the past-reaction window assumed 0..W-1 (torch
    # applies self.ppe to a fresh W-long tensor each iteration).
    const = jnp.zeros((n_win, 3 * DP), f32)
    const = const.at[:, 0:D].set(params["enc_motion_b"][None, :] + ppe_mean_m)
    const = const.at[:, DP:DP + D].set(params["enc_audio_b"][None, :] + ppe_mean_a)
    const = const.at[:, 2 * DP:2 * DP + D].set(
        (params["past_motion_b"] + ppe_p_mean)[None, :])
    const = const[:, None, :]                                           # (n_win,1,3DP)

    # ---- lane-padded / fused weights ---------------------------------------
    w_bd = jnp.zeros((FRONT_K, 3 * DP), f32)
    w_bd = w_bd.at[0:REACTION_DIM, 0:D].set(params["enc_motion_w"])
    w_bd = w_bd.at[MKP:MKP + AUDIO_DIM, DP:DP + D].set(params["enc_audio_w"])
    w_bd = w_bd.at[SK:SK + REACTION_DIM, 2 * DP:2 * DP + D].set(
        params["past_motion_w"])

    gen_w = jnp.zeros((3 * DP, 2 * DP), f32)
    gen_w = gen_w.at[0:D, 0:D].set(params["gen_mu_w"][0:D])
    gen_w = gen_w.at[DP:DP + D, 0:D].set(params["gen_mu_w"][D:2 * D])
    gen_w = gen_w.at[2 * DP:2 * DP + D, 0:D].set(params["gen_mu_w"][2 * D:])
    gen_w = gen_w.at[0:D, DP:DP + D].set(params["gen_lv_w"][0:D])
    gen_w = gen_w.at[DP:DP + D, DP:DP + D].set(params["gen_lv_w"][D:2 * D])
    gen_w = gen_w.at[2 * DP:2 * DP + D, DP:DP + D].set(params["gen_lv_w"][2 * D:])
    gen_b = jnp.zeros((1, 2 * DP), f32)
    gen_b = gen_b.at[0, 0:D].set(params["gen_mu_b"])
    gen_b = gen_b.at[0, DP:DP + D].set(params["gen_lv_b"])

    dec_w = jnp.zeros((DP, RP), f32).at[:D, :REACTION_DIM].set(params["dec_head_w"])
    dec_b = jnp.zeros((1, RP), f32).at[0, :REACTION_DIM].set(params["dec_head_b"])
    spk_w = jnp.zeros((DP, RP), f32).at[:D, :REACTION_DIM].set(params["spk_dec_w"])
    spk_b = jnp.zeros((1, RP), f32).at[0, :REACTION_DIM].set(params["spk_dec_b"])

    kernel = _make_kernel(B, W, n_win, fbar)
    vmem_spec = pl.BlockSpec(memory_space=pltpu.MemorySpace.VMEM)
    preds, musd, spk_rec = pl.pallas_call(
        kernel,
        out_shape=(
            jax.ShapeDtypeStruct((n_win, BW, RP), f32),      # padded reaction rows
            jax.ShapeDtypeStruct((n_win, B, 2 * DP), f32),   # mu | std slab
            jax.ShapeDtypeStruct((B, RP), f32),              # speaker reconstruction
        ),
        in_specs=[vmem_spec] * 13,
        out_specs=(vmem_spec, vmem_spec, vmem_spec),
    )(stacked, sel, rep, frac, scale, const,
      w_bd, gen_w, gen_b, dec_w, dec_b, spk_w, spk_b)

    preds = (preds.reshape(n_win, B, W, RP).transpose(1, 0, 2, 3)
             .reshape(B, T_pad, RP)[:, :T, :REACTION_DIM])
    final_predictions, off = {}, 0
    for name, dim in HEAD_DIMS:
        final_predictions[name] = preds[..., off:off + dim]
        off += dim
    distributions = [(musd[i, :, :D], musd[i, :, DP:DP + D]) for i in range(n_win)]
    speaker_reconstruction = spk_rec[:, :REACTION_DIM] if speaker_out else None
    return final_predictions, distributions, speaker_reconstruction


# --------------------- pure-JAX reference (same math) ----------------------

def _reference_forward(params, ppe_table, speaker_data, speaker_out=False):
    hp = lax.Precision.HIGHEST
    dot = lambda a, b: jnp.dot(a, b, precision=hp)
    motion = jnp.concatenate(
        [speaker_data["landmarks"], speaker_data["au"],
         speaker_data["pose"], speaker_data["gaze"]], axis=-1)
    audio = speaker_data["audio"]
    B, T, _ = motion.shape
    W, D = WINDOW_SIZE, FEATURE_DIM
    sm = dot(motion, params["enc_motion_w"]) + params["enc_motion_b"] \
        + ppe_table[None, :T]
    sa = dot(audio, params["enc_audio_w"]) + params["enc_audio_b"] \
        + ppe_table[None, :audio.shape[1]]
    speaker_vector = sm.mean(axis=1)
    n_win = math.ceil(T / W)
    past_react = jnp.zeros((B, W, REACTION_DIM), jnp.float32)
    past_ms, dists, preds = None, [], []
    j = jnp.arange(W, dtype=jnp.float32)
    frac = jnp.clip((j + 0.5) * (2.0 / W) - 0.5, 0.0, 1.0)[None, :, None]
    for i in range(n_win):
        sm_c, sa_c = sm[:, :(i + 1) * W], sa[:, :2 * (i + 1) * W]
        plm = dot(past_react, params["past_motion_w"]) + params["past_motion_b"] \
            + ppe_table[None, :W]
        g_in = jnp.concatenate([sm_c.mean(1), sa_c.mean(1), plm.mean(1)], axis=-1)
        mu = dot(g_in, params["gen_mu_w"]) + params["gen_mu_b"]
        std = jnp.exp(0.5 * (dot(g_in, params["gen_lv_w"]) + params["gen_lv_b"]))
        dists.append((mu, std))
        ms = mu
        if past_ms is None:
            msi = jnp.broadcast_to(ms[:, None, :], (B, W, D))
        else:
            ms = MOMENTUM * past_ms + (1.0 - MOMENTUM) * ms
            msi = past_ms[:, None, :] * (1.0 - frac) + ms[:, None, :] * frac
        past_ms = ms
        fused = msi + sm_c.mean(1)[:, None, :] + sa_c.mean(1)[:, None, :]
        out = dot(fused, params["dec_head_w"]) + params["dec_head_b"]
        preds.append(out)
        past_react = out
    full = jnp.concatenate(preds, axis=1)[:, :T]
    final, off = {}, 0
    for name, dim in HEAD_DIMS:
        final[name] = full[..., off:off + dim]
        off += dim
    spk_rec = (dot(speaker_vector, params["spk_dec_w"]) + params["spk_dec_b"]
               ) if speaker_out else None
    return final, dists, spk_rec


def init_params(key):
    ks = jax.random.split(key, 7)

    def lin(k, fan_in, fan_out):
        kw, kb = jax.random.split(k)
        lim = 1.0 / math.sqrt(fan_in)
        w = jax.random.uniform(kw, (fan_in, fan_out), jnp.float32, -lim, lim)
        b = jax.random.uniform(kb, (fan_out,), jnp.float32, -lim, lim)
        return w, b

    p = {}
    p["enc_motion_w"], p["enc_motion_b"] = lin(ks[0], REACTION_DIM, FEATURE_DIM)
    p["enc_audio_w"], p["enc_audio_b"] = lin(ks[1], AUDIO_DIM, FEATURE_DIM)
    p["past_motion_w"], p["past_motion_b"] = lin(ks[2], REACTION_DIM, FEATURE_DIM)
    p["gen_mu_w"], p["gen_mu_b"] = lin(ks[3], 3 * FEATURE_DIM, FEATURE_DIM)
    p["gen_lv_w"], p["gen_lv_b"] = lin(ks[4], 3 * FEATURE_DIM, FEATURE_DIM)
    p["dec_head_w"], p["dec_head_b"] = lin(ks[5], FEATURE_DIM, REACTION_DIM)
    p["spk_dec_w"], p["spk_dec_b"] = lin(ks[6], FEATURE_DIM, REACTION_DIM)
    return p


if __name__ == "__main__":
    key = jax.random.PRNGKey(0)
    pkey, dkey = jax.random.split(key)
    params = init_params(pkey)
    ppe_table = make_ppe_table(FEATURE_DIM, PERIOD, MAX_SEQ_LEN)

    B, T = 2, 8  # 2 windows of size 4
    dks = jax.random.split(dkey, 5)
    speaker_data = {
        "landmarks": jax.random.normal(dks[0], (B, T, 136), jnp.float32),
        "au":        jax.random.normal(dks[1], (B, T, 17), jnp.float32),
        "pose":      jax.random.normal(dks[2], (B, T, 3), jnp.float32),
        "gaze":      jax.random.normal(dks[3], (B, T, 2), jnp.float32),
        "audio":     jax.random.normal(dks[4], (B, 2 * T, AUDIO_DIM), jnp.float32),
    }

    preds, dists, spk_rec = facial_reaction_forward(
        params, ppe_table, speaker_data, speaker_out=True)
    jax.block_until_ready(preds)
    jax.block_until_ready(spk_rec)

    for name, dim in HEAD_DIMS:
        assert preds[name].shape == (B, T, dim), (name, preds[name].shape)
    assert spk_rec.shape == (B, REACTION_DIM)
    assert len(dists) == math.ceil(T / WINDOW_SIZE)

    # Numerical check against a pure-JAX reference of the same synthetic model.
    ref_preds, ref_dists, ref_spk = _reference_forward(
        params, ppe_table, speaker_data, speaker_out=True)

    def _close(a, b, tol=5e-3):
        return float(jnp.max(jnp.abs(a - b))) <= tol

    for name, _ in HEAD_DIMS:
        assert _close(preds[name], ref_preds[name]), name
    assert _close(spk_rec, ref_spk)
    for (m, s), (rm, rs) in zip(dists, ref_dists):
        assert _close(m, rm) and _close(s, rs)

    print("KERNEL_OK")
</pallas_src>

<mosaic_0001>
module attributes {stable_mosaic.version = 11 : i64} {
  func.func @kernel(%arg0: memref<2x24x384xf32, #tpu.memory_space<vmem>>, %arg1: memref<2x24xf32, #tpu.memory_space<vmem>>, %arg2: memref<8x2xf32, #tpu.memory_space<vmem>>, %arg3: memref<8x128xf32, #tpu.memory_space<vmem>>, %arg4: memref<2x1x384xf32, #tpu.memory_space<vmem>>, %arg5: memref<2x1x384xf32, #tpu.memory_space<vmem>>, %arg6: memref<640x384xf32, #tpu.memory_space<vmem>>, %arg7: memref<384x256xf32, #tpu.memory_space<vmem>>, %arg8: memref<1x256xf32, #tpu.memory_space<vmem>>, %arg9: memref<128x256xf32, #tpu.memory_space<vmem>>, %arg10: memref<1x256xf32, #tpu.memory_space<vmem>>, %arg11: memref<128x256xf32, #tpu.memory_space<vmem>>, %arg12: memref<1x256xf32, #tpu.memory_space<vmem>>, %arg13: memref<2x8x256xf32, #tpu.memory_space<vmem>>, %arg14: memref<2x2x256xf32, #tpu.memory_space<vmem>>, %arg15: memref<2x256xf32, #tpu.memory_space<vmem>>) attributes {dimension_semantics = [], scalar_prefetch = 0 : i64, scratch_operands = 0 : i64, tpu.core_type = #tpu.core_type<tc>} {
    %c0 = arith.constant 0 : index
    %c0_0 = arith.constant 0 : index
    %0 = vector.load %arg1[%c0, %c0_0] : memref<2x24xf32, #tpu.memory_space<vmem>>, vector<2x24xf32>
    %c0_1 = arith.constant 0 : index
    %c0_2 = arith.constant 0 : index
    %1 = vector.load %arg2[%c0_1, %c0_2] : memref<8x2xf32, #tpu.memory_space<vmem>>, vector<8x2xf32>
    %c0_3 = arith.constant 0 : index
    %c0_4 = arith.constant 0 : index
    %2 = vector.load %arg3[%c0_3, %c0_4] : memref<8x128xf32, #tpu.memory_space<vmem>>, vector<8x128xf32>
    %c0_5 = arith.constant 0 : index
    %c0_6 = arith.constant 0 : index
    %3 = vector.load %arg6[%c0_5, %c0_6] : memref<640x384xf32, #tpu.memory_space<vmem>>, vector<640x384xf32>
    %c0_7 = arith.constant 0 : index
    %c0_8 = arith.constant 0 : index
    %4 = vector.load %arg7[%c0_7, %c0_8] : memref<384x256xf32, #tpu.memory_space<vmem>>, vector<384x256xf32>
    %c0_9 = arith.constant 0 : index
    %c0_10 = arith.constant 0 : index
    %5 = vector.load %arg8[%c0_9, %c0_10] : memref<1x256xf32, #tpu.memory_space<vmem>>, vector<1x256xf32>
    %c0_11 = arith.constant 0 : index
    %c0_12 = arith.constant 0 : index
    %6 = vector.load %arg9[%c0_11, %c0_12] : memref<128x256xf32, #tpu.memory_space<vmem>>, vector<128x256xf32>
    %c0_13 = arith.constant 0 : index
    %c0_14 = arith.constant 0 : index
    %7 = vector.load %arg10[%c0_13, %c0_14] : memref<1x256xf32, #tpu.memory_space<vmem>>, vector<1x256xf32>
    %cst = arith.constant 0.000000e+00 : f32
    %8 = vector.broadcast %cst : f32 to vector<2x384xf32>
    %cst_15 = arith.constant 0.000000e+00 : f32
    %9 = vector.broadcast %cst_15 : f32 to vector<2x256xf32>
    %cst_16 = arith.constant 0.000000e+00 : f32
    %10 = vector.broadcast %cst_16 : f32 to vector<2x128xf32>
    %cst_17 = arith.constant 0.000000e+00 : f32
    %11 = vector.broadcast %cst_17 : f32 to vector<2x128xf32>
    %c0_i32 = arith.constant 0 : i32
    %c0_i32_18 = arith.constant 0 : i32
    %12 = arith.cmpi eq, %c0_i32, %c0_i32_18 : i32
    %cst_19 = arith.constant 1.000000e+00 : f32
    %cst_20 = arith.constant 0.000000e+00 : f32
    %13 = arith.select %12, %cst_19, %cst_20 : f32
    %14 = arith.index_cast %c0_i32 : i32 to index
    %c0_21 = arith.constant 0 : index
    %c0_22 = arith.constant 0 : index
    %15 = vector.load %arg0[%14, %c0_21, %c0_22] : memref<2x24x384xf32, #tpu.memory_space<vmem>>, vector<1x24x384xf32>
    %16 = vector.shape_cast %15 : vector<1x24x384xf32> to vector<24x384xf32>
    %cst_23 = arith.constant dense<0.000000e+00> : vector<2x384xf32>
    %17 = tpu.matmul %0, %16, %cst_23 {dimension_numbers = #tpu.dot_dimension_numbers<[1], [0], [0], [1], [0, 0, 1, 1], [], []>} : vector<2x24xf32>, vector<24x384xf32>, vector<2x384xf32> -> vector<2x384xf32>
    %18 = arith.addf %8, %17 : vector<2x384xf32>
    %19 = arith.index_cast %c0_i32 : i32 to index
    %c0_24 = arith.constant 0 : index
    %c0_25 = arith.constant 0 : index
    %20 = vector.load %arg4[%19, %c0_24, %c0_25] : memref<2x1x384xf32, #tpu.memory_space<vmem>>, vector<1x1x384xf32>
    %21 = vector.shape_cast %20 : vector<1x1x384xf32> to vector<1x384xf32>
    %22 = vector.broadcast %21 : vector<1x384xf32> to vector<2x384xf32>
    %23 = arith.mulf %18, %22 : vector<2x384xf32>
    %24 = tpu.concatenate %23, %9 in 1 : vector<2x384xf32>, vector<2x256xf32> -> vector<2x640xf32>
    %cst_26 = arith.constant dense<0.000000e+00> : vector<2x384xf32>
    %25 = tpu.matmul %24, %3, %cst_26 {dimension_numbers = #tpu.dot_dimension_numbers<[1], [0], [0], [1], [0, 0, 1, 1], [], []>} : vector<2x640xf32>, vector<640x384xf32>, vector<2x384xf32> -> vector<2x384xf32>
    %26 = arith.index_cast %c0_i32 : i32 to index
    %c0_27 = arith.constant 0 : index
    %c0_28 = arith.constant 0 : index
    %27 = vector.load %arg5[%26, %c0_27, %c0_28] : memref<2x1x384xf32, #tpu.memory_space<vmem>>, vector<1x1x384xf32>
    %28 = vector.shape_cast %27 : vector<1x1x384xf32> to vector<1x384xf32>
    %29 = vector.broadcast %28 : vector<1x384xf32> to vector<2x384xf32>
    %30 = arith.addf %25, %29 : vector<2x384xf32>
    %31 = vector.extract_strided_slice %30 {offsets = [0, 0], sizes = [2, 128], strides = [1, 1]} : vector<2x384xf32> to vector<2x128xf32>
    %32 = vector.extract_strided_slice %30 {offsets = [0, 128], sizes = [2, 128], strides = [1, 1]} : vector<2x384xf32> to vector<2x128xf32>
    %33 = arith.addf %31, %32 : vector<2x128xf32>
    %cst_29 = arith.constant dense<0.000000e+00> : vector<2x256xf32>
    %34 = tpu.matmul %30, %4, %cst_29 {dimension_numbers = #tpu.dot_dimension_numbers<[1], [0], [0], [1], [0, 0, 1, 1], [], []>} : vector<2x384xf32>, vector<384x256xf32>, vector<2x256xf32> -> vector<2x256xf32>
    %35 = vector.broadcast %5 : vector<1x256xf32> to vector<2x256xf32>
    %36 = arith.addf %34, %35 : vector<2x256xf32>
    %37 = vector.extract_strided_slice %36 {offsets = [0, 0], sizes = [2, 128], strides = [1, 1]} : vector<2x256xf32> to vector<2x128xf32>
    %38 = vector.extract_strided_slice %36 {offsets = [0, 128], sizes = [2, 128], strides = [1, 1]} : vector<2x256xf32> to vector<2x128xf32>
    %cst_30 = arith.constant 5.000000e-01 : f32
    %39 = vector.broadcast %cst_30 : f32 to vector<2x128xf32>
    %40 = arith.mulf %39, %38 : vector<2x128xf32>
    %41 = math.exp %40 : vector<2x128xf32>
    %42 = tpu.concatenate %37, %41 in 1 : vector<2x128xf32>, vector<2x128xf32> -> vector<2x256xf32>
    %43 = arith.index_cast %c0_i32 : i32 to index
    %c0_31 = arith.constant 0 : index
    %c0_32 = arith.constant 0 : index
    %44 = vector.load %arg14[%43, %c0_31, %c0_32] : memref<2x2x256xf32, #tpu.memory_space<vmem>>, vector<1x2x256xf32>
    %45 = vector.shape_cast %44 : vector<1x2x256xf32> to vector<2x256xf32>
    %46 = vector.shape_cast %42 : vector<2x256xf32> to vector<1x2x256xf32>
    tpu.vector_store %arg14[%43, %c0_31, %c0_32], %46 {strides = array<i32>} : memref<2x2x256xf32, #tpu.memory_space<vmem>>, vector<1x2x256xf32>,
    %47 = vector.broadcast %13 : f32 to vector<2x128xf32>
    %48 = arith.mulf %47, %37 : vector<2x128xf32>
    %cst_33 = arith.constant 1.000000e+00 : f32
    %49 = arith.subf %cst_33, %13 : f32
    %cst_34 = arith.constant 0.899999976 : f32
    %50 = vector.broadcast %cst_34 : f32 to vector<2x128xf32>
    %51 = arith.mulf %50, %10 : vector<2x128xf32>
    %cst_35 = arith.constant 1.000000e-01 : f32
    %52 = vector.broadcast %cst_35 : f32 to vector<2x128xf32>
    %53 = arith.mulf %52, %37 : vector<2x128xf32>
    %54 = arith.addf %51, %53 : vector<2x128xf32>
    %55 = vector.broadcast %49 : f32 to vector<2x128xf32>
    %56 = arith.mulf %55, %54 : vector<2x128xf32>
    %57 = arith.addf %48, %56 : vector<2x128xf32>
    %58 = tpu.concatenate %10, %57, %33 in 1 : vector<2x128xf32>, vector<2x128xf32>, vector<2x128xf32> -> vector<2x384xf32>
    %cst_36 = arith.constant dense<0.000000e+00> : vector<8x384xf32>
    %59 = tpu.matmul %1, %58, %cst_36 {dimension_numbers = #tpu.dot_dimension_numbers<[1], [0], [0], [1], [0, 0, 1, 1], [], []>} : vector<8x2xf32>, vector<2x384xf32>, vector<8x384xf32> -> vector<8x384xf32>
    %60 = vector.extract_strided_slice %59 {offsets = [0, 0], sizes = [8, 128], strides = [1, 1]} : vector<8x384xf32> to vector<8x128xf32>
    %61 = vector.extract_strided_slice %59 {offsets = [0, 128], sizes = [8, 128], strides = [1, 1]} : vector<8x384xf32> to vector<8x128xf32>
    %62 = vector.extract_strided_slice %59 {offsets = [0, 256], sizes = [8, 128], strides = [1, 1]} : vector<8x384xf32> to vector<8x128xf32>
    %cst_37 = arith.constant 1.000000e+00 : f32
    %63 = vector.broadcast %cst_37 : f32 to vector<8x128xf32>
    %64 = arith.subf %63, %2 : vector<8x128xf32>
    %65 = arith.mulf %60, %64 : vector<8x128xf32>
    %66 = arith.mulf %61, %2 : vector<8x128xf32>
    %67 = arith.addf %65, %66 : vector<8x128xf32>
    %68 = vector.broadcast %13 : f32 to vector<8x128xf32>
    %69 = arith.mulf %68, %61 : vector<8x128xf32>
    %cst_38 = arith.constant 1.000000e+00 : f32
    %70 = arith.subf %cst_38, %13 : f32
    %71 = vector.broadcast %70 : f32 to vector<8x128xf32>
    %72 = arith.mulf %71, %67 : vector<8x128xf32>
    %73 = arith.addf %69, %72 : vector<8x128xf32>
    %74 = arith.addf %73, %62 : vector<8x128xf32>
    %75 = vector.broadcast %13 : f32 to vector<2x128xf32>
    %76 = arith.mulf %75, %57 : vector<2x128xf32>
    %cst_39 = arith.constant 1.000000e+00 : f32
    %77 = arith.subf %cst_39, %13 : f32
    %cst_40 = arith.constant 5.000000e-01 : f32
    %78 = vector.broadcast %cst_40 : f32 to vector<2x128xf32>
    %79 = arith.mulf %10, %78 : vector<2x128xf32>
    %cst_41 = arith.constant 5.000000e-01 : f32
    %80 = vector.broadcast %cst_41 : f32 to vector<2x128xf32>
    %81 = arith.mulf %57, %80 : vector<2x128xf32>
    %82 = arith.addf %79, %81 : vector<2x128xf32>
    %83 = vector.broadcast %77 : f32 to vector<2x128xf32>
    %84 = arith.mulf %83, %82 : vector<2x128xf32>
    %85 = arith.addf %76, %84 : vector<2x128xf32>
    %86 = arith.addf %85, %33 : vector<2x128xf32>
    %87 = tpu.concatenate %74, %86 in 0 : vector<8x128xf32>, vector<2x128xf32> -> vector<10x128xf32>
    %cst_42 = arith.constant dense<0.000000e+00> : vector<10x256xf32>
    %88 = tpu.matmul %87, %6, %cst_42 {dimension_numbers = #tpu.dot_dimension_numbers<[1], [0], [0], [1], [0, 0, 1, 1], [], []>} : vector<10x128xf32>, vector<128x256xf32>, vector<10x256xf32> -> vector<10x256xf32>
    %89 = vector.broadcast %7 : vector<1x256xf32> to vector<10x256xf32>
    %90 = arith.addf %88, %89 : vector<10x256xf32>
    %91 = vector.extract_strided_slice %90 {offsets = [0, 0], sizes = [8, 256], strides = [1, 1]} : vector<10x256xf32> to vector<8x256xf32>
    %92 = arith.index_cast %c0_i32 : i32 to index
    %c0_43 = arith.constant 0 : index
    %c0_44 = arith.constant 0 : index
    %93 = vector.load %arg13[%92, %c0_43, %c0_44] : memref<2x8x256xf32, #tpu.memory_space<vmem>>, vector<1x8x256xf32>
    %94 = vector.shape_cast %93 : vector<1x8x256xf32> to vector<8x256xf32>
    %95 = vector.shape_cast %91 : vector<8x256xf32> to vector<1x8x256xf32>
    tpu.vector_store %arg13[%92, %c0_43, %c0_44], %95 {strides = array<i32>} : memref<2x8x256xf32, #tpu.memory_space<vmem>>, vector<1x8x256xf32>,
    %96 = vector.extract_strided_slice %90 {offsets = [8, 0], sizes = [2, 256], strides = [1, 1]} : vector<10x256xf32> to vector<2x256xf32>
    %c1_i32 = arith.constant 1 : i32
    %c0_i32_45 = arith.constant 0 : i32
    %97 = arith.cmpi eq, %c1_i32, %c0_i32_45 : i32
    %cst_46 = arith.constant 1.000000e+00 : f32
    %cst_47 = arith.constant 0.000000e+00 : f32
    %98 = arith.select %97, %cst_46, %cst_47 : f32
    %99 = arith.index_cast %c1_i32 : i32 to index
    %c0_48 = arith.constant 0 : index
    %c0_49 = arith.constant 0 : index
    %100 = vector.load %arg0[%99, %c0_48, %c0_49] : memref<2x24x384xf32, #tpu.memory_space<vmem>>, vector<1x24x384xf32>
    %101 = vector.shape_cast %100 : vector<1x24x384xf32> to vector<24x384xf32>
    %cst_50 = arith.constant dense<0.000000e+00> : vector<2x384xf32>
    %102 = tpu.matmul %0, %101, %cst_50 {dimension_numbers = #tpu.dot_dimension_numbers<[1], [0], [0], [1], [0, 0, 1, 1], [], []>} : vector<2x24xf32>, vector<24x384xf32>, vector<2x384xf32> -> vector<2x384xf32>
    %103 = arith.addf %18, %102 : vector<2x384xf32>
    %104 = arith.index_cast %c1_i32 : i32 to index
    %c0_51 = arith.constant 0 : index
    %c0_52 = arith.constant 0 : index
    %105 = vector.load %arg4[%104, %c0_51, %c0_52] : memref<2x1x384xf32, #tpu.memory_space<vmem>>, vector<1x1x384xf32>
    %106 = vector.shape_cast %105 : vector<1x1x384xf32> to vector<1x384xf32>
    %107 = vector.broadcast %106 : vector<1x384xf32> to vector<2x384xf32>
    %108 = arith.mulf %103, %107 : vector<2x384xf32>
    %109 = tpu.concatenate %108, %96 in 1 : vector<2x384xf32>, vector<2x256xf32> -> vector<2x640xf32>
    %cst_53 = arith.constant dense<0.000000e+00> : vector<2x384xf32>
    %110 = tpu.matmul %109, %3, %cst_53 {dimension_numbers = #tpu.dot_dimension_numbers<[1], [0], [0], [1], [0, 0, 1, 1], [], []>} : vector<2x640xf32>, vector<640x384xf32>, vector<2x384xf32> -> vector<2x384xf32>
    %111 = arith.index_cast %c1_i32 : i32 to index
    %c0_54 = arith.constant 0 : index
    %c0_55 = arith.constant 0 : index
    %112 = vector.load %arg5[%111, %c0_54, %c0_55] : memref<2x1x384xf32, #tpu.memory_space<vmem>>, vector<1x1x384xf32>
    %113 = vector.shape_cast %112 : vector<1x1x384xf32> to vector<1x384xf32>
    %114 = vector.broadcast %113 : vector<1x384xf32> to vector<2x384xf32>
    %115 = arith.addf %110, %114 : vector<2x384xf32>
    %116 = vector.extract_strided_slice %115 {offsets = [0, 0], sizes = [2, 128], strides = [1, 1]} : vector<2x384xf32> to vector<2x128xf32>
    %117 = vector.extract_strided_slice %115 {offsets = [0, 128], sizes = [2, 128], strides = [1, 1]} : vector<2x384xf32> to vector<2x128xf32>
    %118 = arith.addf %116, %117 : vector<2x128xf32>
    %cst_56 = arith.constant dense<0.000000e+00> : vector<2x256xf32>
    %119 = tpu.matmul %115, %4, %cst_56 {dimension_numbers = #tpu.dot_dimension_numbers<[1], [0], [0], [1], [0, 0, 1, 1], [], []>} : vector<2x384xf32>, vector<384x256xf32>, vector<2x256xf32> -> vector<2x256xf32>
    %120 = vector.broadcast %5 : vector<1x256xf32> to vector<2x256xf32>
    %121 = arith.addf %119, %120 : vector<2x256xf32>
    %122 = vector.extract_strided_slice %121 {offsets = [0, 0], sizes = [2, 128], strides = [1, 1]} : vector<2x256xf32> to vector<2x128xf32>
    %123 = vector.extract_strided_slice %121 {offsets = [0, 128], sizes = [2, 128], strides = [1, 1]} : vector<2x256xf32> to vector<2x128xf32>
    %cst_57 = arith.constant 5.000000e-01 : f32
    %124 = vector.broadcast %cst_57 : f32 to vector<2x128xf32>
    %125 = arith.mulf %124, %123 : vector<2x128xf32>
    %126 = math.exp %125 : vector<2x128xf32>
    %127 = tpu.concatenate %122, %126 in 1 : vector<2x128xf32>, vector<2x128xf32> -> vector<2x256xf32>
    %128 = arith.index_cast %c1_i32 : i32 to index
    %c0_58 = arith.constant 0 : index
    %c0_59 = arith.constant 0 : index
    %129 = vector.load %arg14[%128, %c0_58, %c0_59] : memref<2x2x256xf32, #tpu.memory_space<vmem>>, vector<1x2x256xf32>
    %130 = vector.shape_cast %129 : vector<1x2x256xf32> to vector<2x256xf32>
    %131 = vector.shape_cast %127 : vector<2x256xf32> to vector<1x2x256xf32>
    tpu.vector_store %arg14[%128, %c0_58, %c0_59], %131 {strides = array<i32>} : memref<2x2x256xf32, #tpu.memory_space<vmem>>, vector<1x2x256xf32>,
    %132 = vector.broadcast %98 : f32 to vector<2x128xf32>
    %133 = arith.mulf %132, %122 : vector<2x128xf32>
    %cst_60 = arith.constant 1.000000e+00 : f32
    %134 = arith.subf %cst_60, %98 : f32
    %cst_61 = arith.constant 0.899999976 : f32
    %135 = vector.broadcast %cst_61 : f32 to vector<2x128xf32>
    %136 = arith.mulf %135, %57 : vector<2x128xf32>
    %cst_62 = arith.constant 1.000000e-01 : f32
    %137 = vector.broadcast %cst_62 : f32 to vector<2x128xf32>
    %138 = arith.mulf %137, %122 : vector<2x128xf32>
    %139 = arith.addf %136, %138 : vector<2x128xf32>
    %140 = vector.broadcast %134 : f32 to vector<2x128xf32>
    %141 = arith.mulf %140, %139 : vector<2x128xf32>
    %142 = arith.addf %133, %141 : vector<2x128xf32>
    %143 = tpu.concatenate %57, %142, %118 in 1 : vector<2x128xf32>, vector<2x128xf32>, vector<2x128xf32> -> vector<2x384xf32>
    %cst_63 = arith.constant dense<0.000000e+00> : vector<8x384xf32>
    %144 = tpu.matmul %1, %143, %cst_63 {dimension_numbers = #tpu.dot_dimension_numbers<[1], [0], [0], [1], [0, 0, 1, 1], [], []>} : vector<8x2xf32>, vector<2x384xf32>, vector<8x384xf32> -> vector<8x384xf32>
    %145 = vector.extract_strided_slice %144 {offsets = [0, 0], sizes = [8, 128], strides = [1, 1]} : vector<8x384xf32> to vector<8x128xf32>
    %146 = vector.extract_strided_slice %144 {offsets = [0, 128], sizes = [8, 128], strides = [1, 1]} : vector<8x384xf32> to vector<8x128xf32>
    %147 = vector.extract_strided_slice %144 {offsets = [0, 256], sizes = [8, 128], strides = [1, 1]} : vector<8x384xf32> to vector<8x128xf32>
    %cst_64 = arith.constant 1.000000e+00 : f32
    %148 = vector.broadcast %cst_64 : f32 to vector<8x128xf32>
    %149 = arith.subf %148, %2 : vector<8x128xf32>
    %150 = arith.mulf %145, %149 : vector<8x128xf32>
    %151 = arith.mulf %146, %2 : vector<8x128xf32>
    %152 = arith.addf %150, %151 : vector<8x128xf32>
    %153 = vector.broadcast %98 : f32 to vector<8x128xf32>
    %154 = arith.mulf %153, %146 : vector<8x128xf32>
    %cst_65 = arith.constant 1.000000e+00 : f32
    %155 = arith.subf %cst_65, %98 : f32
    %156 = vector.broadcast %155 : f32 to vector<8x128xf32>
    %157 = arith.mulf %156, %152 : vector<8x128xf32>
    %158 = arith.addf %154, %157 : vector<8x128xf32>
    %159 = arith.addf %158, %147 : vector<8x128xf32>
    %160 = vector.broadcast %98 : f32 to vector<2x128xf32>
    %161 = arith.mulf %160, %142 : vector<2x128xf32>
    %cst_66 = arith.constant 1.000000e+00 : f32
    %162 = arith.subf %cst_66, %98 : f32
    %cst_67 = arith.constant 5.000000e-01 : f32
    %163 = vector.broadcast %cst_67 : f32 to vector<2x128xf32>
    %164 = arith.mulf %57, %163 : vector<2x128xf32>
    %cst_68 = arith.constant 5.000000e-01 : f32
    %165 = vector.broadcast %cst_68 : f32 to vector<2x128xf32>
    %166 = arith.mulf %142, %165 : vector<2x128xf32>
    %167 = arith.addf %164, %166 : vector<2x128xf32>
    %168 = vector.broadcast %162 : f32 to vector<2x128xf32>
    %169 = arith.mulf %168, %167 : vector<2x128xf32>
    %170 = arith.addf %161, %169 : vector<2x128xf32>
    %171 = arith.addf %170, %118 : vector<2x128xf32>
    %172 = tpu.concatenate %159, %171 in 0 : vector<8x128xf32>, vector<2x128xf32> -> vector<10x128xf32>
    %cst_69 = arith.constant dense<0.000000e+00> : vector<10x256xf32>
    %173 = tpu.matmul %172, %6, %cst_69 {dimension_numbers = #tpu.dot_dimension_numbers<[1], [0], [0], [1], [0, 0, 1, 1], [], []>} : vector<10x128xf32>, vector<128x256xf32>, vector<10x256xf32> -> vector<10x256xf32>
    %174 = vector.broadcast %7 : vector<1x256xf32> to vector<10x256xf32>
    %175 = arith.addf %173, %174 : vector<10x256xf32>
    %176 = vector.extract_strided_slice %175 {offsets = [0, 0], sizes = [8, 256], strides = [1, 1]} : vector<10x256xf32> to vector<8x256xf32>
    %177 = arith.index_cast %c1_i32 : i32 to index
    %c0_70 = arith.constant 0 : index
    %c0_71 = arith.constant 0 : index
    %178 = vector.load %arg13[%177, %c0_70, %c0_71] : memref<2x8x256xf32, #tpu.memory_space<vmem>>, vector<1x8x256xf32>
    %179 = vector.shape_cast %178 : vector<1x8x256xf32> to vector<8x256xf32>
    %180 = vector.shape_cast %176 : vector<8x256xf32> to vector<1x8x256xf32>
    tpu.vector_store %arg13[%177, %c0_70, %c0_71], %180 {strides = array<i32>} : memref<2x8x256xf32, #tpu.memory_space<vmem>>, vector<1x8x256xf32>,
    %181 = vector.extract_strided_slice %175 {offsets = [8, 0], sizes = [2, 256], strides = [1, 1]} : vector<10x256xf32> to vector<2x256xf32>
    %c2_i32 = arith.constant 2 : i32
    %c0_72 = arith.constant 0 : index
    %c0_73 = arith.constant 0 : index
    %182 = vector.load %arg11[%c0_72, %c0_73] : memref<128x256xf32, #tpu.memory_space<vmem>>, vector<128x256xf32>
    %cst_74 = arith.constant dense<0.000000e+00> : vector<2x256xf32>
    %183 = tpu.matmul %116, %182, %cst_74 {dimension_numbers = #tpu.dot_dimension_numbers<[1], [0], [0], [1], [0, 0, 1, 1], [], []>} : vector<2x128xf32>, vector<128x256xf32>, vector<2x256xf32> -> vector<2x256xf32>
    %c0_75 = arith.constant 0 : index
    %c0_76 = arith.constant 0 : index
    %184 = vector.load %arg12[%c0_75, %c0_76] : memref<1x256xf32, #tpu.memory_space<vmem>>, vector<1x256xf32>
    %185 = vector.broadcast %184 : vector<1x256xf32> to vector<2x256xf32>
    %186 = arith.addf %183, %185 : vector<2x256xf32>
    %c0_77 = arith.constant 0 : index
    %c0_78 = arith.constant 0 : index
    %187 = vector.load %arg15[%c0_77, %c0_78] : memref<2x256xf32, #tpu.memory_space<vmem>>, vector<2x256xf32>
    tpu.vector_store %arg15[%c0_77, %c0_78], %186 {strides = array<i32>} : memref<2x256xf32, #tpu.memory_space<vmem>>, vector<2x256xf32>,
    return
  }
}

</mosaic_0001>

<llo_original>
// kernel: facial_reaction_forward.1
$region0: #{facial_reaction_forward.1}
  #allocation0 [shape = 'u32[]', space=smem, size = 0x4, offset = 0x4, fixed_abs, tag = 'smem constant byte address 0x4 - core index']
  #allocation1 [shape = 'u32[144,128]{1,0:T(1,128)}', space=vmem, size = 0x12000, scoped, tag = 'internal scratch']
  %s0 = inlined_call_operand.vmem [shape: f32[2,24,384], index: 0, kind: input, shape index: {}]
  %s1 = inlined_call_operand.vmem [shape: f32[2,24], index: 1, kind: input, shape index: {}]
  %s2 = inlined_call_operand.vmem [shape: f32[8,2], index: 2, kind: input, shape index: {}]
  %s3 = inlined_call_operand.vmem [shape: f32[8,128], index: 3, kind: input, shape index: {}]
  %s4 = inlined_call_operand.vmem [shape: f32[2,1,384], index: 4, kind: input, shape index: {}]
  %s5 = inlined_call_operand.vmem [shape: f32[2,1,384], index: 5, kind: input, shape index: {}]
  %s6 = inlined_call_operand.vmem [shape: f32[640,384], index: 6, kind: input, shape index: {}]
  %s7 = inlined_call_operand.vmem [shape: f32[384,256], index: 7, kind: input, shape index: {}]
  %s8 = inlined_call_operand.vmem [shape: f32[1,256], index: 8, kind: input, shape index: {}]
  %s9 = inlined_call_operand.vmem [shape: f32[128,256], index: 9, kind: input, shape index: {}]
  %s10 = inlined_call_operand.vmem [shape: f32[1,256], index: 10, kind: input, shape index: {}]
  %s11 = inlined_call_operand.vmem [shape: f32[128,256], index: 11, kind: input, shape index: {}]
  %s12 = inlined_call_operand.vmem [shape: f32[1,256], index: 12, kind: input, shape index: {}]
  %s13 = inlined_call_operand.vmem [shape: f32[2,8,256], index: 13, kind: output, shape index: {0}]
  %s14 = inlined_call_operand.vmem [shape: f32[2,2,256], index: 14, kind: output, shape index: {1}]
  %s15 = inlined_call_operand.hbm [shape: f32[2,256], index: 15, kind: output, shape index: {2}]
  %16 = xla_tuple %s13, %s14, %s15
  %s17 = sld [smem:[#allocation0]]
  $region78: #{facial_reaction_forward.1} parent=0
    _
  %s19 = ssub.s32 1, %s17
  %s20 = scalar_select 0, %s19, %s17
  $region1: #{facial_reaction_forward.1} parent=0
    #allocation2 [shape = 'u8[2048]{0}', space=vmem, size = 0x800, scoped, tag = 'output window, operand 2, single buffered']
    #allocation3 [shape = 's32[1]{0}', space=sflag, size = 0x4, scoped, tag = 'scoped memory for facial_reaction_forward.1']
    %21 = vsyncpa [#allocation3], 0
    // Predicated region
    $region2: #{facial_reaction_forward.1} parent=1 // pred_check
      _
    $region3: #{facial_reaction_forward.1} parent=1 // pred_check_branch
      %23 = sbr.rel (0) target = $region5
    $region4: #{facial_reaction_forward.1} parent=1 // pred_region
      _
    $region5: #{facial_reaction_forward.1} parent=1 // pred_fallthru
      _
    // Predicated region
    $region6: #{facial_reaction_forward.1} parent=1 // pred_check
      _
    $region7: #{facial_reaction_forward.1} parent=1 // pred_check_branch
      %25 = sbr.rel (0) target = $region9
    $region8: #{facial_reaction_forward.1} parent=1 // pred_region
      _
    $region9: #{facial_reaction_forward.1} parent=1 // pred_fallthru
      _
    // Predicated region
    $region10: #{facial_reaction_forward.1} parent=1 // pred_check
      _
    $region11: #{facial_reaction_forward.1} parent=1 // pred_check_branch
      %27 = sbr.rel (0) target = $region13
    $region12: #{facial_reaction_forward.1} parent=1 // pred_region
      _
    $region13: #{facial_reaction_forward.1} parent=1 // pred_fallthru
      _
    // Predicated region
    $region14: #{facial_reaction_forward.1} parent=1 // pred_check
      _
    $region15: #{facial_reaction_forward.1} parent=1 // pred_check_branch
      %29 = sbr.rel (0) target = $region17
    $region16: #{facial_reaction_forward.1} parent=1 // pred_region
      _
    $region17: #{facial_reaction_forward.1} parent=1 // pred_fallthru
      _
    // Predicated region
    $region18: #{facial_reaction_forward.1} parent=1 // pred_check
      _
    $region19: #{facial_reaction_forward.1} parent=1 // pred_check_branch
      %31 = sbr.rel (0) target = $region21
    $region20: #{facial_reaction_forward.1} parent=1 // pred_region
      _
    $region21: #{facial_reaction_forward.1} parent=1 // pred_fallthru
      _
    // Predicated region
    $region22: #{facial_reaction_forward.1} parent=1 // pred_check
      _
    $region23: #{facial_reaction_forward.1} parent=1 // pred_check_branch
      %33 = sbr.rel (0) target = $region25
    $region24: #{facial_reaction_forward.1} parent=1 // pred_region
      _
    $region25: #{facial_reaction_forward.1} parent=1 // pred_fallthru
      _
    // Predicated region
    $region26: #{facial_reaction_forward.1} parent=1 // pred_check
      _
    $region27: #{facial_reaction_forward.1} parent=1 // pred_check_branch
      %35 = sbr.rel (0) target = $region29
    $region28: #{facial_reaction_forward.1} parent=1 // pred_region
      _
    $region29: #{facial_reaction_forward.1} parent=1 // pred_fallthru
      _
    // Predicated region
    $region30: #{facial_reaction_forward.1} parent=1 // pred_check
      _
    $region31: #{facial_reaction_forward.1} parent=1 // pred_check_branch
      %37 = sbr.rel (0) target = $region33
    $region32: #{facial_reaction_forward.1} parent=1 // pred_region
      _
    $region33: #{facial_reaction_forward.1} parent=1 // pred_fallthru
      _
    // Predicated region
    $region34: #{facial_reaction_forward.1} parent=1 // pred_check
      _
    $region35: #{facial_reaction_forward.1} parent=1 // pred_check_branch
      %39 = sbr.rel (0) target = $region37
    $region36: #{facial_reaction_forward.1} parent=1 // pred_region
      _
    $region37: #{facial_reaction_forward.1} parent=1 // pred_fallthru
      _
    // Predicated region
    $region38: #{facial_reaction_forward.1} parent=1 // pred_check
      _
    $region39: #{facial_reaction_forward.1} parent=1 // pred_check_branch
      %41 = sbr.rel (0) target = $region41
    $region40: #{facial_reaction_forward.1} parent=1 // pred_region
      _
    $region41: #{facial_reaction_forward.1} parent=1 // pred_fallthru
      _
    // Predicated region
    $region42: #{facial_reaction_forward.1} parent=1 // pred_check
      _
    $region43: #{facial_reaction_forward.1} parent=1 // pred_check_branch
      %43 = sbr.rel (0) target = $region45
    $region44: #{facial_reaction_forward.1} parent=1 // pred_region
      _
    $region45: #{facial_reaction_forward.1} parent=1 // pred_fallthru
      _
    // Predicated region
    $region46: #{facial_reaction_forward.1} parent=1 // pred_check
      _
    $region47: #{facial_reaction_forward.1} parent=1 // pred_check_branch
      %45 = sbr.rel (0) target = $region49
    $region48: #{facial_reaction_forward.1} parent=1 // pred_region
      _
    $region49: #{facial_reaction_forward.1} parent=1 // pred_fallthru
      _
    // Predicated region
    $region50: #{facial_reaction_forward.1} parent=1 // pred_check
      _
    $region51: #{facial_reaction_forward.1} parent=1 // pred_check_branch
      %47 = sbr.rel (0) target = $region53
    $region52: #{facial_reaction_forward.1} parent=1 // pred_region
      _
    $region53: #{facial_reaction_forward.1} parent=1 // pred_fallthru
      _
    %v48 = vld [vmem:[%s1] sm:$0x3]
    %v49 = vld [vmem:[%s2] sm:$0xff]
    %v50 = vld [vmem:[%s3] sm:$0xff]
    %v51 = vld [vmem:[%s6] sm:$0xff]
    %v52 = vld [vmem:[%s6 + $0x8] sm:$0xff]
    %v53 = vld [vmem:[%s6 + $0x10] sm:$0xff]
    %v54 = vld [vmem:[%s6 + $0x18] sm:$0xff]
    %v55 = vld [vmem:[%s6 + $0x20] sm:$0xff]
    %v56 = vld [vmem:[%s6 + $0x28] sm:$0xff]
    %v57 = vld [vmem:[%s6 + $0x30] sm:$0xff]
    %v58 = vld [vmem:[%s6 + $0x38] sm:$0xff]
    %v59 = vld [vmem:[%s6 + $0x40] sm:$0xff]
    %v60 = vld [vmem:[%s6 + $0x48] sm:$0xff]
    %v61 = vld [vmem:[%s6 + $0x50] sm:$0xff]
    %v62 = vld [vmem:[%s6 + $0x58] sm:$0xff]
    %v63 = vld [vmem:[%s6 + $0x60] sm:$0xff]
    %v64 = vld [vmem:[%s6 + $0x68] sm:$0xff]
    %v65 = vld [vmem:[%s6 + $0x70] sm:$0xff]
    %v66 = vld [vmem:[%s6 + $0x78] sm:$0xff]
    %v67 = vld [vmem:[%s6 + $0x80] sm:$0xff]
    %v68 = vld [vmem:[%s6 + $0x88] sm:$0xff]
    %v69 = vld [vmem:[%s6 + $0x90] sm:$0xff]
    %v70 = vld [vmem:[%s6 + $0x98] sm:$0xff]
    %v71 = vld [vmem:[%s6 + $0xa0] sm:$0xff]
    %v72 = vld [vmem:[%s6 + $0xa8] sm:$0xff]
    %v73 = vld [vmem:[%s6 + $0xb0] sm:$0xff]
    %v74 = vld [vmem:[%s6 + $0xb8] sm:$0xff]
    %v75 = vld [vmem:[%s6 + $0xc0] sm:$0xff]
    %v76 = vld [vmem:[%s6 + $0xc8] sm:$0xff]
    %v77 = vld [vmem:[%s6 + $0xd0] sm:$0xff]
    %v78 = vld [vmem:[%s6 + $0xd8] sm:$0xff]
    %v79 = vld [vmem:[%s6 + $0xe0] sm:$0xff]
    %v80 = vld [vmem:[%s6 + $0xe8] sm:$0xff]
    %v81 = vld [vmem:[%s6 + $0xf0] sm:$0xff]
    %v82 = vld [vmem:[%s6 + $0xf8] sm:$0xff]
    %v83 = vld [vmem:[%s6 + $0x100] sm:$0xff]
    %v84 = vld [vmem:[%s6 + $0x108] sm:$0xff]
    %v85 = vld [vmem:[%s6 + $0x110] sm:$0xff]
    %v86 = vld [vmem:[%s6 + $0x118] sm:$0xff]
    %v87 = vld [vmem:[%s6 + $0x120] sm:$0xff]
    %v88 = vld [vmem:[%s6 + $0x128] sm:$0xff]
    %v89 = vld [vmem:[%s6 + $0x130] sm:$0xff]
    %v90 = vld [vmem:[%s6 + $0x138] sm:$0xff]
    %v91 = vld [vmem:[%s6 + $0x140] sm:$0xff]
    %v92 = vld [vmem:[%s6 + $0x148] sm:$0xff]
    %v93 = vld [vmem:[%s6 + $0x150] sm:$0xff]
    %v94 = vld [vmem:[%s6 + $0x158] sm:$0xff]
    %v95 = vld [vmem:[%s6 + $0x160] sm:$0xff]
    %v96 = vld [vmem:[%s6 + $0x168] sm:$0xff]
    %v97 = vld [vmem:[%s6 + $0x170] sm:$0xff]
    %v98 = vld [vmem:[%s6 + $0x178] sm:$0xff]
    %v99 = vld [vmem:[%s6 + $0x180] sm:$0xff]
    %v100 = vld [vmem:[%s6 + $0x188] sm:$0xff]
    %v101 = vld [vmem:[%s6 + $0x190] sm:$0xff]
    %v102 = vld [vmem:[%s6 + $0x198] sm:$0xff]
    %v103 = vld [vmem:[%s6 + $0x1a0] sm:$0xff]
    %v104 = vld [vmem:[%s6 + $0x1a8] sm:$0xff]
    %v105 = vld [vmem:[%s6 + $0x1b0] sm:$0xff]
    %v106 = vld [vmem:[%s6 + $0x1b8] sm:$0xff]
    %v107 = vld [vmem:[%s6 + $0x1c0] sm:$0xff]
    %v108 = vld [vmem:[%s6 + $0x1c8] sm:$0xff]
    %v109 = vld [vmem:[%s6 + $0x1d0] sm:$0xff]
    %v110 = vld [vmem:[%s6 + $0x1d8] sm:$0xff]
    %v111 = vld [vmem:[%s6 + $0x1e0] sm:$0xff]
    %v112 = vld [vmem:[%s6 + $0x1e8] sm:$0xff]
    %v113 = vld [vmem:[%s6 + $0x1f0] sm:$0xff]
    %v114 = vld [vmem:[%s6 + $0x1f8] sm:$0xff]
    %v115 = vld [vmem:[%s6 + $0x200] sm:$0xff]
    %v116 = vld [vmem:[%s6 + $0x208] sm:$0xff]
    %v117 = vld [vmem:[%s6 + $0x210] sm:$0xff]
    %v118 = vld [vmem:[%s6 + $0x218] sm:$0xff]
    %v119 = vld [vmem:[%s6 + $0x220] sm:$0xff]
    %v120 = vld [vmem:[%s6 + $0x228] sm:$0xff]
    %v121 = vld [vmem:[%s6 + $0x230] sm:$0xff]
    %v122 = vld [vmem:[%s6 + $0x238] sm:$0xff]
    %v123 = vld [vmem:[%s6 + $0x240] sm:$0xff]
    %v124 = vld [vmem:[%s6 + $0x248] sm:$0xff]
    %v125 = vld [vmem:[%s6 + $0x250] sm:$0xff]
    %v126 = vld [vmem:[%s6 + $0x258] sm:$0xff]
    %v127 = vld [vmem:[%s6 + $0x260] sm:$0xff]
    %v128 = vld [vmem:[%s6 + $0x268] sm:$0xff]
    %v129 = vld [vmem:[%s6 + $0x270] sm:$0xff]
    %v130 = vld [vmem:[%s6 + $0x278] sm:$0xff]
    %v131 = vld [vmem:[%s6 + $0x280] sm:$0xff]
    %v132 = vld [vmem:[%s6 + $0x288] sm:$0xff]
    %v133 = vld [vmem:[%s6 + $0x290] sm:$0xff]
    %v134 = vld [vmem:[%s6 + $0x298] sm:$0xff]
    %v135 = vld [vmem:[%s6 + $0x2a0] sm:$0xff]
    %v136 = vld [vmem:[%s6 + $0x2a8] sm:$0xff]
    %v137 = vld [vmem:[%s6 + $0x2b0] sm:$0xff]
    %v138 = vld [vmem:[%s6 + $0x2b8] sm:$0xff]
    %v139 = vld [vmem:[%s6 + $0x2c0] sm:$0xff]
    %v140 = vld [vmem:[%s6 + $0x2c8] sm:$0xff]
    %v141 = vld [vmem:[%s6 + $0x2d0] sm:$0xff]
    %v142 = vld [vmem:[%s6 + $0x2d8] sm:$0xff]
    %v143 = vld [vmem:[%s6 + $0x2e0] sm:$0xff]
    %v144 = vld [vmem:[%s6 + $0x2e8] sm:$0xff]
    %v145 = vld [vmem:[%s6 + $0x2f0] sm:$0xff]
    %v146 = vld [vmem:[%s6 + $0x2f8] sm:$0xff]
    %v147 = vld [vmem:[%s6 + $0x300] sm:$0xff]
    %v148 = vld [vmem:[%s6 + $0x308] sm:$0xff]
    %v149 = vld [vmem:[%s6 + $0x310] sm:$0xff]
    %v150 = vld [vmem:[%s6 + $0x318] sm:$0xff]
    %v151 = vld [vmem:[%s6 + $0x320] sm:$0xff]
    %v152 = vld [vmem:[%s6 + $0x328] sm:$0xff]
    %v153 = vld [vmem:[%s6 + $0x330] sm:$0xff]
    %v154 = vld [vmem:[%s6 + $0x338] sm:$0xff]
    %v155 = vld [vmem:[%s6 + $0x340] sm:$0xff]
    %v156 = vld [vmem:[%s6 + $0x348] sm:$0xff]
    %v157 = vld [vmem:[%s6 + $0x350] sm:$0xff]
    %v158 = vld [vmem:[%s6 + $0x358] sm:$0xff]
    %v159 = vld [vmem:[%s6 + $0x360] sm:$0xff]
    %v160 = vld [vmem:[%s6 + $0x368] sm:$0xff]
    %v161 = vld [vmem:[%s6 + $0x370] sm:$0xff]
    %v162 = vld [vmem:[%s6 + $0x378] sm:$0xff]
    %v163 = vld [vmem:[%s6 + $0x380] sm:$0xff]
    %v164 = vld [vmem:[%s6 + $0x388] sm:$0xff]
    %v165 = vld [vmem:[%s6 + $0x390] sm:$0xff]
    %v166 = vld [vmem:[%s6 + $0x398] sm:$0xff]
    %v167 = vld [vmem:[%s6 + $0x3a0] sm:$0xff]
    %v168 = vld [vmem:[%s6 + $0x3a8] sm:$0xff]
    %v169 = vld [vmem:[%s6 + $0x3b0] sm:$0xff]
    %v170 = vld [vmem:[%s6 + $0x3b8] sm:$0xff]
    %v171 = vld [vmem:[%s6 + $0x3c0] sm:$0xff]
    %v172 = vld [vmem:[%s6 + $0x3c8] sm:$0xff]
    %v173 = vld [vmem:[%s6 + $0x3d0] sm:$0xff]
    %v174 = vld [vmem:[%s6 + $0x3d8] sm:$0xff]
    %v175 = vld [vmem:[%s6 + $0x3e0] sm:$0xff]
    %v176 = vld [vmem:[%s6 + $0x3e8] sm:$0xff]
    %v177 = vld [vmem:[%s6 + $0x3f0] sm:$0xff]
    %v178 = vld [vmem:[%s6 + $0x3f8] sm:$0xff]
    %v179 = vld [vmem:[%s6 + $0x400] sm:$0xff]
    %v180 = vld [vmem:[%s6 + $0x408] sm:$0xff]
    %v181 = vld [vmem:[%s6 + $0x410] sm:$0xff]
    %v182 = vld [vmem:[%s6 + $0x418] sm:$0xff]
    %v183 = vld [vmem:[%s6 + $0x420] sm:$0xff]
    %v184 = vld [vmem:[%s6 + $0x428] sm:$0xff]
    %v185 = vld [vmem:[%s6 + $0x430] sm:$0xff]
    %v186 = vld [vmem:[%s6 + $0x438] sm:$0xff]
    %v187 = vld [vmem:[%s6 + $0x440] sm:$0xff]
    %v188 = vld [vmem:[%s6 + $0x448] sm:$0xff]
    %v189 = vld [vmem:[%s6 + $0x450] sm:$0xff]
    %v190 = vld [vmem:[%s6 + $0x458] sm:$0xff]
    %v191 = vld [vmem:[%s6 + $0x460] sm:$0xff]
    %v192 = vld [vmem:[%s6 + $0x468] sm:$0xff]
    %v193 = vld [vmem:[%s6 + $0x470] sm:$0xff]
    %v194 = vld [vmem:[%s6 + $0x478] sm:$0xff]
    %v195 = vld [vmem:[%s6 + $0x480] sm:$0xff]
    %v196 = vld [vmem:[%s6 + $0x488] sm:$0xff]
    %v197 = vld [vmem:[%s6 + $0x490] sm:$0xff]
    %v198 = vld [vmem:[%s6 + $0x498] sm:$0xff]
    %v199 = vld [vmem:[%s6 + $0x4a0] sm:$0xff]
    %v200 = vld [vmem:[%s6 + $0x4a8] sm:$0xff]
    %v201 = vld [vmem:[%s6 + $0x4b0] sm:$0xff]
    %v202 = vld [vmem:[%s6 + $0x4b8] sm:$0xff]
    %v203 = vld [vmem:[%s6 + $0x4c0] sm:$0xff]
    %v204 = vld [vmem:[%s6 + $0x4c8] sm:$0xff]
    %v205 = vld [vmem:[%s6 + $0x4d0] sm:$0xff]
    %v206 = vld [vmem:[%s6 + $0x4d8] sm:$0xff]
    %v207 = vld [vmem:[%s6 + $0x4e0] sm:$0xff]
    %v208 = vld [vmem:[%s6 + $0x4e8] sm:$0xff]
    %v209 = vld [vmem:[%s6 + $0x4f0] sm:$0xff]
    %v210 = vld [vmem:[%s6 + $0x4f8] sm:$0xff]
    %v211 = vld [vmem:[%s6 + $0x500] sm:$0xff]
    %v212 = vld [vmem:[%s6 + $0x508] sm:$0xff]
    %v213 = vld [vmem:[%s6 + $0x510] sm:$0xff]
    %v214 = vld [vmem:[%s6 + $0x518] sm:$0xff]
    %v215 = vld [vmem:[%s6 + $0x520] sm:$0xff]
    %v216 = vld [vmem:[%s6 + $0x528] sm:$0xff]
    %v217 = vld [vmem:[%s6 + $0x530] sm:$0xff]
    %v218 = vld [vmem:[%s6 + $0x538] sm:$0xff]
    %v219 = vld [vmem:[%s6 + $0x540] sm:$0xff]
    %v220 = vld [vmem:[%s6 + $0x548] sm:$0xff]
    %v221 = vld [vmem:[%s6 + $0x550] sm:$0xff]
    %v222 = vld [vmem:[%s6 + $0x558] sm:$0xff]
    %v223 = vld [vmem:[%s6 + $0x560] sm:$0xff]
    %v224 = vld [vmem:[%s6 + $0x568] sm:$0xff]
    %v225 = vld [vmem:[%s6 + $0x570] sm:$0xff]
    %v226 = vld [vmem:[%s6 + $0x578] sm:$0xff]
    %v227 = vld [vmem:[%s6 + $0x580] sm:$0xff]
    %v228 = vld [vmem:[%s6 + $0x588] sm:$0xff]
    %v229 = vld [vmem:[%s6 + $0x590] sm:$0xff]
    %v230 = vld [vmem:[%s6 + $0x598] sm:$0xff]
    %v231 = vld [vmem:[%s6 + $0x5a0] sm:$0xff]
    %v232 = vld [vmem:[%s6 + $0x5a8] sm:$0xff]
    %v233 = vld [vmem:[%s6 + $0x5b0] sm:$0xff]
    %v234 = vld [vmem:[%s6 + $0x5b8] sm:$0xff]
    %v235 = vld [vmem:[%s6 + $0x5c0] sm:$0xff]
    %v236 = vld [vmem:[%s6 + $0x5c8] sm:$0xff]
    %v237 = vld [vmem:[%s6 + $0x5d0] sm:$0xff]
    %v238 = vld [vmem:[%s6 + $0x5d8] sm:$0xff]
    %v239 = vld [vmem:[%s6 + $0x5e0] sm:$0xff]
    %v240 = vld [vmem:[%s6 + $0x5e8] sm:$0xff]
    %v241 = vld [vmem:[%s6 + $0x5f0] sm:$0xff]
    %v242 = vld [vmem:[%s6 + $0x5f8] sm:$0xff]
    %v243 = vld [vmem:[%s6 + $0x600] sm:$0xff]
    %v244 = vld [vmem:[%s6 + $0x608] sm:$0xff]
    %v245 = vld [vmem:[%s6 + $0x610] sm:$0xff]
    %v246 = vld [vmem:[%s6 + $0x618] sm:$0xff]
    %v247 = vld [vmem:[%s6 + $0x620] sm:$0xff]
    %v248 = vld [vmem:[%s6 + $0x628] sm:$0xff]
    %v249 = vld [vmem:[%s6 + $0x630] sm:$0xff]
    %v250 = vld [vmem:[%s6 + $0x638] sm:$0xff]
    %v251 = vld [vmem:[%s6 + $0x640] sm:$0xff]
    %v252 = vld [vmem:[%s6 + $0x648] sm:$0xff]
    %v253 = vld [vmem:[%s6 + $0x650] sm:$0xff]
    %v254 = vld [vmem:[%s6 + $0x658] sm:$0xff]
    %v255 = vld [vmem:[%s6 + $0x660] sm:$0xff]
    %v256 = vld [vmem:[%s6 + $0x668] sm:$0xff]
    %v257 = vld [vmem:[%s6 + $0x670] sm:$0xff]
    %v258 = vld [vmem:[%s6 + $0x678] sm:$0xff]
    %v259 = vld [vmem:[%s6 + $0x680] sm:$0xff]
    %v260 = vld [vmem:[%s6 + $0x688] sm:$0xff]
    %v261 = vld [vmem:[%s6 + $0x690] sm:$0xff]
    %v262 = vld [vmem:[%s6 + $0x698] sm:$0xff]
    %v263 = vld [vmem:[%s6 + $0x6a0] sm:$0xff]
    %v264 = vld [vmem:[%s6 + $0x6a8] sm:$0xff]
    %v265 = vld [vmem:[%s6 + $0x6b0] sm:$0xff]
    %v266 = vld [vmem:[%s6 + $0x6b8] sm:$0xff]
    %v267 = vld [vmem:[%s6 + $0x6c0] sm:$0xff]
    %v268 = vld [vmem:[%s6 + $0x6c8] sm:$0xff]
    %v269 = vld [vmem:[%s6 + $0x6d0] sm:$0xff]
    %v270 = vld [vmem:[%s6 + $0x6d8] sm:$0xff]
    %v271 = vld [vmem:[%s6 + $0x6e0] sm:$0xff]
    %v272 = vld [vmem:[%s6 + $0x6e8] sm:$0xff]
    %v273 = vld [vmem:[%s6 + $0x6f0] sm:$0xff]
    %v274 = vld [vmem:[%s6 + $0x6f8] sm:$0xff]
    %v275 = vld [vmem:[%s6 + $0x700] sm:$0xff]
    %v276 = vld [vmem:[%s6 + $0x708] sm:$0xff]
    %v277 = vld [vmem:[%s6 + $0x710] sm:$0xff]
    %v278 = vld [vmem:[%s6 + $0x718] sm:$0xff]
    %v279 = vld [vmem:[%s6 + $0x720] sm:$0xff]
    %v280 = vld [vmem:[%s6 + $0x728] sm:$0xff]
    %v281 = vld [vmem:[%s6 + $0x730] sm:$0xff]
    %v282 = vld [vmem:[%s6 + $0x738] sm:$0xff]
    %v283 = vld [vmem:[%s6 + $0x740] sm:$0xff]
    %v284 = vld [vmem:[%s6 + $0x748] sm:$0xff]
    %v285 = vld [vmem:[%s6 + $0x750] sm:$0xff]
    %v286 = vld [vmem:[%s6 + $0x758] sm:$0xff]
    %v287 = vld [vmem:[%s6 + $0x760] sm:$0xff]
    %v288 = vld [vmem:[%s6 + $0x768] sm:$0xff]
    %v289 = vld [vmem:[%s6 + $0x770] sm:$0xff]
    %v290 = vld [vmem:[%s6 + $0x778] sm:$0xff]
    %v291 = vld [vmem:[%s7] sm:$0xff]
    %v292 = vld [vmem:[%s7 + $0x8] sm:$0xff]
    %v293 = vld [vmem:[%s7 + $0x10] sm:$0xff]
    %v294 = vld [vmem:[%s7 + $0x18] sm:$0xff]
    %v295 = vld [vmem:[%s7 + $0x20] sm:$0xff]
    %v296 = vld [vmem:[%s7 + $0x28] sm:$0xff]
    %v297 = vld [vmem:[%s7 + $0x30] sm:$0xff]
    %v298 = vld [vmem:[%s7 + $0x38] sm:$0xff]
    %v299 = vld [vmem:[%s7 + $0x40] sm:$0xff]
    %v300 = vld [vmem:[%s7 + $0x48] sm:$0xff]
    %v301 = vld [vmem:[%s7 + $0x50] sm:$0xff]
    %v302 = vld [vmem:[%s7 + $0x58] sm:$0xff]
    %v303 = vld [vmem:[%s7 + $0x60] sm:$0xff]
    %v304 = vld [vmem:[%s7 + $0x68] sm:$0xff]
    %v305 = vld [vmem:[%s7 + $0x70] sm:$0xff]
    %v306 = vld [vmem:[%s7 + $0x78] sm:$0xff]
    %v307 = vld [vmem:[%s7 + $0x80] sm:$0xff]
    %v308 = vld [vmem:[%s7 + $0x88] sm:$0xff]
    %v309 = vld [vmem:[%s7 + $0x90] sm:$0xff]
    %v310 = vld [vmem:[%s7 + $0x98] sm:$0xff]
    %v311 = vld [vmem:[%s7 + $0xa0] sm:$0xff]
    %v312 = vld [vmem:[%s7 + $0xa8] sm:$0xff]
    %v313 = vld [vmem:[%s7 + $0xb0] sm:$0xff]
    %v314 = vld [vmem:[%s7 + $0xb8] sm:$0xff]
    %v315 = vld [vmem:[%s7 + $0xc0] sm:$0xff]
    %v316 = vld [vmem:[%s7 + $0xc8] sm:$0xff]
    %v317 = vld [vmem:[%s7 + $0xd0] sm:$0xff]
    %v318 = vld [vmem:[%s7 + $0xd8] sm:$0xff]
    %v319 = vld [vmem:[%s7 + $0xe0] sm:$0xff]
    %v320 = vld [vmem:[%s7 + $0xe8] sm:$0xff]
    %v321 = vld [vmem:[%s7 + $0xf0] sm:$0xff]
    %v322 = vld [vmem:[%s7 + $0xf8] sm:$0xff]
    %v323 = vld [vmem:[%s7 + $0x100] sm:$0xff]
    %v324 = vld [vmem:[%s7 + $0x108] sm:$0xff]
    %v325 = vld [vmem:[%s7 + $0x110] sm:$0xff]
    %v326 = vld [vmem:[%s7 + $0x118] sm:$0xff]
    %v327 = vld [vmem:[%s7 + $0x120] sm:$0xff]
    %v328 = vld [vmem:[%s7 + $0x128] sm:$0xff]
    %v329 = vld [vmem:[%s7 + $0x130] sm:$0xff]
    %v330 = vld [vmem:[%s7 + $0x138] sm:$0xff]
    %v331 = vld [vmem:[%s7 + $0x140] sm:$0xff]
    %v332 = vld [vmem:[%s7 + $0x148] sm:$0xff]
    %v333 = vld [vmem:[%s7 + $0x150] sm:$0xff]
    %v334 = vld [vmem:[%s7 + $0x158] sm:$0xff]
    %v335 = vld [vmem:[%s7 + $0x160] sm:$0xff]
    %v336 = vld [vmem:[%s7 + $0x168] sm:$0xff]
    %v337 = vld [vmem:[%s7 + $0x170] sm:$0xff]
    %v338 = vld [vmem:[%s7 + $0x178] sm:$0xff]
    %v339 = vld [vmem:[%s7 + $0x180] sm:$0xff]
    %v340 = vld [vmem:[%s7 + $0x188] sm:$0xff]
    %v341 = vld [vmem:[%s7 + $0x190] sm:$0xff]
    %v342 = vld [vmem:[%s7 + $0x198] sm:$0xff]
    %v343 = vld [vmem:[%s7 + $0x1a0] sm:$0xff]
    %v344 = vld [vmem:[%s7 + $0x1a8] sm:$0xff]
    %v345 = vld [vmem:[%s7 + $0x1b0] sm:$0xff]
    %v346 = vld [vmem:[%s7 + $0x1b8] sm:$0xff]
    %v347 = vld [vmem:[%s7 + $0x1c0] sm:$0xff]
    %v348 = vld [vmem:[%s7 + $0x1c8] sm:$0xff]
    %v349 = vld [vmem:[%s7 + $0x1d0] sm:$0xff]
    %v350 = vld [vmem:[%s7 + $0x1d8] sm:$0xff]
    %v351 = vld [vmem:[%s7 + $0x1e0] sm:$0xff]
    %v352 = vld [vmem:[%s7 + $0x1e8] sm:$0xff]
    %v353 = vld [vmem:[%s7 + $0x1f0] sm:$0xff]
    %v354 = vld [vmem:[%s7 + $0x1f8] sm:$0xff]
    %v355 = vld [vmem:[%s7 + $0x200] sm:$0xff]
    %v356 = vld [vmem:[%s7 + $0x208] sm:$0xff]
    %v357 = vld [vmem:[%s7 + $0x210] sm:$0xff]
    %v358 = vld [vmem:[%s7 + $0x218] sm:$0xff]
    %v359 = vld [vmem:[%s7 + $0x220] sm:$0xff]
    %v360 = vld [vmem:[%s7 + $0x228] sm:$0xff]
    %v361 = vld [vmem:[%s7 + $0x230] sm:$0xff]
    %v362 = vld [vmem:[%s7 + $0x238] sm:$0xff]
    %v363 = vld [vmem:[%s7 + $0x240] sm:$0xff]
    %v364 = vld [vmem:[%s7 + $0x248] sm:$0xff]
    %v365 = vld [vmem:[%s7 + $0x250] sm:$0xff]
    %v366 = vld [vmem:[%s7 + $0x258] sm:$0xff]
    %v367 = vld [vmem:[%s7 + $0x260] sm:$0xff]
    %v368 = vld [vmem:[%s7 + $0x268] sm:$0xff]
    %v369 = vld [vmem:[%s7 + $0x270] sm:$0xff]
    %v370 = vld [vmem:[%s7 + $0x278] sm:$0xff]
    %v371 = vld [vmem:[%s7 + $0x280] sm:$0xff]
    %v372 = vld [vmem:[%s7 + $0x288] sm:$0xff]
    %v373 = vld [vmem:[%s7 + $0x290] sm:$0xff]
    %v374 = vld [vmem:[%s7 + $0x298] sm:$0xff]
    %v375 = vld [vmem:[%s7 + $0x2a0] sm:$0xff]
    %v376 = vld [vmem:[%s7 + $0x2a8] sm:$0xff]
    %v377 = vld [vmem:[%s7 + $0x2b0] sm:$0xff]
    %v378 = vld [vmem:[%s7 + $0x2b8] sm:$0xff]
    %v379 = vld [vmem:[%s7 + $0x2c0] sm:$0xff]
    %v380 = vld [vmem:[%s7 + $0x2c8] sm:$0xff]
    %v381 = vld [vmem:[%s7 + $0x2d0] sm:$0xff]
    %v382 = vld [vmem:[%s7 + $0x2d8] sm:$0xff]
    %v383 = vld [vmem:[%s7 + $0x2e0] sm:$0xff]
    %v384 = vld [vmem:[%s7 + $0x2e8] sm:$0xff]
    %v385 = vld [vmem:[%s7 + $0x2f0] sm:$0xff]
    %v386 = vld [vmem:[%s7 + $0x2f8] sm:$0xff]
    %v387 = vld [vmem:[%s8] sm:$0x3]
    %v388 = vld [vmem:[%s9] sm:$0xff]
    %v389 = vld [vmem:[%s9 + $0x8] sm:$0xff]
    %v390 = vld [vmem:[%s9 + $0x10] sm:$0xff]
    %v391 = vld [vmem:[%s9 + $0x18] sm:$0xff]
    %v392 = vld [vmem:[%s9 + $0x20] sm:$0xff]
    %v393 = vld [vmem:[%s9 + $0x28] sm:$0xff]
    %v394 = vld [vmem:[%s9 + $0x30] sm:$0xff]
    %v395 = vld [vmem:[%s9 + $0x38] sm:$0xff]
    %v396 = vld [vmem:[%s9 + $0x40] sm:$0xff]
    %v397 = vld [vmem:[%s9 + $0x48] sm:$0xff]
    %v398 = vld [vmem:[%s9 + $0x50] sm:$0xff]
    %v399 = vld [vmem:[%s9 + $0x58] sm:$0xff]
    %v400 = vld [vmem:[%s9 + $0x60] sm:$0xff]
    %v401 = vld [vmem:[%s9 + $0x68] sm:$0xff]
    %v402 = vld [vmem:[%s9 + $0x70] sm:$0xff]
    %v403 = vld [vmem:[%s9 + $0x78] sm:$0xff]
    %v404 = vld [vmem:[%s9 + $0x80] sm:$0xff]
    %v405 = vld [vmem:[%s9 + $0x88] sm:$0xff]
    %v406 = vld [vmem:[%s9 + $0x90] sm:$0xff]
    %v407 = vld [vmem:[%s9 + $0x98] sm:$0xff]
    %v408 = vld [vmem:[%s9 + $0xa0] sm:$0xff]
    %v409 = vld [vmem:[%s9 + $0xa8] sm:$0xff]
    %v410 = vld [vmem:[%s9 + $0xb0] sm:$0xff]
    %v411 = vld [vmem:[%s9 + $0xb8] sm:$0xff]
    %v412 = vld [vmem:[%s9 + $0xc0] sm:$0xff]
    %v413 = vld [vmem:[%s9 + $0xc8] sm:$0xff]
    %v414 = vld [vmem:[%s9 + $0xd0] sm:$0xff]
    %v415 = vld [vmem:[%s9 + $0xd8] sm:$0xff]
    %v416 = vld [vmem:[%s9 + $0xe0] sm:$0xff]
    %v417 = vld [vmem:[%s9 + $0xe8] sm:$0xff]
    %v418 = vld [vmem:[%s9 + $0xf0] sm:$0xff]
    %v419 = vld [vmem:[%s9 + $0xf8] sm:$0xff]
    %v420 = vld [vmem:[%s10] sm:$0x3]
    %v421 = vld [vmem:[%s0] sm:$0xff]
    %v422 = vld [vmem:[%s0 + $0x8] sm:$0xff]
    %v423 = vld [vmem:[%s0 + $0x10] sm:$0xff]
    %v424 = vld [vmem:[%s0 + $0x18] sm:$0xff]
    %v425 = vld [vmem:[%s0 + $0x20] sm:$0xff]
    %v426 = vld [vmem:[%s0 + $0x28] sm:$0xff]
    %v427 = vld [vmem:[%s0 + $0x30] sm:$0xff]
    %v428 = vld [vmem:[%s0 + $0x38] sm:$0xff]
    %v429 = vld [vmem:[%s0 + $0x40] sm:$0xff]
    %vm430 = vcmask 195584
    %v432 = vsel %vm430, %v48, 0
    %434 = vmatprep.subr.mxu0 %v422
    %435 = vmatpush1.msra.mxu0 %v421
    %436 = vmatprep.subr.mxu0 %v425
    %437 = vmatpush1.msra.mxu0 %v424
    %438 = vmatprep.subr.mxu0 %v428
    %439 = vmatpush1.msra.mxu0 %v427
    %440 = vmatprep.subr.mxu0 0.0
    %441 = vmatpush1.msra.mxu0 0.0
    %442 = vmatprep.subr.mxu0 0.0
    %443 = vmatpush1.msra.mxu0 0.0
    %444 = vmatprep.subr.mxu0 0.0
    %445 = vmatpush1.msra.mxu0 0.0
    %446 = vmatprep.subr.mxu0 0.0
    %447 = vmatpush1.msra.mxu0 0.0
    %448 = vmatprep.subr.mxu0 0.0
    %449 = vmatpush1.msra.mxu0 0.0
    %450 = vmatprep.subr.mxu0 0.0
    %451 = vmatpush1.msra.mxu0 0.0
    %452 = vmatprep.subr.mxu0 0.0
    %453 = vmatpush1.msra.mxu0 0.0
    %454 = vmatprep.subr.mxu0 0.0
    %455 = vmatpush1.msra.mxu0 0.0
    %456 = vmatprep.subr.mxu0 0.0
    %457 = vmatpush1.msra.mxu0 0.0
    %458 = vmatprep.subr.mxu0 0.0
    %459 = vmatpush1.msra.mxu0 0.0
    %460 = vmatprep.subr.mxu0 0.0
    %461 = vmatpush1.msra.mxu0 0.0
    %462 = vmatprep.subr.mxu0 0.0
    %463 = vmatpush1.msra.mxu0 0.0
    %464 = vmatprep.subr.mxu0 0.0
    %465 = vmatpush1.msra.mxu0 0.0
    %466 = vmatprep.subr.mxu0 0.0
    %467 = vmatpush1.msra.mxu0 0.0
    %468 = vmatprep.subr.mxu0 0.0
    %469 = vmatpush1.msra.mxu0 0.0
    %470 = vmatprep.subr.mxu0 0.0
    %471 = vmatpush1.msra.mxu0 0.0
    %472 = vmatprep.subr.mxu0 0.0
    %473 = vmatpush1.msra.mxu0 0.0
    %474 = vmatprep.subr.mxu0 0.0
    %475 = vmatpush1.msra.mxu0 0.0
    %476 = vmatprep.subr.mxu0 0.0
    %477 = vmatpush1.msra.mxu0 0.0
    %478 = vmatprep.subr.mxu0 0.0
    %479 = vmatpush1.msra.mxu0 0.0
    %480 = vmatprep.subr.mxu0 0.0
    %481 = vmatpush1.msra.mxu0 0.0
    %482 = vmatprep.subr.mxu0 0.0
    %483 = vmatpush1.msra.mxu0 0.0
    %484 = vmatprep.subr.mxu0 0.0
    %485 = vmatpush1.msra.mxu0 0.0
    %486 = vmatprep.subr.mxu0 0.0
    %487 = vmatpush1.msra.mxu0 0.0
    %488 = vmatprep.subr.mxu0 0.0
    %489 = vmatpush1.msra.mxu0 0.0
    %490 = vmatprep.subr.mxu0 0.0
    %491 = vmatpush1.msra.mxu0 0.0
    %492 = vmatprep.subr.mxu0 0.0
    %493 = vmatpush1.msra.mxu0 0.0
    %494 = vmatprep.subr.mxu0 0.0
    %495 = vmatpush1.msra.mxu0 0.0
    %496 = vmatprep.subr.mxu0 0.0
    %497 = vmatpush1.msra.mxu0 0.0
    %498 = vmatprep.mubr.f32.mxu0 0.0
    %499 = vmatmul.mubr.f32.gmra.mrb[0].mxu0 %v432
    %v500 = vpop.f32.mrb[0].mxu0
    %v501 = vadd.f32 0.0, %v500
    %v502 = vpop.f32.mrb[0].mxu0
    %v503 = vadd.f32 0.0, %v502
    %504 = vdwg.mxu0
    %505 = vmatprep.subr.mxu0 0.0
    %506 = vmatpush1.msra.mxu0 %v423
    %507 = vmatprep.subr.mxu0 0.0
    %508 = vmatpush1.msra.mxu0 %v426
    %509 = vmatprep.subr.mxu0 0.0
    %510 = vmatpush1.msra.mxu0 %v429
    %511 = vmatprep.subr.mxu0 0.0
    %512 = vmatpush1.msra.mxu0 0.0
    %513 = vmatprep.subr.mxu0 0.0
    %514 = vmatpush1.msra.mxu0 0.0
    %515 = vmatprep.subr.mxu0 0.0
    %516 = vmatpush1.msra.mxu0 0.0
    %517 = vmatprep.subr.mxu0 0.0
    %518 = vmatpush1.msra.mxu0 0.0
    %519 = vmatprep.subr.mxu0 0.0
    %520 = vmatpush1.msra.mxu0 0.0
    %521 = vmatprep.subr.mxu0 0.0
    %522 = vmatpush1.msra.mxu0 0.0
    %523 = vmatprep.subr.mxu0 0.0
    %524 = vmatpush1.msra.mxu0 0.0
    %525 = vmatprep.subr.mxu0 0.0
    %526 = vmatpush1.msra.mxu0 0.0
    %527 = vmatprep.subr.mxu0 0.0
    %528 = vmatpush1.msra.mxu0 0.0
    %529 = vmatprep.subr.mxu0 0.0
    %530 = vmatpush1.msra.mxu0 0.0
    %531 = vmatprep.subr.mxu0 0.0
    %532 = vmatpush1.msra.mxu0 0.0
    %533 = vmatprep.subr.mxu0 0.0
    %534 = vmatpush1.msra.mxu0 0.0
    %535 = vmatprep.subr.mxu0 0.0
    %536 = vmatpush1.msra.mxu0 0.0
    %537 = vmatprep.subr.mxu0 0.0
    %538 = vmatpush1.msra.mxu0 0.0
    %539 = vmatprep.subr.mxu0 0.0
    %540 = vmatpush1.msra.mxu0 0.0
    %541 = vmatprep.subr.mxu0 0.0
    %542 = vmatpush1.msra.mxu0 0.0
    %543 = vmatprep.subr.mxu0 0.0
    %544 = vmatpush1.msra.mxu0 0.0
    %545 = vmatprep.subr.mxu0 0.0
    %546 = vmatpush1.msra.mxu0 0.0
    %547 = vmatprep.subr.mxu0 0.0
    %548 = vmatpush1.msra.mxu0 0.0
    %549 = vmatprep.subr.mxu0 0.0
    %550 = vmatpush1.msra.mxu0 0.0
    %551 = vmatprep.subr.mxu0 0.0
    %552 = vmatpush1.msra.mxu0 0.0
    %553 = vmatprep.subr.mxu0 0.0
    %554 = vmatpush1.msra.mxu0 0.0
    %555 = vmatprep.subr.mxu0 0.0
    %556 = vmatpush1.msra.mxu0 0.0
    %557 = vmatprep.subr.mxu0 0.0
    %558 = vmatpush1.msra.mxu0 0.0
    %559 = vmatprep.subr.mxu0 0.0
    %560 = vmatpush1.msra.mxu0 0.0
    %561 = vmatprep.subr.mxu0 0.0
    %562 = vmatpush1.msra.mxu0 0.0
    %563 = vmatprep.subr.mxu0 0.0
    %564 = vmatpush1.msra.mxu0 0.0
    %565 = vmatprep.subr.mxu0 0.0
    %566 = vmatpush1.msra.mxu0 0.0
    %567 = vmatprep.subr.mxu0 0.0
    %568 = vmatpush1.msra.mxu0 0.0
    %569 = vmatprep.mubr.f32.mxu0 0.0
    %570 = vmatmul.mubr.f32.gmra.mrb[0].mxu0 %v432
    %v571 = vpop.f32.mrb[0].mxu0
    %v572 = vadd.f32 0.0, %v571
    %v573 = vpop.f32.mrb[0].mxu0
    %574 = vdwg.mxu0
    %v575 = vld [vmem:[%s4] sm:$0x7]
    %v577 = vlaneseq
    %v578 = vshrl.u32 %v577, 7
    %v579 = vsub.s32 0, %v578
    %v580 = vrot.slane %v575, %v579
    %v581 = vlaneseq
    %v582 = vshrl.u32 %v581, 7
    %v583 = vsub.s32 1, %v582
    %v584 = vrot.slane %v575, %v583
    %v585 = vlaneseq
    %v586 = vshrl.u32 %v585, 7
    %v587 = vsub.s32 2, %v586
    %v588 = vrot.slane %v575, %v587
    %v592 = vmul.f32 %v501, %v580
    %v593 = vmul.f32 %v503, %v584
    %v594 = vmul.f32 %v572, %v588
    %v595 = vld [vmem:[%s5] sm:$0x7]
    %v597 = vlaneseq
    %v598 = vshrl.u32 %v597, 7
    %v599 = vsub.s32 0, %v598
    %v600 = vrot.slane %v595, %v599
    %v601 = vlaneseq
    %v602 = vshrl.u32 %v601, 7
    %v603 = vsub.s32 1, %v602
    %v604 = vrot.slane %v595, %v603
    %v605 = vlaneseq
    %v606 = vshrl.u32 %v605, 7
    %v607 = vsub.s32 2, %v606
    %v608 = vrot.slane %v595, %v607
    %612 = vmatprep.subr.mxu0 %v52
    %613 = vmatpush1.msra.mxu0 %v51
    %614 = vmatprep.subr.mxu0 %v55
    %615 = vmatpush1.msra.mxu0 %v54
    %616 = vmatprep.subr.mxu0 %v58
    %617 = vmatpush1.msra.mxu0 %v57
    %618 = vmatprep.subr.mxu0 %v61
    %619 = vmatpush1.msra.mxu0 %v60
    %620 = vmatprep.subr.mxu0 %v64
    %621 = vmatpush1.msra.mxu0 %v63
    %622 = vmatprep.subr.mxu0 %v67
    %623 = vmatpush1.msra.mxu0 %v66
    %624 = vmatprep.subr.mxu0 %v70
    %625 = vmatpush1.msra.mxu0 %v69
    %626 = vmatprep.subr.mxu0 %v73
    %627 = vmatpush1.msra.mxu0 %v72
    %628 = vmatprep.subr.mxu0 %v76
    %629 = vmatpush1.msra.mxu0 %v75
    %630 = vmatprep.subr.mxu0 %v79
    %631 = vmatpush1.msra.mxu0 %v78
    %632 = vmatprep.subr.mxu0 %v82
    %633 = vmatpush1.msra.mxu0 %v81
    %634 = vmatprep.subr.mxu0 %v85
    %635 = vmatpush1.msra.mxu0 %v84
    %636 = vmatprep.subr.mxu0 %v88
    %637 = vmatpush1.msra.mxu0 %v87
    %638 = vmatprep.subr.mxu0 %v91
    %639 = vmatpush1.msra.mxu0 %v90
    %640 = vmatprep.subr.mxu0 %v94
    %641 = vmatpush1.msra.mxu0 %v93
    %642 = vmatprep.subr.mxu0 %v97
    %643 = vmatpush1.msra.mxu0 %v96
    %644 = vmatprep.subr.mxu0 %v100
    %645 = vmatpush1.msra.mxu0 %v99
    %646 = vmatprep.subr.mxu0 %v103
    %647 = vmatpush1.msra.mxu0 %v102
    %648 = vmatprep.subr.mxu0 %v106
    %649 = vmatpush1.msra.mxu0 %v105
    %650 = vmatprep.subr.mxu0 %v109
    %651 = vmatpush1.msra.mxu0 %v108
    %652 = vmatprep.subr.mxu0 %v112
    %653 = vmatpush1.msra.mxu0 %v111
    %654 = vmatprep.subr.mxu0 %v115
    %655 = vmatpush1.msra.mxu0 %v114
    %656 = vmatprep.subr.mxu0 %v118
    %657 = vmatpush1.msra.mxu0 %v117
    %658 = vmatprep.subr.mxu0 %v121
    %659 = vmatpush1.msra.mxu0 %v120
    %660 = vmatprep.subr.mxu0 %v124
    %661 = vmatpush1.msra.mxu0 %v123
    %662 = vmatprep.subr.mxu0 %v127
    %663 = vmatpush1.msra.mxu0 %v126
    %664 = vmatprep.subr.mxu0 %v130
    %665 = vmatpush1.msra.mxu0 %v129
    %666 = vmatprep.subr.mxu0 %v133
    %667 = vmatpush1.msra.mxu0 %v132
    %668 = vmatprep.subr.mxu0 %v136
    %669 = vmatpush1.msra.mxu0 %v135
    %670 = vmatprep.subr.mxu0 %v139
    %671 = vmatpush1.msra.mxu0 %v138
    %672 = vmatprep.subr.mxu0 %v142
    %673 = vmatpush1.msra.mxu0 %v141
    %674 = vmatprep.subr.mxu0 %v145
    %675 = vmatpush1.msra.mxu0 %v144
    %676 = vmatprep.mubr.f32.mxu0 %v593
    %677 = vmatmul.mubr.f32.gmra.mrb[0].mxu0 %v592
    %v678 = vpop.f32.mrb[0].mxu0
    %v679 = vadd.f32 %v600, %v678
    %v680 = vpop.f32.mrb[0].mxu0
    %v681 = vadd.f32 %v604, %v680
    %682 = vdwg.mxu0
    %683 = vmatprep.subr.mxu0 %v148
    %684 = vmatpush1.msra.mxu0 %v147
    %685 = vmatprep.subr.mxu0 %v151
    %686 = vmatpush1.msra.mxu0 %v150
    %687 = vmatprep.subr.mxu0 %v154
    %688 = vmatpush1.msra.mxu0 %v153
    %689 = vmatprep.subr.mxu0 %v157
    %690 = vmatpush1.msra.mxu0 %v156
    %691 = vmatprep.subr.mxu0 %v160
    %692 = vmatpush1.msra.mxu0 %v159
    %693 = vmatprep.subr.mxu0 %v163
    %694 = vmatpush1.msra.mxu0 %v162
    %695 = vmatprep.subr.mxu0 %v166
    %696 = vmatpush1.msra.mxu0 %v165
    %697 = vmatprep.subr.mxu0 %v169
    %698 = vmatpush1.msra.mxu0 %v168
    %699 = vmatprep.subr.mxu0 %v172
    %700 = vmatpush1.msra.mxu0 %v171
    %701 = vmatprep.subr.mxu0 %v175
    %702 = vmatpush1.msra.mxu0 %v174
    %703 = vmatprep.subr.mxu0 %v178
    %704 = vmatpush1.msra.mxu0 %v177
    %705 = vmatprep.subr.mxu0 %v181
    %706 = vmatpush1.msra.mxu0 %v180
    %707 = vmatprep.subr.mxu0 %v184
    %708 = vmatpush1.msra.mxu0 %v183
    %709 = vmatprep.subr.mxu0 %v187
    %710 = vmatpush1.msra.mxu0 %v186
    %711 = vmatprep.subr.mxu0 %v190
    %712 = vmatpush1.msra.mxu0 %v189
    %713 = vmatprep.subr.mxu0 %v193
    %714 = vmatpush1.msra.mxu0 %v192
    %715 = vmatprep.subr.mxu0 %v196
    %716 = vmatpush1.msra.mxu0 %v195
    %717 = vmatprep.subr.mxu0 %v199
    %718 = vmatpush1.msra.mxu0 %v198
    %719 = vmatprep.subr.mxu0 %v202
    %720 = vmatpush1.msra.mxu0 %v201
    %721 = vmatprep.subr.mxu0 %v205
    %722 = vmatpush1.msra.mxu0 %v204
    %723 = vmatprep.subr.mxu0 %v208
    %724 = vmatpush1.msra.mxu0 %v207
    %725 = vmatprep.subr.mxu0 %v211
    %726 = vmatpush1.msra.mxu0 %v210
    %727 = vmatprep.subr.mxu0 %v214
    %728 = vmatpush1.msra.mxu0 %v213
    %729 = vmatprep.subr.mxu0 %v217
    %730 = vmatpush1.msra.mxu0 %v216
    %731 = vmatprep.subr.mxu0 %v220
    %732 = vmatpush1.msra.mxu0 %v219
    %733 = vmatprep.subr.mxu0 %v223
    %734 = vmatpush1.msra.mxu0 %v222
    %735 = vmatprep.subr.mxu0 %v226
    %736 = vmatpush1.msra.mxu0 %v225
    %737 = vmatprep.subr.mxu0 %v229
    %738 = vmatpush1.msra.mxu0 %v228
    %739 = vmatprep.subr.mxu0 %v232
    %740 = vmatpush1.msra.mxu0 %v231
    %741 = vmatprep.subr.mxu0 %v235
    %742 = vmatpush1.msra.mxu0 %v234
    %743 = vmatprep.subr.mxu0 %v238
    %744 = vmatpush1.msra.mxu0 %v237
    %745 = vmatprep.subr.mxu0 %v241
    %746 = vmatpush1.msra.mxu0 %v240
    %747 = vmatprep.mubr.f32.mxu0 0.0
    %748 = vmatmul.mubr.f32.gmra.mrb[0].mxu0 %v594
    %v749 = vpop.f32.mrb[0].mxu0
    %v750 = vadd.f32 %v679, %v749
    %v751 = vpop.f32.mrb[0].mxu0
    %v752 = vadd.f32 %v681, %v751
    %753 = vdwg.mxu0
    %754 = vmatprep.subr.mxu0 %v244
    %755 = vmatpush1.msra.mxu0 %v243
    %756 = vmatprep.subr.mxu0 %v247
    %757 = vmatpush1.msra.mxu0 %v246
    %758 = vmatprep.subr.mxu0 %v250
    %759 = vmatpush1.msra.mxu0 %v249
    %760 = vmatprep.subr.mxu0 %v253
    %761 = vmatpush1.msra.mxu0 %v252
    %762 = vmatprep.subr.mxu0 %v256
    %763 = vmatpush1.msra.mxu0 %v255
    %764 = vmatprep.subr.mxu0 %v259
    %765 = vmatpush1.msra.mxu0 %v258
    %766 = vmatprep.subr.mxu0 %v262
    %767 = vmatpush1.msra.mxu0 %v261
    %768 = vmatprep.subr.mxu0 %v265
    %769 = vmatpush1.msra.mxu0 %v264
    %770 = vmatprep.subr.mxu0 %v268
    %771 = vmatpush1.msra.mxu0 %v267
    %772 = vmatprep.subr.mxu0 %v271
    %773 = vmatpush1.msra.mxu0 %v270
    %774 = vmatprep.subr.mxu0 %v274
    %775 = vmatpush1.msra.mxu0 %v273
    %776 = vmatprep.subr.mxu0 %v277
    %777 = vmatpush1.msra.mxu0 %v276
    %778 = vmatprep.subr.mxu0 %v280
    %779 = vmatpush1.msra.mxu0 %v279
    %780 = vmatprep.subr.mxu0 %v283
    %781 = vmatpush1.msra.mxu0 %v282
    %782 = vmatprep.subr.mxu0 %v286
    %783 = vmatpush1.msra.mxu0 %v285
    %784 = vmatprep.subr.mxu0 %v289
    %785 = vmatpush1.msra.mxu0 %v288
    %786 = vmatprep.subr.mxu0 0.0
    %787 = vmatpush1.msra.mxu0 0.0
    %788 = vmatprep.subr.mxu0 0.0
    %789 = vmatpush1.msra.mxu0 0.0
    %790 = vmatprep.subr.mxu0 0.0
    %791 = vmatpush1.msra.mxu0 0.0
    %792 = vmatprep.subr.mxu0 0.0
    %793 = vmatpush1.msra.mxu0 0.0
    %794 = vmatprep.subr.mxu0 0.0
    %795 = vmatpush1.msra.mxu0 0.0
    %796 = vmatprep.subr.mxu0 0.0
    %797 = vmatpush1.msra.mxu0 0.0
    %798 = vmatprep.subr.mxu0 0.0
    %799 = vmatpush1.msra.mxu0 0.0
    %800 = vmatprep.subr.mxu0 0.0
    %801 = vmatpush1.msra.mxu0 0.0
    %802 = vmatprep.subr.mxu0 0.0
    %803 = vmatpush1.msra.mxu0 0.0
    %804 = vmatprep.subr.mxu0 0.0
    %805 = vmatpush1.msra.mxu0 0.0
    %806 = vmatprep.subr.mxu0 0.0
    %807 = vmatpush1.msra.mxu0 0.0
    %808 = vmatprep.subr.mxu0 0.0
    %809 = vmatpush1.msra.mxu0 0.0
    %810 = vmatprep.subr.mxu0 0.0
    %811 = vmatpush1.msra.mxu0 0.0
    %812 = vmatprep.subr.mxu0 0.0
    %813 = vmatpush1.msra.mxu0 0.0
    %814 = vmatprep.subr.mxu0 0.0
    %815 = vmatpush1.msra.mxu0 0.0
    %816 = vmatprep.subr.mxu0 0.0
    %817 = vmatpush1.msra.mxu0 0.0
    %818 = vmatprep.mubr.f32.mxu0 0.0
    %819 = vmatmul.mubr.f32.gmra.mrb[0].mxu0 0.0
    %v820 = vpop.f32.mrb[0].mxu0
    %v821 = vadd.f32 %v750, %v820
    %v822 = vpop.f32.mrb[0].mxu0
    %v823 = vadd.f32 %v752, %v822
    %824 = vdwg.mxu0
    %825 = vmatprep.subr.mxu0 0.0
    %826 = vmatpush1.msra.mxu0 %v53
    %827 = vmatprep.subr.mxu0 0.0
    %828 = vmatpush1.msra.mxu0 %v56
    %829 = vmatprep.subr.mxu0 0.0
    %830 = vmatpush1.msra.mxu0 %v59
    %831 = vmatprep.subr.mxu0 0.0
    %832 = vmatpush1.msra.mxu0 %v62
    %833 = vmatprep.subr.mxu0 0.0
    %834 = vmatpush1.msra.mxu0 %v65
    %835 = vmatprep.subr.mxu0 0.0
    %836 = vmatpush1.msra.mxu0 %v68
    %837 = vmatprep.subr.mxu0 0.0
    %838 = vmatpush1.msra.mxu0 %v71
    %839 = vmatprep.subr.mxu0 0.0
    %840 = vmatpush1.msra.mxu0 %v74
    %841 = vmatprep.subr.mxu0 0.0
    %842 = vmatpush1.msra.mxu0 %v77
    %843 = vmatprep.subr.mxu0 0.0
    %844 = vmatpush1.msra.mxu0 %v80
    %845 = vmatprep.subr.mxu0 0.0
    %846 = vmatpush1.msra.mxu0 %v83
    %847 = vmatprep.subr.mxu0 0.0
    %848 = vmatpush1.msra.mxu0 %v86
    %849 = vmatprep.subr.mxu0 0.0
    %850 = vmatpush1.msra.mxu0 %v89
    %851 = vmatprep.subr.mxu0 0.0
    %852 = vmatpush1.msra.mxu0 %v92
    %853 = vmatprep.subr.mxu0 0.0
    %854 = vmatpush1.msra.mxu0 %v95
    %855 = vmatprep.subr.mxu0 0.0
    %856 = vmatpush1.msra.mxu0 %v98
    %857 = vmatprep.subr.mxu0 0.0
    %858 = vmatpush1.msra.mxu0 %v101
    %859 = vmatprep.subr.mxu0 0.0
    %860 = vmatpush1.msra.mxu0 %v104
    %861 = vmatprep.subr.mxu0 0.0
    %862 = vmatpush1.msra.mxu0 %v107
    %863 = vmatprep.subr.mxu0 0.0
    %864 = vmatpush1.msra.mxu0 %v110
    %865 = vmatprep.subr.mxu0 0.0
    %866 = vmatpush1.msra.mxu0 %v113
    %867 = vmatprep.subr.mxu0 0.0
    %868 = vmatpush1.msra.mxu0 %v116
    %869 = vmatprep.subr.mxu0 0.0
    %870 = vmatpush1.msra.mxu0 %v119
    %871 = vmatprep.subr.mxu0 0.0
    %872 = vmatpush1.msra.mxu0 %v122
    %873 = vmatprep.subr.mxu0 0.0
    %874 = vmatpush1.msra.mxu0 %v125
    %875 = vmatprep.subr.mxu0 0.0
    %876 = vmatpush1.msra.mxu0 %v128
    %877 = vmatprep.subr.mxu0 0.0
    %878 = vmatpush1.msra.mxu0 %v131
    %879 = vmatprep.subr.mxu0 0.0
    %880 = vmatpush1.msra.mxu0 %v134
    %881 = vmatprep.subr.mxu0 0.0
    %882 = vmatpush1.msra.mxu0 %v137
    %883 = vmatprep.subr.mxu0 0.0
    %884 = vmatpush1.msra.mxu0 %v140
    %885 = vmatprep.subr.mxu0 0.0
    %886 = vmatpush1.msra.mxu0 %v143
    %887 = vmatprep.subr.mxu0 0.0
    %888 = vmatpush1.msra.mxu0 %v146
    %889 = vmatprep.mubr.f32.mxu0 %v593
    %890 = vmatmul.mubr.f32.gmra.mrb[0].mxu0 %v592
    %v891 = vpop.f32.mrb[0].mxu0
    %v892 = vadd.f32 %v608, %v891
    %v893 = vpop.f32.mrb[0].mxu0
    %894 = vdwg.mxu0
    %895 = vmatprep.subr.mxu0 0.0
    %896 = vmatpush1.msra.mxu0 %v149
    %897 = vmatprep.subr.mxu0 0.0
    %898 = vmatpush1.msra.mxu0 %v152
    %899 = vmatprep.subr.mxu0 0.0
    %900 = vmatpush1.msra.mxu0 %v155
    %901 = vmatprep.subr.mxu0 0.0
    %902 = vmatpush1.msra.mxu0 %v158
    %903 = vmatprep.subr.mxu0 0.0
    %904 = vmatpush1.msra.mxu0 %v161
    %905 = vmatprep.subr.mxu0 0.0
    %906 = vmatpush1.msra.mxu0 %v164
    %907 = vmatprep.subr.mxu0 0.0
    %908 = vmatpush1.msra.mxu0 %v167
    %909 = vmatprep.subr.mxu0 0.0
    %910 = vmatpush1.msra.mxu0 %v170
    %911 = vmatprep.subr.mxu0 0.0
    %912 = vmatpush1.msra.mxu0 %v173
    %913 = vmatprep.subr.mxu0 0.0
    %914 = vmatpush1.msra.mxu0 %v176
    %915 = vmatprep.subr.mxu0 0.0
    %916 = vmatpush1.msra.mxu0 %v179
    %917 = vmatprep.subr.mxu0 0.0
    %918 = vmatpush1.msra.mxu0 %v182
    %919 = vmatprep.subr.mxu0 0.0
    %920 = vmatpush1.msra.mxu0 %v185
    %921 = vmatprep.subr.mxu0 0.0
    %922 = vmatpush1.msra.mxu0 %v188
    %923 = vmatprep.subr.mxu0 0.0
    %924 = vmatpush1.msra.mxu0 %v191
    %925 = vmatprep.subr.mxu0 0.0
    %926 = vmatpush1.msra.mxu0 %v194
    %927 = vmatprep.subr.mxu0 0.0
    %928 = vmatpush1.msra.mxu0 %v197
    %929 = vmatprep.subr.mxu0 0.0
    %930 = vmatpush1.msra.mxu0 %v200
    %931 = vmatprep.subr.mxu0 0.0
    %932 = vmatpush1.msra.mxu0 %v203
    %933 = vmatprep.subr.mxu0 0.0
    %934 = vmatpush1.msra.mxu0 %v206
    %935 = vmatprep.subr.mxu0 0.0
    %936 = vmatpush1.msra.mxu0 %v209
    %937 = vmatprep.subr.mxu0 0.0
    %938 = vmatpush1.msra.mxu0 %v212
    %939 = vmatprep.subr.mxu0 0.0
    %940 = vmatpush1.msra.mxu0 %v215
    %941 = vmatprep.subr.mxu0 0.0
    %942 = vmatpush1.msra.mxu0 %v218
    %943 = vmatprep.subr.mxu0 0.0
    %944 = vmatpush1.msra.mxu0 %v221
    %945 = vmatprep.subr.mxu0 0.0
    %946 = vmatpush1.msra.mxu0 %v224
    %947 = vmatprep.subr.mxu0 0.0
    %948 = vmatpush1.msra.mxu0 %v227
    %949 = vmatprep.subr.mxu0 0.0
    %950 = vmatpush1.msra.mxu0 %v230
    %951 = vmatprep.subr.mxu0 0.0
    %952 = vmatpush1.msra.mxu0 %v233
    %953 = vmatprep.subr.mxu0 0.0
    %954 = vmatpush1.msra.mxu0 %v236
    %955 = vmatprep.subr.mxu0 0.0
    %956 = vmatpush1.msra.mxu0 %v239
    %957 = vmatprep.subr.mxu0 0.0
    %958 = vmatpush1.msra.mxu0 %v242
    %959 = vmatprep.mubr.f32.mxu0 0.0
    %960 = vmatmul.mubr.f32.gmra.mrb[0].mxu0 %v594
    %v961 = vpop.f32.mrb[0].mxu0
    %v962 = vadd.f32 %v892, %v961
    %v963 = vpop.f32.mrb[0].mxu0
    %964 = vdwg.mxu0
    %965 = vmatprep.subr.mxu0 0.0
    %966 = vmatpush1.msra.mxu0 %v245
    %967 = vmatprep.subr.mxu0 0.0
    %968 = vmatpush1.msra.mxu0 %v248
    %969 = vmatprep.subr.mxu0 0.0
    %970 = vmatpush1.msra.mxu0 %v251
    %971 = vmatprep.subr.mxu0 0.0
    %972 = vmatpush1.msra.mxu0 %v254
    %973 = vmatprep.subr.mxu0 0.0
    %974 = vmatpush1.msra.mxu0 %v257
    %975 = vmatprep.subr.mxu0 0.0
    %976 = vmatpush1.msra.mxu0 %v260
    %977 = vmatprep.subr.mxu0 0.0
    %978 = vmatpush1.msra.mxu0 %v263
    %979 = vmatprep.subr.mxu0 0.0
    %980 = vmatpush1.msra.mxu0 %v266
    %981 = vmatprep.subr.mxu0 0.0
    %982 = vmatpush1.msra.mxu0 %v269
    %983 = vmatprep.subr.mxu0 0.0
    %984 = vmatpush1.msra.mxu0 %v272
    %985 = vmatprep.subr.mxu0 0.0
    %986 = vmatpush1.msra.mxu0 %v275
    %987 = vmatprep.subr.mxu0 0.0
    %988 = vmatpush1.msra.mxu0 %v278
    %989 = vmatprep.subr.mxu0 0.0
    %990 = vmatpush1.msra.mxu0 %v281
    %991 = vmatprep.subr.mxu0 0.0
    %992 = vmatpush1.msra.mxu0 %v284
    %993 = vmatprep.subr.mxu0 0.0
    %994 = vmatpush1.msra.mxu0 %v287
    %995 = vmatprep.subr.mxu0 0.0
    %996 = vmatpush1.msra.mxu0 %v290
    %997 = vmatprep.subr.mxu0 0.0
    %998 = vmatpush1.msra.mxu0 0.0
    %999 = vmatprep.subr.mxu0 0.0
    %1000 = vmatpush1.msra.mxu0 0.0
    %1001 = vmatprep.subr.mxu0 0.0
    %1002 = vmatpush1.msra.mxu0 0.0
    %1003 = vmatprep.subr.mxu0 0.0
    %1004 = vmatpush1.msra.mxu0 0.0
    %1005 = vmatprep.subr.mxu0 0.0
    %1006 = vmatpush1.msra.mxu0 0.0
    %1007 = vmatprep.subr.mxu0 0.0
    %1008 = vmatpush1.msra.mxu0 0.0
    %1009 = vmatprep.subr.mxu0 0.0
    %1010 = vmatpush1.msra.mxu0 0.0
    %1011 = vmatprep.subr.mxu0 0.0
    %1012 = vmatpush1.msra.mxu0 0.0
    %1013 = vmatprep.subr.mxu0 0.0
    %1014 = vmatpush1.msra.mxu0 0.0
    %1015 = vmatprep.subr.mxu0 0.0
    %1016 = vmatpush1.msra.mxu0 0.0
    %1017 = vmatprep.subr.mxu0 0.0
    %1018 = vmatpush1.msra.mxu0 0.0
    %1019 = vmatprep.subr.mxu0 0.0
    %1020 = vmatpush1.msra.mxu0 0.0
    %1021 = vmatprep.subr.mxu0 0.0
    %1022 = vmatpush1.msra.mxu0 0.0
    %1023 = vmatprep.subr.mxu0 0.0
    %1024 = vmatpush1.msra.mxu0 0.0
    %1025 = vmatprep.subr.mxu0 0.0
    %1026 = vmatpush1.msra.mxu0 0.0
    %1027 = vmatprep.subr.mxu0 0.0
    %1028 = vmatpush1.msra.mxu0 0.0
    %1029 = vmatprep.mubr.f32.mxu0 0.0
    %1030 = vmatmul.mubr.f32.gmra.mrb[0].mxu0 0.0
    %v1031 = vpop.f32.mrb[0].mxu0
    %v1032 = vadd.f32 %v962, %v1031
    %v1033 = vpop.f32.mrb[0].mxu0
    %1034 = vdwg.mxu0
    %v1035 = vadd.f32 %v821, %v823
    %v1037 = vlaneseq
    %v1038 = vshrl.u32 %v1037, 7
    %v1039 = vsub.s32 0, %v1038
    %v1040 = vrot.slane %v387, %v1039
    %v1041 = vlaneseq
    %v1042 = vshrl.u32 %v1041, 7
    %v1043 = vsub.s32 1, %v1042
    %v1044 = vrot.slane %v387, %v1043
    %1047 = vmatprep.subr.mxu0 %v292
    %1048 = vmatpush1.msra.mxu0 %v291
    %1049 = vmatprep.subr.mxu0 %v294
    %1050 = vmatpush1.msra.mxu0 %v293
    %1051 = vmatprep.subr.mxu0 %v296
    %1052 = vmatpush1.msra.mxu0 %v295
    %1053 = vmatprep.subr.mxu0 %v298
    %1054 = vmatpush1.msra.mxu0 %v297
    %1055 = vmatprep.subr.mxu0 %v300
    %1056 = vmatpush1.msra.mxu0 %v299
    %1057 = vmatprep.subr.mxu0 %v302
    %1058 = vmatpush1.msra.mxu0 %v301
    %1059 = vmatprep.subr.mxu0 %v304
    %1060 = vmatpush1.msra.mxu0 %v303
    %1061 = vmatprep.subr.mxu0 %v306
    %1062 = vmatpush1.msra.mxu0 %v305
    %1063 = vmatprep.subr.mxu0 %v308
    %1064 = vmatpush1.msra.mxu0 %v307
    %1065 = vmatprep.subr.mxu0 %v310
    %1066 = vmatpush1.msra.mxu0 %v309
    %1067 = vmatprep.subr.mxu0 %v312
    %1068 = vmatpush1.msra.mxu0 %v311
    %1069 = vmatprep.subr.mxu0 %v314
    %1070 = vmatpush1.msra.mxu0 %v313
    %1071 = vmatprep.subr.mxu0 %v316
    %1072 = vmatpush1.msra.mxu0 %v315
    %1073 = vmatprep.subr.mxu0 %v318
    %1074 = vmatpush1.msra.mxu0 %v317
    %1075 = vmatprep.subr.mxu0 %v320
    %1076 = vmatpush1.msra.mxu0 %v319
    %1077 = vmatprep.subr.mxu0 %v322
    %1078 = vmatpush1.msra.mxu0 %v321
    %1079 = vmatprep.subr.mxu0 %v324
    %1080 = vmatpush1.msra.mxu0 %v323
    %1081 = vmatprep.subr.mxu0 %v326
    %1082 = vmatpush1.msra.mxu0 %v325
    %1083 = vmatprep.subr.mxu0 %v328
    %1084 = vmatpush1.msra.mxu0 %v327
    %1085 = vmatprep.subr.mxu0 %v330
    %1086 = vmatpush1.msra.mxu0 %v329
    %1087 = vmatprep.subr.mxu0 %v332
    %1088 = vmatpush1.msra.mxu0 %v331
    %1089 = vmatprep.subr.mxu0 %v334
    %1090 = vmatpush1.msra.mxu0 %v333
    %1091 = vmatprep.subr.mxu0 %v336
    %1092 = vmatpush1.msra.mxu0 %v335
    %1093 = vmatprep.subr.mxu0 %v338
    %1094 = vmatpush1.msra.mxu0 %v337
    %1095 = vmatprep.subr.mxu0 %v340
    %1096 = vmatpush1.msra.mxu0 %v339
    %1097 = vmatprep.subr.mxu0 %v342
    %1098 = vmatpush1.msra.mxu0 %v341
    %1099 = vmatprep.subr.mxu0 %v344
    %1100 = vmatpush1.msra.mxu0 %v343
    %1101 = vmatprep.subr.mxu0 %v346
    %1102 = vmatpush1.msra.mxu0 %v345
    %1103 = vmatprep.subr.mxu0 %v348
    %1104 = vmatpush1.msra.mxu0 %v347
    %1105 = vmatprep.subr.mxu0 %v350
    %1106 = vmatpush1.msra.mxu0 %v349
    %1107 = vmatprep.subr.mxu0 %v352
    %1108 = vmatpush1.msra.mxu0 %v351
    %1109 = vmatprep.subr.mxu0 %v354
    %1110 = vmatpush1.msra.mxu0 %v353
    %1111 = vmatprep.mubr.f32.mxu0 %v823
    %1112 = vmatmul.mubr.f32.gmra.mrb[0].mxu0 %v821
    %v1113 = vpop.f32.mrb[0].mxu0
    %v1114 = vadd.f32 %v1040, %v1113
    %v1115 = vpop.f32.mrb[0].mxu0
    %v1116 = vadd.f32 %v1044, %v1115
    %1117 = vdwg.mxu0
    %1118 = vmatprep.subr.mxu0 %v356
    %1119 = vmatpush1.msra.mxu0 %v355
    %1120 = vmatprep.subr.mxu0 %v358
    %1121 = vmatpush1.msra.mxu0 %v357
    %1122 = vmatprep.subr.mxu0 %v360
    %1123 = vmatpush1.msra.mxu0 %v359
    %1124 = vmatprep.subr.mxu0 %v362
    %1125 = vmatpush1.msra.mxu0 %v361
    %1126 = vmatprep.subr.mxu0 %v364
    %1127 = vmatpush1.msra.mxu0 %v363
    %1128 = vmatprep.subr.mxu0 %v366
    %1129 = vmatpush1.msra.mxu0 %v365
    %1130 = vmatprep.subr.mxu0 %v368
    %1131 = vmatpush1.msra.mxu0 %v367
    %1132 = vmatprep.subr.mxu0 %v370
    %1133 = vmatpush1.msra.mxu0 %v369
    %1134 = vmatprep.subr.mxu0 %v372
    %1135 = vmatpush1.msra.mxu0 %v371
    %1136 = vmatprep.subr.mxu0 %v374
    %1137 = vmatpush1.msra.mxu0 %v373
    %1138 = vmatprep.subr.mxu0 %v376
    %1139 = vmatpush1.msra.mxu0 %v375
    %1140 = vmatprep.subr.mxu0 %v378
    %1141 = vmatpush1.msra.mxu0 %v377
    %1142 = vmatprep.subr.mxu0 %v380
    %1143 = vmatpush1.msra.mxu0 %v379
    %1144 = vmatprep.subr.mxu0 %v382
    %1145 = vmatpush1.msra.mxu0 %v381
    %1146 = vmatprep.subr.mxu0 %v384
    %1147 = vmatpush1.msra.mxu0 %v383
    %1148 = vmatprep.subr.mxu0 %v386
    %1149 = vmatpush1.msra.mxu0 %v385
    %1150 = vmatprep.subr.mxu0 0.0
    %1151 = vmatpush1.msra.mxu0 0.0
    %1152 = vmatprep.subr.mxu0 0.0
    %1153 = vmatpush1.msra.mxu0 0.0
    %1154 = vmatprep.subr.mxu0 0.0
    %1155 = vmatpush1.msra.mxu0 0.0
    %1156 = vmatprep.subr.mxu0 0.0
    %1157 = vmatpush1.msra.mxu0 0.0
    %1158 = vmatprep.subr.mxu0 0.0
    %1159 = vmatpush1.msra.mxu0 0.0
    %1160 = vmatprep.subr.mxu0 0.0
    %1161 = vmatpush1.msra.mxu0 0.0
    %1162 = vmatprep.subr.mxu0 0.0
    %1163 = vmatpush1.msra.mxu0 0.0
    %1164 = vmatprep.subr.mxu0 0.0
    %1165 = vmatpush1.msra.mxu0 0.0
    %1166 = vmatprep.subr.mxu0 0.0
    %1167 = vmatpush1.msra.mxu0 0.0
    %1168 = vmatprep.subr.mxu0 0.0
    %1169 = vmatpush1.msra.mxu0 0.0
    %1170 = vmatprep.subr.mxu0 0.0
    %1171 = vmatpush1.msra.mxu0 0.0
    %1172 = vmatprep.subr.mxu0 0.0
    %1173 = vmatpush1.msra.mxu0 0.0
    %1174 = vmatprep.subr.mxu0 0.0
    %1175 = vmatpush1.msra.mxu0 0.0
    %1176 = vmatprep.subr.mxu0 0.0
    %1177 = vmatpush1.msra.mxu0 0.0
    %1178 = vmatprep.subr.mxu0 0.0
    %1179 = vmatpush1.msra.mxu0 0.0
    %1180 = vmatprep.subr.mxu0 0.0
    %1181 = vmatpush1.msra.mxu0 0.0
    %1182 = vmatprep.mubr.f32.mxu0 0.0
    %1183 = vmatmul.mubr.f32.gmra.mrb[0].mxu0 %v1032
    %v1184 = vpop.f32.mrb[0].mxu0
    %v1185 = vadd.f32 %v1114, %v1184
    %v1186 = vpop.f32.mrb[0].mxu0
    %v1187 = vadd.f32 %v1116, %v1186
    %1188 = vdwg.mxu0
    %v1189 = vmul.f32 %v1187, 0.5
    %v1190 = vmul.f32 %v1189, 1.442695
    %v1191 = vpow.pop %v1190
    %v1194 = vcombine.low %v1185, %v1191
    %v1196 = vunpack.c.l.s4 1983009808
    %v1197 = vunpack.c.0.s8 %v1196
    %v1198 = vlaneseq
    %v1199 = vshrl.u32 %v1198, 7
    %v1200 = vsub.s32 %v1197, %v1199
    %v1201 = vrot.slane %v1194, %v1200
    %1203 = vst [vmem:[%s14] sm:$0xf] %v1201
    %v1204 = vmul.f32 %v1185, 0.1
    %v1205 = vadd.f32 %v1204, 0.0
    %v1206 = vmul.f32 %v1205, 0.0
    %v1207 = vadd.f32 %v1185, %v1206
    %vm1208 = vcmask 15360
    %v1210 = vsel %vm1208, %v49, 0
    %vm1212 = vcmask 1041408
    %v1214 = vsel %vm1212, 0.0, 0
    %v1217 = vsel %vm1212, %v1207, 0
    %v1220 = vsel %vm1212, %v1035, 0
    %1222 = vmatprep.subr.mxu0 %v1217
    %1223 = vmatpush1.msra.mxu0 %v1214
    %1224 = vmatprep.subr.mxu0 0.0
    %1225 = vmatpush1.msra.mxu0 0.0
    %1226 = vmatprep.subr.mxu0 0.0
    %1227 = vmatpush1.msra.mxu0 0.0
    %1228 = vmatprep.subr.mxu0 0.0
    %1229 = vmatpush1.msra.mxu0 0.0
    %1230 = vmatprep.subr.mxu0 0.0
    %1231 = vmatpush1.msra.mxu0 0.0
    %1232 = vmatprep.subr.mxu0 0.0
    %1233 = vmatpush1.msra.mxu0 0.0
    %1234 = vmatprep.subr.mxu0 0.0
    %1235 = vmatpush1.msra.mxu0 0.0
    %1236 = vmatprep.subr.mxu0 0.0
    %1237 = vmatpush1.msra.mxu0 0.0
    %1238 = vmatprep.subr.mxu0 0.0
    %1239 = vmatpush1.msra.mxu0 0.0
    %1240 = vmatprep.subr.mxu0 0.0
    %1241 = vmatpush1.msra.mxu0 0.0
    %1242 = vmatprep.subr.mxu0 0.0
    %1243 = vmatpush1.msra.mxu0 0.0
    %1244 = vmatprep.subr.mxu0 0.0
    %1245 = vmatpush1.msra.mxu0 0.0
    %1246 = vmatprep.subr.mxu0 0.0
    %1247 = vmatpush1.msra.mxu0 0.0
    %1248 = vmatprep.subr.mxu0 0.0
    %1249 = vmatpush1.msra.mxu0 0.0
    %1250 = vmatprep.subr.mxu0 0.0
    %1251 = vmatpush1.msra.mxu0 0.0
    %1252 = vmatprep.subr.mxu0 0.0
    %1253 = vmatpush1.msra.mxu0 0.0
    %1254 = vmatprep.subr.mxu0 0.0
    %1255 = vmatpush1.msra.mxu0 0.0
    %1256 = vmatprep.subr.mxu0 0.0
    %1257 = vmatpush1.msra.mxu0 0.0
    %1258 = vmatprep.subr.mxu0 0.0
    %1259 = vmatpush1.msra.mxu0 0.0
    %1260 = vmatprep.subr.mxu0 0.0
    %1261 = vmatpush1.msra.mxu0 0.0
    %1262 = vmatprep.subr.mxu0 0.0
    %1263 = vmatpush1.msra.mxu0 0.0
    %1264 = vmatprep.subr.mxu0 0.0
    %1265 = vmatpush1.msra.mxu0 0.0
    %1266 = vmatprep.subr.mxu0 0.0
    %1267 = vmatpush1.msra.mxu0 0.0
    %1268 = vmatprep.subr.mxu0 0.0
    %1269 = vmatpush1.msra.mxu0 0.0
    %1270 = vmatprep.subr.mxu0 0.0
    %1271 = vmatpush1.msra.mxu0 0.0
    %1272 = vmatprep.subr.mxu0 0.0
    %1273 = vmatpush1.msra.mxu0 0.0
    %1274 = vmatprep.subr.mxu0 0.0
    %1275 = vmatpush1.msra.mxu0 0.0
    %1276 = vmatprep.subr.mxu0 0.0
    %1277 = vmatpush1.msra.mxu0 0.0
    %1278 = vmatprep.subr.mxu0 0.0
    %1279 = vmatpush1.msra.mxu0 0.0
    %1280 = vmatprep.subr.mxu0 0.0
    %1281 = vmatpush1.msra.mxu0 0.0
    %1282 = vmatprep.subr.mxu0 0.0
    %1283 = vmatpush1.msra.mxu0 0.0
    %1284 = vmatprep.subr.mxu0 0.0
    %1285 = vmatpush1.msra.mxu0 0.0
    %1286 = vmatprep.mubr.f32.mxu0 0.0
    %1287 = vmatmul.mubr.f32.gmra.mrb[0].mxu0 %v1210
    %v1288 = vpop.f32.mrb[0].mxu0
    %v1289 = vadd.f32 0.0, %v1288
    %v1290 = vpop.f32.mrb[0].mxu0
    %v1291 = vadd.f32 0.0, %v1290
    %1292 = vdwg.mxu0
    %1293 = vmatprep.subr.mxu0 0.0
    %1294 = vmatpush1.msra.mxu0 %v1220
    %1295 = vmatprep.subr.mxu0 0.0
    %1296 = vmatpush1.msra.mxu0 0.0
    %1297 = vmatprep.subr.mxu0 0.0
    %1298 = vmatpush1.msra.mxu0 0.0
    %1299 = vmatprep.subr.mxu0 0.0
    %1300 = vmatpush1.msra.mxu0 0.0
    %1301 = vmatprep.subr.mxu0 0.0
    %1302 = vmatpush1.msra.mxu0 0.0
    %1303 = vmatprep.subr.mxu0 0.0
    %1304 = vmatpush1.msra.mxu0 0.0
    %1305 = vmatprep.subr.mxu0 0.0
    %1306 = vmatpush1.msra.mxu0 0.0
    %1307 = vmatprep.subr.mxu0 0.0
    %1308 = vmatpush1.msra.mxu0 0.0
    %1309 = vmatprep.subr.mxu0 0.0
    %1310 = vmatpush1.msra.mxu0 0.0
    %1311 = vmatprep.subr.mxu0 0.0
    %1312 = vmatpush1.msra.mxu0 0.0
    %1313 = vmatprep.subr.mxu0 0.0
    %1314 = vmatpush1.msra.mxu0 0.0
    %1315 = vmatprep.subr.mxu0 0.0
    %1316 = vmatpush1.msra.mxu0 0.0
    %1317 = vmatprep.subr.mxu0 0.0
    %1318 = vmatpush1.msra.mxu0 0.0
    %1319 = vmatprep.subr.mxu0 0.0
    %1320 = vmatpush1.msra.mxu0 0.0
    %1321 = vmatprep.subr.mxu0 0.0
    %1322 = vmatpush1.msra.mxu0 0.0
    %1323 = vmatprep.subr.mxu0 0.0
    %1324 = vmatpush1.msra.mxu0 0.0
    %1325 = vmatprep.subr.mxu0 0.0
    %1326 = vmatpush1.msra.mxu0 0.0
    %1327 = vmatprep.subr.mxu0 0.0
    %1328 = vmatpush1.msra.mxu0 0.0
    %1329 = vmatprep.subr.mxu0 0.0
    %1330 = vmatpush1.msra.mxu0 0.0
    %1331 = vmatprep.subr.mxu0 0.0
    %1332 = vmatpush1.msra.mxu0 0.0
    %1333 = vmatprep.subr.mxu0 0.0
    %1334 = vmatpush1.msra.mxu0 0.0
    %1335 = vmatprep.subr.mxu0 0.0
    %1336 = vmatpush1.msra.mxu0 0.0
    %1337 = vmatprep.subr.mxu0 0.0
    %1338 = vmatpush1.msra.mxu0 0.0
    %1339 = vmatprep.subr.mxu0 0.0
    %1340 = vmatpush1.msra.mxu0 0.0
    %1341 = vmatprep.subr.mxu0 0.0
    %1342 = vmatpush1.msra.mxu0 0.0
    %1343 = vmatprep.subr.mxu0 0.0
    %1344 = vmatpush1.msra.mxu0 0.0
    %1345 = vmatprep.subr.mxu0 0.0
    %1346 = vmatpush1.msra.mxu0 0.0
    %1347 = vmatprep.subr.mxu0 0.0
    %1348 = vmatpush1.msra.mxu0 0.0
    %1349 = vmatprep.subr.mxu0 0.0
    %1350 = vmatpush1.msra.mxu0 0.0
    %1351 = vmatprep.subr.mxu0 0.0
    %1352 = vmatpush1.msra.mxu0 0.0
    %1353 = vmatprep.subr.mxu0 0.0
    %1354 = vmatpush1.msra.mxu0 0.0
    %1355 = vmatprep.subr.mxu0 0.0
    %1356 = vmatpush1.msra.mxu0 0.0
    %1357 = vmatprep.mubr.f32.mxu0 0.0
    %1358 = vmatmul.mubr.f32.gmra.mrb[0].mxu0 %v1210
    %v1359 = vpop.f32.mrb[0].mxu0
    %v1360 = vadd.f32 0.0, %v1359
    %v1361 = vpop.f32.mrb[0].mxu0
    %1362 = vdwg.mxu0
    %v1363 = vsub.f32 1.0, %v50
    %v1364 = vmul.f32 %v1289, %v1363
    %v1365 = vmul.f32 %v1291, %v50
    %v1366 = vadd.f32 %v1364, %v1365
    %v1367 = vmul.f32 %v1366, 0.0
    %v1368 = vadd.f32 %v1291, %v1367
    %v1369 = vadd.f32 %v1368, %v1360
    %v1370 = vmul.f32 %v1207, 0.5
    %v1371 = vadd.f32 %v1370, 0.0
    %v1372 = vmul.f32 %v1371, 0.0
    %v1373 = vadd.f32 %v1207, %v1372
    %v1374 = vadd.f32 %v1373, %v1035
    %v1376 = vlaneseq
    %v1377 = vshrl.u32 %v1376, 7
    %v1378 = vsub.s32 0, %v1377
    %v1379 = vrot.slane %v420, %v1378
    %v1380 = vlaneseq
    %v1381 = vshrl.u32 %v1380, 7
    %v1382 = vsub.s32 1, %v1381
    %v1383 = vrot.slane %v420, %v1382
    %1386 = vmatprep.subr.mxu0 %v389
    %1387 = vmatpush1.msra.mxu0 %v388
    %1388 = vmatprep.subr.mxu0 %v391
    %1389 = vmatpush1.msra.mxu0 %v390
    %1390 = vmatprep.subr.mxu0 %v393
    %1391 = vmatpush1.msra.mxu0 %v392
    %1392 = vmatprep.subr.mxu0 %v395
    %1393 = vmatpush1.msra.mxu0 %v394
    %1394 = vmatprep.subr.mxu0 %v397
    %1395 = vmatpush1.msra.mxu0 %v396
    %1396 = vmatprep.subr.mxu0 %v399
    %1397 = vmatpush1.msra.mxu0 %v398
    %1398 = vmatprep.subr.mxu0 %v401
    %1399 = vmatpush1.msra.mxu0 %v400
    %1400 = vmatprep.subr.mxu0 %v403
    %1401 = vmatpush1.msra.mxu0 %v402
    %1402 = vmatprep.subr.mxu0 %v405
    %1403 = vmatpush1.msra.mxu0 %v404
    %1404 = vmatprep.subr.mxu0 %v407
    %1405 = vmatpush1.msra.mxu0 %v406
    %1406 = vmatprep.subr.mxu0 %v409
    %1407 = vmatpush1.msra.mxu0 %v408
    %1408 = vmatprep.subr.mxu0 %v411
    %1409 = vmatpush1.msra.mxu0 %v410
    %1410 = vmatprep.subr.mxu0 %v413
    %1411 = vmatpush1.msra.mxu0 %v412
    %1412 = vmatprep.subr.mxu0 %v415
    %1413 = vmatpush1.msra.mxu0 %v414
    %1414 = vmatprep.subr.mxu0 %v417
    %1415 = vmatpush1.msra.mxu0 %v416
    %1416 = vmatprep.subr.mxu0 %v419
    %1417 = vmatpush1.msra.mxu0 %v418
    %1418 = vmatprep.subr.mxu0 0.0
    %1419 = vmatpush1.msra.mxu0 0.0
    %1420 = vmatprep.subr.mxu0 0.0
    %1421 = vmatpush1.msra.mxu0 0.0
    %1422 = vmatprep.subr.mxu0 0.0
    %1423 = vmatpush1.msra.mxu0 0.0
    %1424 = vmatprep.subr.mxu0 0.0
    %1425 = vmatpush1.msra.mxu0 0.0
    %1426 = vmatprep.subr.mxu0 0.0
    %1427 = vmatpush1.msra.mxu0 0.0
    %1428 = vmatprep.subr.mxu0 0.0
    %1429 = vmatpush1.msra.mxu0 0.0
    %1430 = vmatprep.subr.mxu0 0.0
    %1431 = vmatpush1.msra.mxu0 0.0
    %1432 = vmatprep.subr.mxu0 0.0
    %1433 = vmatpush1.msra.mxu0 0.0
    %1434 = vmatprep.subr.mxu0 0.0
    %1435 = vmatpush1.msra.mxu0 0.0
    %1436 = vmatprep.subr.mxu0 0.0
    %1437 = vmatpush1.msra.mxu0 0.0
    %1438 = vmatprep.subr.mxu0 0.0
    %1439 = vmatpush1.msra.mxu0 0.0
    %1440 = vmatprep.subr.mxu0 0.0
    %1441 = vmatpush1.msra.mxu0 0.0
    %1442 = vmatprep.subr.mxu0 0.0
    %1443 = vmatpush1.msra.mxu0 0.0
    %1444 = vmatprep.subr.mxu0 0.0
    %1445 = vmatpush1.msra.mxu0 0.0
    %1446 = vmatprep.subr.mxu0 0.0
    %1447 = vmatpush1.msra.mxu0 0.0
    %1448 = vmatprep.subr.mxu0 0.0
    %1449 = vmatpush1.msra.mxu0 0.0
    %1450 = vmatprep.mubr.f32.mxu0 0.0
    %1451 = vmatmul.mubr.f32.gmra.mrb[0].mxu0 %v1369
    %v1452 = vpop.f32.mrb[0].mxu0
    %v1453 = vadd.f32 %v1379, %v1452
    %v1454 = vpop.f32.mrb[0].mxu0
    %v1455 = vadd.f32 %v1383, %v1454
    %1456 = vmatprep.mubr.f32.mxu0 0.0
    %1457 = vmatmul.mubr.f32.gmra.mrb[0].mxu0 %v1374
    %v1458 = vpop.f32.mrb[0].mxu0
    %v1459 = vadd.f32 %v1379, %v1458
    %v1460 = vpop.f32.mrb[0].mxu0
    %v1461 = vadd.f32 %v1383, %v1460
    %1462 = vdwg.mxu0
    %1463 = vst [vmem:[%s13] sm:$0xff] %v1453
    %1464 = vst [vmem:[%s13 + $0x8] sm:$0xff] %v1455
    %s1465 = scalar_lea.vmem %s0, 72
    %v1466 = vld [vmem:[%s1465] sm:$0xff]
    %v1467 = vld [vmem:[%s1465 + $0x8] sm:$0xff]
    %v1468 = vld [vmem:[%s1465 + $0x10] sm:$0xff]
    %v1469 = vld [vmem:[%s1465 + $0x18] sm:$0xff]
    %v1470 = vld [vmem:[%s1465 + $0x20] sm:$0xff]
    %v1471 = vld [vmem:[%s1465 + $0x28] sm:$0xff]
    %v1472 = vld [vmem:[%s1465 + $0x30] sm:$0xff]
    %v1473 = vld [vmem:[%s1465 + $0x38] sm:$0xff]
    %v1474 = vld [vmem:[%s1465 + $0x40] sm:$0xff]
    %1475 = vmatprep.subr.mxu0 %v1467
    %1476 = vmatpush1.msra.mxu0 %v1466
    %1477 = vmatprep.subr.mxu0 %v1470
    %1478 = vmatpush1.msra.mxu0 %v1469
    %1479 = vmatprep.subr.mxu0 %v1473
    %1480 = vmatpush1.msra.mxu0 %v1472
    %1481 = vmatprep.subr.mxu0 0.0
    %1482 = vmatpush1.msra.mxu0 0.0
    %1483 = vmatprep.subr.mxu0 0.0
    %1484 = vmatpush1.msra.mxu0 0.0
    %1485 = vmatprep.subr.mxu0 0.0
    %1486 = vmatpush1.msra.mxu0 0.0
    %1487 = vmatprep.subr.mxu0 0.0
    %1488 = vmatpush1.msra.mxu0 0.0
    %1489 = vmatprep.subr.mxu0 0.0
    %1490 = vmatpush1.msra.mxu0 0.0
    %1491 = vmatprep.subr.mxu0 0.0
    %1492 = vmatpush1.msra.mxu0 0.0
    %1493 = vmatprep.subr.mxu0 0.0
    %1494 = vmatpush1.msra.mxu0 0.0
    %1495 = vmatprep.subr.mxu0 0.0
    %1496 = vmatpush1.msra.mxu0 0.0
    %1497 = vmatprep.subr.mxu0 0.0
    %1498 = vmatpush1.msra.mxu0 0.0
    %1499 = vmatprep.subr.mxu0 0.0
    %1500 = vmatpush1.msra.mxu0 0.0
    %1501 = vmatprep.subr.mxu0 0.0
    %1502 = vmatpush1.msra.mxu0 0.0
    %1503 = vmatprep.subr.mxu0 0.0
    %1504 = vmatpush1.msra.mxu0 0.0
    %1505 = vmatprep.subr.mxu0 0.0
    %1506 = vmatpush1.msra.mxu0 0.0
    %1507 = vmatprep.subr.mxu0 0.0
    %1508 = vmatpush1.msra.mxu0 0.0
    %1509 = vmatprep.subr.mxu0 0.0
    %1510 = vmatpush1.msra.mxu0 0.0
    %1511 = vmatprep.subr.mxu0 0.0
    %1512 = vmatpush1.msra.mxu0 0.0
    %1513 = vmatprep.subr.mxu0 0.0
    %1514 = vmatpush1.msra.mxu0 0.0
    %1515 = vmatprep.subr.mxu0 0.0
    %1516 = vmatpush1.msra.mxu0 0.0
    %1517 = vmatprep.subr.mxu0 0.0
    %1518 = vmatpush1.msra.mxu0 0.0
    %1519 = vmatprep.subr.mxu0 0.0
    %1520 = vmatpush1.msra.mxu0 0.0
    %1521 = vmatprep.subr.mxu0 0.0
    %1522 = vmatpush1.msra.mxu0 0.0
    %1523 = vmatprep.subr.mxu0 0.0
    %1524 = vmatpush1.msra.mxu0 0.0
    %1525 = vmatprep.subr.mxu0 0.0
    %1526 = vmatpush1.msra.mxu0 0.0
    %1527 = vmatprep.subr.mxu0 0.0
    %1528 = vmatpush1.msra.mxu0 0.0
    %1529 = vmatprep.subr.mxu0 0.0
    %1530 = vmatpush1.msra.mxu0 0.0
    %1531 = vmatprep.subr.mxu0 0.0
    %1532 = vmatpush1.msra.mxu0 0.0
    %1533 = vmatprep.subr.mxu0 0.0
    %1534 = vmatpush1.msra.mxu0 0.0
    %1535 = vmatprep.subr.mxu0 0.0
    %1536 = vmatpush1.msra.mxu0 0.0
    %1537 = vmatprep.subr.mxu0 0.0
    %1538 = vmatpush1.msra.mxu0 0.0
    %1539 = vmatprep.mubr.f32.mxu0 0.0
    %1540 = vmatmul.mubr.f32.gmra.mrb[0].mxu0 %v432
    %v1541 = vpop.f32.mrb[0].mxu0
    %v1542 = vadd.f32 0.0, %v1541
    %v1543 = vpop.f32.mrb[0].mxu0
    %v1544 = vadd.f32 0.0, %v1543
    %1545 = vdwg.mxu0
    %1546 = vmatprep.subr.mxu0 0.0
    %1547 = vmatpush1.msra.mxu0 %v1468
    %1548 = vmatprep.subr.mxu0 0.0
    %1549 = vmatpush1.msra.mxu0 %v1471
    %1550 = vmatprep.subr.mxu0 0.0
    %1551 = vmatpush1.msra.mxu0 %v1474
    %1552 = vmatprep.subr.mxu0 0.0
    %1553 = vmatpush1.msra.mxu0 0.0
    %1554 = vmatprep.subr.mxu0 0.0
    %1555 = vmatpush1.msra.mxu0 0.0
    %1556 = vmatprep.subr.mxu0 0.0
    %1557 = vmatpush1.msra.mxu0 0.0
    %1558 = vmatprep.subr.mxu0 0.0
    %1559 = vmatpush1.msra.mxu0 0.0
    %1560 = vmatprep.subr.mxu0 0.0
    %1561 = vmatpush1.msra.mxu0 0.0
    %1562 = vmatprep.subr.mxu0 0.0
    %1563 = vmatpush1.msra.mxu0 0.0
    %1564 = vmatprep.subr.mxu0 0.0
    %1565 = vmatpush1.msra.mxu0 0.0
    %1566 = vmatprep.subr.mxu0 0.0
    %1567 = vmatpush1.msra.mxu0 0.0
    %1568 = vmatprep.subr.mxu0 0.0
    %1569 = vmatpush1.msra.mxu0 0.0
    %1570 = vmatprep.subr.mxu0 0.0
    %1571 = vmatpush1.msra.mxu0 0.0
    %1572 = vmatprep.subr.mxu0 0.0
    %1573 = vmatpush1.msra.mxu0 0.0
    %1574 = vmatprep.subr.mxu0 0.0
    %1575 = vmatpush1.msra.mxu0 0.0
    %1576 = vmatprep.subr.mxu0 0.0
    %1577 = vmatpush1.msra.mxu0 0.0
    %1578 = vmatprep.subr.mxu0 0.0
    %1579 = vmatpush1.msra.mxu0 0.0
    %1580 = vmatprep.subr.mxu0 0.0
    %1581 = vmatpush1.msra.mxu0 0.0
    %1582 = vmatprep.subr.mxu0 0.0
    %1583 = vmatpush1.msra.mxu0 0.0
    %1584 = vmatprep.subr.mxu0 0.0
    %1585 = vmatpush1.msra.mxu0 0.0
    %1586 = vmatprep.subr.mxu0 0.0
    %1587 = vmatpush1.msra.mxu0 0.0
    %1588 = vmatprep.subr.mxu0 0.0
    %1589 = vmatpush1.msra.mxu0 0.0
    %1590 = vmatprep.subr.mxu0 0.0
    %1591 = vmatpush1.msra.mxu0 0.0
    %1592 = vmatprep.subr.mxu0 0.0
    %1593 = vmatpush1.msra.mxu0 0.0
    %1594 = vmatprep.subr.mxu0 0.0
    %1595 = vmatpush1.msra.mxu0 0.0
    %1596 = vmatprep.subr.mxu0 0.0
    %1597 = vmatpush1.msra.mxu0 0.0
    %1598 = vmatprep.subr.mxu0 0.0
    %1599 = vmatpush1.msra.mxu0 0.0
    %1600 = vmatprep.subr.mxu0 0.0
    %1601 = vmatpush1.msra.mxu0 0.0
    %1602 = vmatprep.subr.mxu0 0.0
    %1603 = vmatpush1.msra.mxu0 0.0
    %1604 = vmatprep.subr.mxu0 0.0
    %1605 = vmatpush1.msra.mxu0 0.0
    %1606 = vmatprep.subr.mxu0 0.0
    %1607 = vmatpush1.msra.mxu0 0.0
    %1608 = vmatprep.subr.mxu0 0.0
    %1609 = vmatpush1.msra.mxu0 0.0
    %1610 = vmatprep.mubr.f32.mxu0 0.0
    %1611 = vmatmul.mubr.f32.gmra.mrb[0].mxu0 %v432
    %v1612 = vpop.f32.mrb[0].mxu0
    %v1613 = vadd.f32 0.0, %v1612
    %v1614 = vpop.f32.mrb[0].mxu0
    %1615 = vdwg.mxu0
    %v1616 = vadd.f32 %v501, %v1542
    %v1617 = vadd.f32 %v503, %v1544
    %v1618 = vadd.f32 %v572, %v1613
    %s1619 = scalar_lea.vmem %s4, 3
    %v1620 = vld [vmem:[%s1619] sm:$0x7]
    %v1622 = vlaneseq
    %v1623 = vshrl.u32 %v1622, 7
    %v1624 = vsub.s32 0, %v1623
    %v1625 = vrot.slane %v1620, %v1624
    %v1626 = vlaneseq
    %v1627 = vshrl.u32 %v1626, 7
    %v1628 = vsub.s32 1, %v1627
    %v1629 = vrot.slane %v1620, %v1628
    %v1630 = vlaneseq
    %v1631 = vshrl.u32 %v1630, 7
    %v1632 = vsub.s32 2, %v1631
    %v1633 = vrot.slane %v1620, %v1632
    %v1637 = vmul.f32 %v1616, %v1625
    %v1638 = vmul.f32 %v1617, %v1629
    %v1639 = vmul.f32 %v1618, %v1633
    %s1640 = scalar_lea.vmem %s5, 3
    %v1641 = vld [vmem:[%s1640] sm:$0x7]
    %v1643 = vlaneseq
    %v1644 = vshrl.u32 %v1643, 7
    %v1645 = vsub.s32 0, %v1644
    %v1646 = vrot.slane %v1641, %v1645
    %v1647 = vlaneseq
    %v1648 = vshrl.u32 %v1647, 7
    %v1649 = vsub.s32 1, %v1648
    %v1650 = vrot.slane %v1641, %v1649
    %v1651 = vlaneseq
    %v1652 = vshrl.u32 %v1651, 7
    %v1653 = vsub.s32 2, %v1652
    %v1654 = vrot.slane %v1641, %v1653
    %1658 = vmatprep.subr.mxu0 %v52
    %1659 = vmatpush1.msra.mxu0 %v51
    %1660 = vmatprep.subr.mxu0 %v55
    %1661 = vmatpush1.msra.mxu0 %v54
    %1662 = vmatprep.subr.mxu0 %v58
    %1663 = vmatpush1.msra.mxu0 %v57
    %1664 = vmatprep.subr.mxu0 %v61
    %1665 = vmatpush1.msra.mxu0 %v60
    %1666 = vmatprep.subr.mxu0 %v64
    %1667 = vmatpush1.msra.mxu0 %v63
    %1668 = vmatprep.subr.mxu0 %v67
    %1669 = vmatpush1.msra.mxu0 %v66
    %1670 = vmatprep.subr.mxu0 %v70
    %1671 = vmatpush1.msra.mxu0 %v69
    %1672 = vmatprep.subr.mxu0 %v73
    %1673 = vmatpush1.msra.mxu0 %v72
    %1674 = vmatprep.subr.mxu0 %v76
    %1675 = vmatpush1.msra.mxu0 %v75
    %1676 = vmatprep.subr.mxu0 %v79
    %1677 = vmatpush1.msra.mxu0 %v78
    %1678 = vmatprep.subr.mxu0 %v82
    %1679 = vmatpush1.msra.mxu0 %v81
    %1680 = vmatprep.subr.mxu0 %v85
    %1681 = vmatpush1.msra.mxu0 %v84
    %1682 = vmatprep.subr.mxu0 %v88
    %1683 = vmatpush1.msra.mxu0 %v87
    %1684 = vmatprep.subr.mxu0 %v91
    %1685 = vmatpush1.msra.mxu0 %v90
    %1686 = vmatprep.subr.mxu0 %v94
    %1687 = vmatpush1.msra.mxu0 %v93
    %1688 = vmatprep.subr.mxu0 %v97
    %1689 = vmatpush1.msra.mxu0 %v96
    %1690 = vmatprep.subr.mxu0 %v100
    %1691 = vmatpush1.msra.mxu0 %v99
    %1692 = vmatprep.subr.mxu0 %v103
    %1693 = vmatpush1.msra.mxu0 %v102
    %1694 = vmatprep.subr.mxu0 %v106
    %1695 = vmatpush1.msra.mxu0 %v105
    %1696 = vmatprep.subr.mxu0 %v109
    %1697 = vmatpush1.msra.mxu0 %v108
    %1698 = vmatprep.subr.mxu0 %v112
    %1699 = vmatpush1.msra.mxu0 %v111
    %1700 = vmatprep.subr.mxu0 %v115
    %1701 = vmatpush1.msra.mxu0 %v114
    %1702 = vmatprep.subr.mxu0 %v118
    %1703 = vmatpush1.msra.mxu0 %v117
    %1704 = vmatprep.subr.mxu0 %v121
    %1705 = vmatpush1.msra.mxu0 %v120
    %1706 = vmatprep.subr.mxu0 %v124
    %1707 = vmatpush1.msra.mxu0 %v123
    %1708 = vmatprep.subr.mxu0 %v127
    %1709 = vmatpush1.msra.mxu0 %v126
    %1710 = vmatprep.subr.mxu0 %v130
    %1711 = vmatpush1.msra.mxu0 %v129
    %1712 = vmatprep.subr.mxu0 %v133
    %1713 = vmatpush1.msra.mxu0 %v132
    %1714 = vmatprep.subr.mxu0 %v136
    %1715 = vmatpush1.msra.mxu0 %v135
    %1716 = vmatprep.subr.mxu0 %v139
    %1717 = vmatpush1.msra.mxu0 %v138
    %1718 = vmatprep.subr.mxu0 %v142
    %1719 = vmatpush1.msra.mxu0 %v141
    %1720 = vmatprep.subr.mxu0 %v145
    %1721 = vmatpush1.msra.mxu0 %v144
    %1722 = vmatprep.mubr.f32.mxu0 %v1638
    %1723 = vmatmul.mubr.f32.gmra.mrb[0].mxu0 %v1637
    %v1724 = vpop.f32.mrb[0].mxu0
    %v1725 = vadd.f32 %v1646, %v1724
    %v1726 = vpop.f32.mrb[0].mxu0
    %v1727 = vadd.f32 %v1650, %v1726
    %1728 = vdwg.mxu0
    %1729 = vmatprep.subr.mxu0 %v148
    %1730 = vmatpush1.msra.mxu0 %v147
    %1731 = vmatprep.subr.mxu0 %v151
    %1732 = vmatpush1.msra.mxu0 %v150
    %1733 = vmatprep.subr.mxu0 %v154
    %1734 = vmatpush1.msra.mxu0 %v153
    %1735 = vmatprep.subr.mxu0 %v157
    %1736 = vmatpush1.msra.mxu0 %v156
    %1737 = vmatprep.subr.mxu0 %v160
    %1738 = vmatpush1.msra.mxu0 %v159
    %1739 = vmatprep.subr.mxu0 %v163
    %1740 = vmatpush1.msra.mxu0 %v162
    %1741 = vmatprep.subr.mxu0 %v166
    %1742 = vmatpush1.msra.mxu0 %v165
    %1743 = vmatprep.subr.mxu0 %v169
    %1744 = vmatpush1.msra.mxu0 %v168
    %1745 = vmatprep.subr.mxu0 %v172
    %1746 = vmatpush1.msra.mxu0 %v171
    %1747 = vmatprep.subr.mxu0 %v175
    %1748 = vmatpush1.msra.mxu0 %v174
    %1749 = vmatprep.subr.mxu0 %v178
    %1750 = vmatpush1.msra.mxu0 %v177
    %1751 = vmatprep.subr.mxu0 %v181
    %1752 = vmatpush1.msra.mxu0 %v180
    %1753 = vmatprep.subr.mxu0 %v184
    %1754 = vmatpush1.msra.mxu0 %v183
    %1755 = vmatprep.subr.mxu0 %v187
    %1756 = vmatpush1.msra.mxu0 %v186
    %1757 = vmatprep.subr.mxu0 %v190
    %1758 = vmatpush1.msra.mxu0 %v189
    %1759 = vmatprep.subr.mxu0 %v193
    %1760 = vmatpush1.msra.mxu0 %v192
    %1761 = vmatprep.subr.mxu0 %v196
    %1762 = vmatpush1.msra.mxu0 %v195
    %1763 = vmatprep.subr.mxu0 %v199
    %1764 = vmatpush1.msra.mxu0 %v198
    %1765 = vmatprep.subr.mxu0 %v202
    %1766 = vmatpush1.msra.mxu0 %v201
    %1767 = vmatprep.subr.mxu0 %v205
    %1768 = vmatpush1.msra.mxu0 %v204
    %1769 = vmatprep.subr.mxu0 %v208
    %1770 = vmatpush1.msra.mxu0 %v207
    %1771 = vmatprep.subr.mxu0 %v211
    %1772 = vmatpush1.msra.mxu0 %v210
    %1773 = vmatprep.subr.mxu0 %v214
    %1774 = vmatpush1.msra.mxu0 %v213
    %1775 = vmatprep.subr.mxu0 %v217
    %1776 = vmatpush1.msra.mxu0 %v216
    %1777 = vmatprep.subr.mxu0 %v220
    %1778 = vmatpush1.msra.mxu0 %v219
    %1779 = vmatprep.subr.mxu0 %v223
    %1780 = vmatpush1.msra.mxu0 %v222
    %1781 = vmatprep.subr.mxu0 %v226
    %1782 = vmatpush1.msra.mxu0 %v225
    %1783 = vmatprep.subr.mxu0 %v229
    %1784 = vmatpush1.msra.mxu0 %v228
    %1785 = vmatprep.subr.mxu0 %v232
    %1786 = vmatpush1.msra.mxu0 %v231
    %1787 = vmatprep.subr.mxu0 %v235
    %1788 = vmatpush1.msra.mxu0 %v234
    %1789 = vmatprep.subr.mxu0 %v238
    %1790 = vmatpush1.msra.mxu0 %v237
    %1791 = vmatprep.subr.mxu0 %v241
    %1792 = vmatpush1.msra.mxu0 %v240
    %1793 = vmatprep.mubr.f32.mxu0 %v1459
    %1794 = vmatmul.mubr.f32.gmra.mrb[0].mxu0 %v1639
    %v1795 = vpop.f32.mrb[0].mxu0
    %v1796 = vadd.f32 %v1725, %v1795
    %v1797 = vpop.f32.mrb[0].mxu0
    %v1798 = vadd.f32 %v1727, %v1797
    %1799 = vdwg.mxu0
    %1800 = vmatprep.subr.mxu0 %v244
    %1801 = vmatpush1.msra.mxu0 %v243
    %1802 = vmatprep.subr.mxu0 %v247
    %1803 = vmatpush1.msra.mxu0 %v246
    %1804 = vmatprep.subr.mxu0 %v250
    %1805 = vmatpush1.msra.mxu0 %v249
    %1806 = vmatprep.subr.mxu0 %v253
    %1807 = vmatpush1.msra.mxu0 %v252
    %1808 = vmatprep.subr.mxu0 %v256
    %1809 = vmatpush1.msra.mxu0 %v255
    %1810 = vmatprep.subr.mxu0 %v259
    %1811 = vmatpush1.msra.mxu0 %v258
    %1812 = vmatprep.subr.mxu0 %v262
    %1813 = vmatpush1.msra.mxu0 %v261
    %1814 = vmatprep.subr.mxu0 %v265
    %1815 = vmatpush1.msra.mxu0 %v264
    %1816 = vmatprep.subr.mxu0 %v268
    %1817 = vmatpush1.msra.mxu0 %v267
    %1818 = vmatprep.subr.mxu0 %v271
    %1819 = vmatpush1.msra.mxu0 %v270
    %1820 = vmatprep.subr.mxu0 %v274
    %1821 = vmatpush1.msra.mxu0 %v273
    %1822 = vmatprep.subr.mxu0 %v277
    %1823 = vmatpush1.msra.mxu0 %v276
    %1824 = vmatprep.subr.mxu0 %v280
    %1825 = vmatpush1.msra.mxu0 %v279
    %1826 = vmatprep.subr.mxu0 %v283
    %1827 = vmatpush1.msra.mxu0 %v282
    %1828 = vmatprep.subr.mxu0 %v286
    %1829 = vmatpush1.msra.mxu0 %v285
    %1830 = vmatprep.subr.mxu0 %v289
    %1831 = vmatpush1.msra.mxu0 %v288
    %1832 = vmatprep.subr.mxu0 0.0
    %1833 = vmatpush1.msra.mxu0 0.0
    %1834 = vmatprep.subr.mxu0 0.0
    %1835 = vmatpush1.msra.mxu0 0.0
    %1836 = vmatprep.subr.mxu0 0.0
    %1837 = vmatpush1.msra.mxu0 0.0
    %1838 = vmatprep.subr.mxu0 0.0
    %1839 = vmatpush1.msra.mxu0 0.0
    %1840 = vmatprep.subr.mxu0 0.0
    %1841 = vmatpush1.msra.mxu0 0.0
    %1842 = vmatprep.subr.mxu0 0.0
    %1843 = vmatpush1.msra.mxu0 0.0
    %1844 = vmatprep.subr.mxu0 0.0
    %1845 = vmatpush1.msra.mxu0 0.0
    %1846 = vmatprep.subr.mxu0 0.0
    %1847 = vmatpush1.msra.mxu0 0.0
    %1848 = vmatprep.subr.mxu0 0.0
    %1849 = vmatpush1.msra.mxu0 0.0
    %1850 = vmatprep.subr.mxu0 0.0
    %1851 = vmatpush1.msra.mxu0 0.0
    %1852 = vmatprep.subr.mxu0 0.0
    %1853 = vmatpush1.msra.mxu0 0.0
    %1854 = vmatprep.subr.mxu0 0.0
    %1855 = vmatpush1.msra.mxu0 0.0
    %1856 = vmatprep.subr.mxu0 0.0
    %1857 = vmatpush1.msra.mxu0 0.0
    %1858 = vmatprep.subr.mxu0 0.0
    %1859 = vmatpush1.msra.mxu0 0.0
    %1860 = vmatprep.subr.mxu0 0.0
    %1861 = vmatpush1.msra.mxu0 0.0
    %1862 = vmatprep.subr.mxu0 0.0
    %1863 = vmatpush1.msra.mxu0 0.0
    %1864 = vmatprep.mubr.f32.mxu0 0.0
    %1865 = vmatmul.mubr.f32.gmra.mrb[0].mxu0 %v1461
    %v1866 = vpop.f32.mrb[0].mxu0
    %v1867 = vadd.f32 %v1796, %v1866
    %v1868 = vpop.f32.mrb[0].mxu0
    %v1869 = vadd.f32 %v1798, %v1868
    %1870 = vdwg.mxu0
    %1871 = vmatprep.subr.mxu0 0.0
    %1872 = vmatpush1.msra.mxu0 %v53
    %1873 = vmatprep.subr.mxu0 0.0
    %1874 = vmatpush1.msra.mxu0 %v56
    %1875 = vmatprep.subr.mxu0 0.0
    %1876 = vmatpush1.msra.mxu0 %v59
    %1877 = vmatprep.subr.mxu0 0.0
    %1878 = vmatpush1.msra.mxu0 %v62
    %1879 = vmatprep.subr.mxu0 0.0
    %1880 = vmatpush1.msra.mxu0 %v65
    %1881 = vmatprep.subr.mxu0 0.0
    %1882 = vmatpush1.msra.mxu0 %v68
    %1883 = vmatprep.subr.mxu0 0.0
    %1884 = vmatpush1.msra.mxu0 %v71
    %1885 = vmatprep.subr.mxu0 0.0
    %1886 = vmatpush1.msra.mxu0 %v74
    %1887 = vmatprep.subr.mxu0 0.0
    %1888 = vmatpush1.msra.mxu0 %v77
    %1889 = vmatprep.subr.mxu0 0.0
    %1890 = vmatpush1.msra.mxu0 %v80
    %1891 = vmatprep.subr.mxu0 0.0
    %1892 = vmatpush1.msra.mxu0 %v83
    %1893 = vmatprep.subr.mxu0 0.0
    %1894 = vmatpush1.msra.mxu0 %v86
    %1895 = vmatprep.subr.mxu0 0.0
    %1896 = vmatpush1.msra.mxu0 %v89
    %1897 = vmatprep.subr.mxu0 0.0
    %1898 = vmatpush1.msra.mxu0 %v92
    %1899 = vmatprep.subr.mxu0 0.0
    %1900 = vmatpush1.msra.mxu0 %v95
    %1901 = vmatprep.subr.mxu0 0.0
    %1902 = vmatpush1.msra.mxu0 %v98
    %1903 = vmatprep.subr.mxu0 0.0
    %1904 = vmatpush1.msra.mxu0 %v101
    %1905 = vmatprep.subr.mxu0 0.0
    %1906 = vmatpush1.msra.mxu0 %v104
    %1907 = vmatprep.subr.mxu0 0.0
    %1908 = vmatpush1.msra.mxu0 %v107
    %1909 = vmatprep.subr.mxu0 0.0
    %1910 = vmatpush1.msra.mxu0 %v110
    %1911 = vmatprep.subr.mxu0 0.0
    %1912 = vmatpush1.msra.mxu0 %v113
    %1913 = vmatprep.subr.mxu0 0.0
    %1914 = vmatpush1.msra.mxu0 %v116
    %1915 = vmatprep.subr.mxu0 0.0
    %1916 = vmatpush1.msra.mxu0 %v119
    %1917 = vmatprep.subr.mxu0 0.0
    %1918 = vmatpush1.msra.mxu0 %v122
    %1919 = vmatprep.subr.mxu0 0.0
    %1920 = vmatpush1.msra.mxu0 %v125
    %1921 = vmatprep.subr.mxu0 0.0
    %1922 = vmatpush1.msra.mxu0 %v128
    %1923 = vmatprep.subr.mxu0 0.0
    %1924 = vmatpush1.msra.mxu0 %v131
    %1925 = vmatprep.subr.mxu0 0.0
    %1926 = vmatpush1.msra.mxu0 %v134
    %1927 = vmatprep.subr.mxu0 0.0
    %1928 = vmatpush1.msra.mxu0 %v137
    %1929 = vmatprep.subr.mxu0 0.0
    %1930 = vmatpush1.msra.mxu0 %v140
    %1931 = vmatprep.subr.mxu0 0.0
    %1932 = vmatpush1.msra.mxu0 %v143
    %1933 = vmatprep.subr.mxu0 0.0
    %1934 = vmatpush1.msra.mxu0 %v146
    %1935 = vmatprep.mubr.f32.mxu0 %v1638
    %1936 = vmatmul.mubr.f32.gmra.mrb[0].mxu0 %v1637
    %v1937 = vpop.f32.mrb[0].mxu0
    %v1938 = vadd.f32 %v1654, %v1937
    %v1939 = vpop.f32.mrb[0].mxu0
    %1940 = vdwg.mxu0
    %1941 = vmatprep.subr.mxu0 0.0
    %1942 = vmatpush1.msra.mxu0 %v149
    %1943 = vmatprep.subr.mxu0 0.0
    %1944 = vmatpush1.msra.mxu0 %v152
    %1945 = vmatprep.subr.mxu0 0.0
    %1946 = vmatpush1.msra.mxu0 %v155
    %1947 = vmatprep.subr.mxu0 0.0
    %1948 = vmatpush1.msra.mxu0 %v158
    %1949 = vmatprep.subr.mxu0 0.0
    %1950 = vmatpush1.msra.mxu0 %v161
    %1951 = vmatprep.subr.mxu0 0.0
    %1952 = vmatpush1.msra.mxu0 %v164
    %1953 = vmatprep.subr.mxu0 0.0
    %1954 = vmatpush1.msra.mxu0 %v167
    %1955 = vmatprep.subr.mxu0 0.0
    %1956 = vmatpush1.msra.mxu0 %v170
    %1957 = vmatprep.subr.mxu0 0.0
    %1958 = vmatpush1.msra.mxu0 %v173
    %1959 = vmatprep.subr.mxu0 0.0
    %1960 = vmatpush1.msra.mxu0 %v176
    %1961 = vmatprep.subr.mxu0 0.0
    %1962 = vmatpush1.msra.mxu0 %v179
    %1963 = vmatprep.subr.mxu0 0.0
    %1964 = vmatpush1.msra.mxu0 %v182
    %1965 = vmatprep.subr.mxu0 0.0
    %1966 = vmatpush1.msra.mxu0 %v185
    %1967 = vmatprep.subr.mxu0 0.0
    %1968 = vmatpush1.msra.mxu0 %v188
    %1969 = vmatprep.subr.mxu0 0.0
    %1970 = vmatpush1.msra.mxu0 %v191
    %1971 = vmatprep.subr.mxu0 0.0
    %1972 = vmatpush1.msra.mxu0 %v194
    %1973 = vmatprep.subr.mxu0 0.0
    %1974 = vmatpush1.msra.mxu0 %v197
    %1975 = vmatprep.subr.mxu0 0.0
    %1976 = vmatpush1.msra.mxu0 %v200
    %1977 = vmatprep.subr.mxu0 0.0
    %1978 = vmatpush1.msra.mxu0 %v203
    %1979 = vmatprep.subr.mxu0 0.0
    %1980 = vmatpush1.msra.mxu0 %v206
    %1981 = vmatprep.subr.mxu0 0.0
    %1982 = vmatpush1.msra.mxu0 %v209
    %1983 = vmatprep.subr.mxu0 0.0
    %1984 = vmatpush1.msra.mxu0 %v212
    %1985 = vmatprep.subr.mxu0 0.0
    %1986 = vmatpush1.msra.mxu0 %v215
    %1987 = vmatprep.subr.mxu0 0.0
    %1988 = vmatpush1.msra.mxu0 %v218
    %1989 = vmatprep.subr.mxu0 0.0
    %1990 = vmatpush1.msra.mxu0 %v221
    %1991 = vmatprep.subr.mxu0 0.0
    %1992 = vmatpush1.msra.mxu0 %v224
    %1993 = vmatprep.subr.mxu0 0.0
    %1994 = vmatpush1.msra.mxu0 %v227
    %1995 = vmatprep.subr.mxu0 0.0
    %1996 = vmatpush1.msra.mxu0 %v230
    %1997 = vmatprep.subr.mxu0 0.0
    %1998 = vmatpush1.msra.mxu0 %v233
    %1999 = vmatprep.subr.mxu0 0.0
    %2000 = vmatpush1.msra.mxu0 %v236
    %2001 = vmatprep.subr.mxu0 0.0
    %2002 = vmatpush1.msra.mxu0 %v239
    %2003 = vmatprep.subr.mxu0 0.0
    %2004 = vmatpush1.msra.mxu0 %v242
    %2005 = vmatprep.mubr.f32.mxu0 %v1459
    %2006 = vmatmul.mubr.f32.gmra.mrb[0].mxu0 %v1639
    %v2007 = vpop.f32.mrb[0].mxu0
    %v2008 = vadd.f32 %v1938, %v2007
    %v2009 = vpop.f32.mrb[0].mxu0
    %2010 = vdwg.mxu0
    %2011 = vmatprep.subr.mxu0 0.0
    %2012 = vmatpush1.msra.mxu0 %v245
    %2013 = vmatprep.subr.mxu0 0.0
    %2014 = vmatpush1.msra.mxu0 %v248
    %2015 = vmatprep.subr.mxu0 0.0
    %2016 = vmatpush1.msra.mxu0 %v251
    %2017 = vmatprep.subr.mxu0 0.0
    %2018 = vmatpush1.msra.mxu0 %v254
    %2019 = vmatprep.subr.mxu0 0.0
    %2020 = vmatpush1.msra.mxu0 %v257
    %2021 = vmatprep.subr.mxu0 0.0
    %2022 = vmatpush1.msra.mxu0 %v260
    %2023 = vmatprep.subr.mxu0 0.0
    %2024 = vmatpush1.msra.mxu0 %v263
    %2025 = vmatprep.subr.mxu0 0.0
    %2026 = vmatpush1.msra.mxu0 %v266
    %2027 = vmatprep.subr.mxu0 0.0
    %2028 = vmatpush1.msra.mxu0 %v269
    %2029 = vmatprep.subr.mxu0 0.0
    %2030 = vmatpush1.msra.mxu0 %v272
    %2031 = vmatprep.subr.mxu0 0.0
    %2032 = vmatpush1.msra.mxu0 %v275
    %2033 = vmatprep.subr.mxu0 0.0
    %2034 = vmatpush1.msra.mxu0 %v278
    %2035 = vmatprep.subr.mxu0 0.0
    %2036 = vmatpush1.msra.mxu0 %v281
    %2037 = vmatprep.subr.mxu0 0.0
    %2038 = vmatpush1.msra.mxu0 %v284
    %2039 = vmatprep.subr.mxu0 0.0
    %2040 = vmatpush1.msra.mxu0 %v287
    %2041 = vmatprep.subr.mxu0 0.0
    %2042 = vmatpush1.msra.mxu0 %v290
    %2043 = vmatprep.subr.mxu0 0.0
    %2044 = vmatpush1.msra.mxu0 0.0
    %2045 = vmatprep.subr.mxu0 0.0
    %2046 = vmatpush1.msra.mxu0 0.0
    %2047 = vmatprep.subr.mxu0 0.0
    %2048 = vmatpush1.msra.mxu0 0.0
    %2049 = vmatprep.subr.mxu0 0.0
    %2050 = vmatpush1.msra.mxu0 0.0
    %2051 = vmatprep.subr.mxu0 0.0
    %2052 = vmatpush1.msra.mxu0 0.0
    %2053 = vmatprep.subr.mxu0 0.0
    %2054 = vmatpush1.msra.mxu0 0.0
    %2055 = vmatprep.subr.mxu0 0.0
    %2056 = vmatpush1.msra.mxu0 0.0
    %2057 = vmatprep.subr.mxu0 0.0
    %2058 = vmatpush1.msra.mxu0 0.0
    %2059 = vmatprep.subr.mxu0 0.0
    %2060 = vmatpush1.msra.mxu0 0.0
    %2061 = vmatprep.subr.mxu0 0.0
    %2062 = vmatpush1.msra.mxu0 0.0
    %2063 = vmatprep.subr.mxu0 0.0
    %2064 = vmatpush1.msra.mxu0 0.0
    %2065 = vmatprep.subr.mxu0 0.0
    %2066 = vmatpush1.msra.mxu0 0.0
    %2067 = vmatprep.subr.mxu0 0.0
    %2068 = vmatpush1.msra.mxu0 0.0
    %2069 = vmatprep.subr.mxu0 0.0
    %2070 = vmatpush1.msra.mxu0 0.0
    %2071 = vmatprep.subr.mxu0 0.0
    %2072 = vmatpush1.msra.mxu0 0.0
    %2073 = vmatprep.subr.mxu0 0.0
    %2074 = vmatpush1.msra.mxu0 0.0
    %2075 = vmatprep.mubr.f32.mxu0 0.0
    %2076 = vmatmul.mubr.f32.gmra.mrb[0].mxu0 %v1461
    %v2077 = vpop.f32.mrb[0].mxu0
    %v2078 = vadd.f32 %v2008, %v2077
    %v2079 = vpop.f32.mrb[0].mxu0
    %2080 = vdwg.mxu0
    %v2081 = vadd.f32 %v1867, %v1869
    %2082 = vmatprep.subr.mxu0 %v292
    %2083 = vmatpush1.msra.mxu0 %v291
    %2084 = vmatprep.subr.mxu0 %v294
    %2085 = vmatpush1.msra.mxu0 %v293
    %2086 = vmatprep.subr.mxu0 %v296
    %2087 = vmatpush1.msra.mxu0 %v295
    %2088 = vmatprep.subr.mxu0 %v298
    %2089 = vmatpush1.msra.mxu0 %v297
    %2090 = vmatprep.subr.mxu0 %v300
    %2091 = vmatpush1.msra.mxu0 %v299
    %2092 = vmatprep.subr.mxu0 %v302
    %2093 = vmatpush1.msra.mxu0 %v301
    %2094 = vmatprep.subr.mxu0 %v304
    %2095 = vmatpush1.msra.mxu0 %v303
    %2096 = vmatprep.subr.mxu0 %v306
    %2097 = vmatpush1.msra.mxu0 %v305
    %2098 = vmatprep.subr.mxu0 %v308
    %2099 = vmatpush1.msra.mxu0 %v307
    %2100 = vmatprep.subr.mxu0 %v310
    %2101 = vmatpush1.msra.mxu0 %v309
    %2102 = vmatprep.subr.mxu0 %v312
    %2103 = vmatpush1.msra.mxu0 %v311
    %2104 = vmatprep.subr.mxu0 %v314
    %2105 = vmatpush1.msra.mxu0 %v313
    %2106 = vmatprep.subr.mxu0 %v316
    %2107 = vmatpush1.msra.mxu0 %v315
    %2108 = vmatprep.subr.mxu0 %v318
    %2109 = vmatpush1.msra.mxu0 %v317
    %2110 = vmatprep.subr.mxu0 %v320
    %2111 = vmatpush1.msra.mxu0 %v319
    %2112 = vmatprep.subr.mxu0 %v322
    %2113 = vmatpush1.msra.mxu0 %v321
    %2114 = vmatprep.subr.mxu0 %v324
    %2115 = vmatpush1.msra.mxu0 %v323
    %2116 = vmatprep.subr.mxu0 %v326
    %2117 = vmatpush1.msra.mxu0 %v325
    %2118 = vmatprep.subr.mxu0 %v328
    %2119 = vmatpush1.msra.mxu0 %v327
    %2120 = vmatprep.subr.mxu0 %v330
    %2121 = vmatpush1.msra.mxu0 %v329
    %2122 = vmatprep.subr.mxu0 %v332
    %2123 = vmatpush1.msra.mxu0 %v331
    %2124 = vmatprep.subr.mxu0 %v334
    %2125 = vmatpush1.msra.mxu0 %v333
    %2126 = vmatprep.subr.mxu0 %v336
    %2127 = vmatpush1.msra.mxu0 %v335
    %2128 = vmatprep.subr.mxu0 %v338
    %2129 = vmatpush1.msra.mxu0 %v337
    %2130 = vmatprep.subr.mxu0 %v340
    %2131 = vmatpush1.msra.mxu0 %v339
    %2132 = vmatprep.subr.mxu0 %v342
    %2133 = vmatpush1.msra.mxu0 %v341
    %2134 = vmatprep.subr.mxu0 %v344
    %2135 = vmatpush1.msra.mxu0 %v343
    %2136 = vmatprep.subr.mxu0 %v346
    %2137 = vmatpush1.msra.mxu0 %v345
    %2138 = vmatprep.subr.mxu0 %v348
    %2139 = vmatpush1.msra.mxu0 %v347
    %2140 = vmatprep.subr.mxu0 %v350
    %2141 = vmatpush1.msra.mxu0 %v349
    %2142 = vmatprep.subr.mxu0 %v352
    %2143 = vmatpush1.msra.mxu0 %v351
    %2144 = vmatprep.subr.mxu0 %v354
    %2145 = vmatpush1.msra.mxu0 %v353
    %2146 = vmatprep.mubr.f32.mxu0 %v1869
    %2147 = vmatmul.mubr.f32.gmra.mrb[0].mxu0 %v1867
    %v2148 = vpop.f32.mrb[0].mxu0
    %v2149 = vadd.f32 %v1040, %v2148
    %v2150 = vpop.f32.mrb[0].mxu0
    %v2151 = vadd.f32 %v1044, %v2150
    %2152 = vdwg.mxu0
    %2153 = vmatprep.subr.mxu0 %v356
    %2154 = vmatpush1.msra.mxu0 %v355
    %2155 = vmatprep.subr.mxu0 %v358
    %2156 = vmatpush1.msra.mxu0 %v357
    %2157 = vmatprep.subr.mxu0 %v360
    %2158 = vmatpush1.msra.mxu0 %v359
    %2159 = vmatprep.subr.mxu0 %v362
    %2160 = vmatpush1.msra.mxu0 %v361
    %2161 = vmatprep.subr.mxu0 %v364
    %2162 = vmatpush1.msra.mxu0 %v363
    %2163 = vmatprep.subr.mxu0 %v366
    %2164 = vmatpush1.msra.mxu0 %v365
    %2165 = vmatprep.subr.mxu0 %v368
    %2166 = vmatpush1.msra.mxu0 %v367
    %2167 = vmatprep.subr.mxu0 %v370
    %2168 = vmatpush1.msra.mxu0 %v369
    %2169 = vmatprep.subr.mxu0 %v372
    %2170 = vmatpush1.msra.mxu0 %v371
    %2171 = vmatprep.subr.mxu0 %v374
    %2172 = vmatpush1.msra.mxu0 %v373
    %2173 = vmatprep.subr.mxu0 %v376
    %2174 = vmatpush1.msra.mxu0 %v375
    %2175 = vmatprep.subr.mxu0 %v378
    %2176 = vmatpush1.msra.mxu0 %v377
    %2177 = vmatprep.subr.mxu0 %v380
    %2178 = vmatpush1.msra.mxu0 %v379
    %2179 = vmatprep.subr.mxu0 %v382
    %2180 = vmatpush1.msra.mxu0 %v381
    %2181 = vmatprep.subr.mxu0 %v384
    %2182 = vmatpush1.msra.mxu0 %v383
    %2183 = vmatprep.subr.mxu0 %v386
    %2184 = vmatpush1.msra.mxu0 %v385
    %2185 = vmatprep.subr.mxu0 0.0
    %2186 = vmatpush1.msra.mxu0 0.0
    %2187 = vmatprep.subr.mxu0 0.0
    %2188 = vmatpush1.msra.mxu0 0.0
    %2189 = vmatprep.subr.mxu0 0.0
    %2190 = vmatpush1.msra.mxu0 0.0
    %2191 = vmatprep.subr.mxu0 0.0
    %2192 = vmatpush1.msra.mxu0 0.0
    %2193 = vmatprep.subr.mxu0 0.0
    %2194 = vmatpush1.msra.mxu0 0.0
    %2195 = vmatprep.subr.mxu0 0.0
    %2196 = vmatpush1.msra.mxu0 0.0
    %2197 = vmatprep.subr.mxu0 0.0
    %2198 = vmatpush1.msra.mxu0 0.0
    %2199 = vmatprep.subr.mxu0 0.0
    %2200 = vmatpush1.msra.mxu0 0.0
    %2201 = vmatprep.subr.mxu0 0.0
    %2202 = vmatpush1.msra.mxu0 0.0
    %2203 = vmatprep.subr.mxu0 0.0
    %2204 = vmatpush1.msra.mxu0 0.0
    %2205 = vmatprep.subr.mxu0 0.0
    %2206 = vmatpush1.msra.mxu0 0.0
    %2207 = vmatprep.subr.mxu0 0.0
    %2208 = vmatpush1.msra.mxu0 0.0
    %2209 = vmatprep.subr.mxu0 0.0
    %2210 = vmatpush1.msra.mxu0 0.0
    %2211 = vmatprep.subr.mxu0 0.0
    %2212 = vmatpush1.msra.mxu0 0.0
    %2213 = vmatprep.subr.mxu0 0.0
    %2214 = vmatpush1.msra.mxu0 0.0
    %2215 = vmatprep.subr.mxu0 0.0
    %2216 = vmatpush1.msra.mxu0 0.0
    %2217 = vmatprep.mubr.f32.mxu0 0.0
    %2218 = vmatmul.mubr.f32.gmra.mrb[0].mxu0 %v2078
    %v2219 = vpop.f32.mrb[0].mxu0
    %v2220 = vadd.f32 %v2149, %v2219
    %v2221 = vpop.f32.mrb[0].mxu0
    %v2222 = vadd.f32 %v2151, %v2221
    %2223 = vdwg.mxu0
    %v2224 = vmul.f32 %v2222, 0.5
    %v2225 = vmul.f32 %v2224, 1.442695
    %v2226 = vpow.pop %v2225
    %v2229 = vcombine.low %v2220, %v2226
    %v2231 = vunpack.c.l.s4 1983009808
    %v2232 = vunpack.c.0.s8 %v2231
    %v2233 = vlaneseq
    %v2234 = vshrl.u32 %v2233, 7
    %v2235 = vsub.s32 %v2232, %v2234
    %v2236 = vrot.slane %v2229, %v2235
    %s2238 = scalar_lea.vmem %s14, 4
    %2239 = vst [vmem:[%s2238] sm:$0xf] %v2236
    %v2240 = vmul.f32 %v2220, 0.0
    %v2241 = vmul.f32 %v1207, 0.9
    %v2242 = vmul.f32 %v2220, 0.1
    %v2243 = vadd.f32 %v2241, %v2242
    %v2244 = vadd.f32 %v2240, %v2243
    %v2246 = vsel %vm1212, %v2244, 0
    %v2249 = vsel %vm1212, %v2081, 0
    %2251 = vmatprep.subr.mxu0 %v2246
    %2252 = vmatpush1.msra.mxu0 %v1217
    %2253 = vmatprep.subr.mxu0 0.0
    %2254 = vmatpush1.msra.mxu0 0.0
    %2255 = vmatprep.subr.mxu0 0.0
    %2256 = vmatpush1.msra.mxu0 0.0
    %2257 = vmatprep.subr.mxu0 0.0
    %2258 = vmatpush1.msra.mxu0 0.0
    %2259 = vmatprep.subr.mxu0 0.0
    %2260 = vmatpush1.msra.mxu0 0.0
    %2261 = vmatprep.subr.mxu0 0.0
    %2262 = vmatpush1.msra.mxu0 0.0
    %2263 = vmatprep.subr.mxu0 0.0
    %2264 = vmatpush1.msra.mxu0 0.0
    %2265 = vmatprep.subr.mxu0 0.0
    %2266 = vmatpush1.msra.mxu0 0.0
    %2267 = vmatprep.subr.mxu0 0.0
    %2268 = vmatpush1.msra.mxu0 0.0
    %2269 = vmatprep.subr.mxu0 0.0
    %2270 = vmatpush1.msra.mxu0 0.0
    %2271 = vmatprep.subr.mxu0 0.0
    %2272 = vmatpush1.msra.mxu0 0.0
    %2273 = vmatprep.subr.mxu0 0.0
    %2274 = vmatpush1.msra.mxu0 0.0
    %2275 = vmatprep.subr.mxu0 0.0
    %2276 = vmatpush1.msra.mxu0 0.0
    %2277 = vmatprep.subr.mxu0 0.0
    %2278 = vmatpush1.msra.mxu0 0.0
    %2279 = vmatprep.subr.mxu0 0.0
    %2280 = vmatpush1.msra.mxu0 0.0
    %2281 = vmatprep.subr.mxu0 0.0
    %2282 = vmatpush1.msra.mxu0 0.0
    %2283 = vmatprep.subr.mxu0 0.0
    %2284 = vmatpush1.msra.mxu0 0.0
    %2285 = vmatprep.subr.mxu0 0.0
    %2286 = vmatpush1.msra.mxu0 0.0
    %2287 = vmatprep.subr.mxu0 0.0
    %2288 = vmatpush1.msra.mxu0 0.0
    %2289 = vmatprep.subr.mxu0 0.0
    %2290 = vmatpush1.msra.mxu0 0.0
    %2291 = vmatprep.subr.mxu0 0.0
    %2292 = vmatpush1.msra.mxu0 0.0
    %2293 = vmatprep.subr.mxu0 0.0
    %2294 = vmatpush1.msra.mxu0 0.0
    %2295 = vmatprep.subr.mxu0 0.0
    %2296 = vmatpush1.msra.mxu0 0.0
    %2297 = vmatprep.subr.mxu0 0.0
    %2298 = vmatpush1.msra.mxu0 0.0
    %2299 = vmatprep.subr.mxu0 0.0
    %2300 = vmatpush1.msra.mxu0 0.0
    %2301 = vmatprep.subr.mxu0 0.0
    %2302 = vmatpush1.msra.mxu0 0.0
    %2303 = vmatprep.subr.mxu0 0.0
    %2304 = vmatpush1.msra.mxu0 0.0
    %2305 = vmatprep.subr.mxu0 0.0
    %2306 = vmatpush1.msra.mxu0 0.0
    %2307 = vmatprep.subr.mxu0 0.0
    %2308 = vmatpush1.msra.mxu0 0.0
    %2309 = vmatprep.subr.mxu0 0.0
    %2310 = vmatpush1.msra.mxu0 0.0
    %2311 = vmatprep.subr.mxu0 0.0
    %2312 = vmatpush1.msra.mxu0 0.0
    %2313 = vmatprep.subr.mxu0 0.0
    %2314 = vmatpush1.msra.mxu0 0.0
    %2315 = vmatprep.mubr.f32.mxu0 0.0
    %2316 = vmatmul.mubr.f32.gmra.mrb[0].mxu0 %v1210
    %v2317 = vpop.f32.mrb[0].mxu0
    %v2318 = vadd.f32 0.0, %v2317
    %v2319 = vpop.f32.mrb[0].mxu0
    %v2320 = vadd.f32 0.0, %v2319
    %2321 = vdwg.mxu0
    %2322 = vmatprep.subr.mxu0 0.0
    %2323 = vmatpush1.msra.mxu0 %v2249
    %2324 = vmatprep.subr.mxu0 0.0
    %2325 = vmatpush1.msra.mxu0 0.0
    %2326 = vmatprep.subr.mxu0 0.0
    %2327 = vmatpush1.msra.mxu0 0.0
    %2328 = vmatprep.subr.mxu0 0.0
    %2329 = vmatpush1.msra.mxu0 0.0
    %2330 = vmatprep.subr.mxu0 0.0
    %2331 = vmatpush1.msra.mxu0 0.0
    %2332 = vmatprep.subr.mxu0 0.0
    %2333 = vmatpush1.msra.mxu0 0.0
    %2334 = vmatprep.subr.mxu0 0.0
    %2335 = vmatpush1.msra.mxu0 0.0
    %2336 = vmatprep.subr.mxu0 0.0
    %2337 = vmatpush1.msra.mxu0 0.0
    %2338 = vmatprep.subr.mxu0 0.0
    %2339 = vmatpush1.msra.mxu0 0.0
    %2340 = vmatprep.subr.mxu0 0.0
    %2341 = vmatpush1.msra.mxu0 0.0
    %2342 = vmatprep.subr.mxu0 0.0
    %2343 = vmatpush1.msra.mxu0 0.0
    %2344 = vmatprep.subr.mxu0 0.0
    %2345 = vmatpush1.msra.mxu0 0.0
    %2346 = vmatprep.subr.mxu0 0.0
    %2347 = vmatpush1.msra.mxu0 0.0
    %2348 = vmatprep.subr.mxu0 0.0
    %2349 = vmatpush1.msra.mxu0 0.0
    %2350 = vmatprep.subr.mxu0 0.0
    %2351 = vmatpush1.msra.mxu0 0.0
    %2352 = vmatprep.subr.mxu0 0.0
    %2353 = vmatpush1.msra.mxu0 0.0
    %2354 = vmatprep.subr.mxu0 0.0
    %2355 = vmatpush1.msra.mxu0 0.0
    %2356 = vmatprep.subr.mxu0 0.0
    %2357 = vmatpush1.msra.mxu0 0.0
    %2358 = vmatprep.subr.mxu0 0.0
    %2359 = vmatpush1.msra.mxu0 0.0
    %2360 = vmatprep.subr.mxu0 0.0
    %2361 = vmatpush1.msra.mxu0 0.0
    %2362 = vmatprep.subr.mxu0 0.0
    %2363 = vmatpush1.msra.mxu0 0.0
    %2364 = vmatprep.subr.mxu0 0.0
    %2365 = vmatpush1.msra.mxu0 0.0
    %2366 = vmatprep.subr.mxu0 0.0
    %2367 = vmatpush1.msra.mxu0 0.0
    %2368 = vmatprep.subr.mxu0 0.0
    %2369 = vmatpush1.msra.mxu0 0.0
    %2370 = vmatprep.subr.mxu0 0.0
    %2371 = vmatpush1.msra.mxu0 0.0
    %2372 = vmatprep.subr.mxu0 0.0
    %2373 = vmatpush1.msra.mxu0 0.0
    %2374 = vmatprep.subr.mxu0 0.0
    %2375 = vmatpush1.msra.mxu0 0.0
    %2376 = vmatprep.subr.mxu0 0.0
    %2377 = vmatpush1.msra.mxu0 0.0
    %2378 = vmatprep.subr.mxu0 0.0
    %2379 = vmatpush1.msra.mxu0 0.0
    %2380 = vmatprep.subr.mxu0 0.0
    %2381 = vmatpush1.msra.mxu0 0.0
    %2382 = vmatprep.subr.mxu0 0.0
    %2383 = vmatpush1.msra.mxu0 0.0
    %2384 = vmatprep.subr.mxu0 0.0
    %2385 = vmatpush1.msra.mxu0 0.0
    %2386 = vmatprep.mubr.f32.mxu0 0.0
    %2387 = vmatmul.mubr.f32.gmra.mrb[0].mxu0 %v1210
    %v2388 = vpop.f32.mrb[0].mxu0
    %v2389 = vadd.f32 0.0, %v2388
    %v2390 = vpop.f32.mrb[0].mxu0
    %2391 = vdwg.mxu0
    %v2392 = vmul.f32 %v2318, %v1363
    %v2393 = vmul.f32 %v2320, %v50
    %v2394 = vadd.f32 %v2392, %v2393
    %v2395 = vmul.f32 %v2320, 0.0
    %v2396 = vadd.f32 %v2395, %v2394
    %v2397 = vadd.f32 %v2396, %v2389
    %v2398 = vmul.f32 %v2244, 0.0
    %v2399 = vmul.f32 %v2244, 0.5
    %v2400 = vadd.f32 %v1370, %v2399
    %v2401 = vadd.f32 %v2398, %v2400
    %v2402 = vadd.f32 %v2401, %v2081
    %2403 = vmatprep.subr.mxu0 %v389
    %2404 = vmatpush1.msra.mxu0 %v388
    %2405 = vmatprep.subr.mxu0 %v391
    %2406 = vmatpush1.msra.mxu0 %v390
    %2407 = vmatprep.subr.mxu0 %v393
    %2408 = vmatpush1.msra.mxu0 %v392
    %2409 = vmatprep.subr.mxu0 %v395
    %2410 = vmatpush1.msra.mxu0 %v394
    %2411 = vmatprep.subr.mxu0 %v397
    %2412 = vmatpush1.msra.mxu0 %v396
    %2413 = vmatprep.subr.mxu0 %v399
    %2414 = vmatpush1.msra.mxu0 %v398
    %2415 = vmatprep.subr.mxu0 %v401
    %2416 = vmatpush1.msra.mxu0 %v400
    %2417 = vmatprep.subr.mxu0 %v403
    %2418 = vmatpush1.msra.mxu0 %v402
    %2419 = vmatprep.subr.mxu0 %v405
    %2420 = vmatpush1.msra.mxu0 %v404
    %2421 = vmatprep.subr.mxu0 %v407
    %2422 = vmatpush1.msra.mxu0 %v406
    %2423 = vmatprep.subr.mxu0 %v409
    %2424 = vmatpush1.msra.mxu0 %v408
    %2425 = vmatprep.subr.mxu0 %v411
    %2426 = vmatpush1.msra.mxu0 %v410
    %2427 = vmatprep.subr.mxu0 %v413
    %2428 = vmatpush1.msra.mxu0 %v412
    %2429 = vmatprep.subr.mxu0 %v415
    %2430 = vmatpush1.msra.mxu0 %v414
    %2431 = vmatprep.subr.mxu0 %v417
    %2432 = vmatpush1.msra.mxu0 %v416
    %2433 = vmatprep.subr.mxu0 %v419
    %2434 = vmatpush1.msra.mxu0 %v418
    %2435 = vmatprep.subr.mxu0 0.0
    %2436 = vmatpush1.msra.mxu0 0.0
    %2437 = vmatprep.subr.mxu0 0.0
    %2438 = vmatpush1.msra.mxu0 0.0
    %2439 = vmatprep.subr.mxu0 0.0
    %2440 = vmatpush1.msra.mxu0 0.0
    %2441 = vmatprep.subr.mxu0 0.0
    %2442 = vmatpush1.msra.mxu0 0.0
    %2443 = vmatprep.subr.mxu0 0.0
    %2444 = vmatpush1.msra.mxu0 0.0
    %2445 = vmatprep.subr.mxu0 0.0
    %2446 = vmatpush1.msra.mxu0 0.0
    %2447 = vmatprep.subr.mxu0 0.0
    %2448 = vmatpush1.msra.mxu0 0.0
    %2449 = vmatprep.subr.mxu0 0.0
    %2450 = vmatpush1.msra.mxu0 0.0
    %2451 = vmatprep.subr.mxu0 0.0
    %2452 = vmatpush1.msra.mxu0 0.0
    %2453 = vmatprep.subr.mxu0 0.0
    %2454 = vmatpush1.msra.mxu0 0.0
    %2455 = vmatprep.subr.mxu0 0.0
    %2456 = vmatpush1.msra.mxu0 0.0
    %2457 = vmatprep.subr.mxu0 0.0
    %2458 = vmatpush1.msra.mxu0 0.0
    %2459 = vmatprep.subr.mxu0 0.0
    %2460 = vmatpush1.msra.mxu0 0.0
    %2461 = vmatprep.subr.mxu0 0.0
    %2462 = vmatpush1.msra.mxu0 0.0
    %2463 = vmatprep.subr.mxu0 0.0
    %2464 = vmatpush1.msra.mxu0 0.0
    %2465 = vmatprep.subr.mxu0 0.0
    %2466 = vmatpush1.msra.mxu0 0.0
    %2467 = vmatprep.mubr.f32.mxu0 0.0
    %2468 = vmatmul.mubr.f32.gmra.mrb[0].mxu0 %v2397
    %v2469 = vpop.f32.mrb[0].mxu0
    %v2470 = vadd.f32 %v1379, %v2469
    %v2471 = vpop.f32.mrb[0].mxu0
    %v2472 = vadd.f32 %v1383, %v2471
    %2473 = vmatprep.mubr.f32.mxu0 0.0
    %2474 = vmatmul.mubr.f32.gmra.mrb[0].mxu0 %v2402
    %v2475 = vpop.f32.mrb[0].mxu0
    %v2476 = vpop.f32.mrb[0].mxu0
    %2477 = vdwg.mxu0
    %s2478 = scalar_lea.vmem %s13, 16
    %2479 = vst [vmem:[%s2478] sm:$0xff] %v2470
    %2480 = vst [vmem:[%s2478 + $0x8] sm:$0xff] %v2472
    %v2481 = vld [vmem:[%s11] sm:$0xff]
    %v2482 = vld [vmem:[%s11 + $0x8] sm:$0xff]
    %v2483 = vld [vmem:[%s11 + $0x10] sm:$0xff]
    %v2484 = vld [vmem:[%s11 + $0x18] sm:$0xff]
    %v2485 = vld [vmem:[%s11 + $0x20] sm:$0xff]
    %v2486 = vld [vmem:[%s11 + $0x28] sm:$0xff]
    %v2487 = vld [vmem:[%s11 + $0x30] sm:$0xff]
    %v2488 = vld [vmem:[%s11 + $0x38] sm:$0xff]
    %v2489 = vld [vmem:[%s11 + $0x40] sm:$0xff]
    %v2490 = vld [vmem:[%s11 + $0x48] sm:$0xff]
    %v2491 = vld [vmem:[%s11 + $0x50] sm:$0xff]
    %v2492 = vld [vmem:[%s11 + $0x58] sm:$0xff]
    %v2493 = vld [vmem:[%s11 + $0x60] sm:$0xff]
    %v2494 = vld [vmem:[%s11 + $0x68] sm:$0xff]
    %v2495 = vld [vmem:[%s11 + $0x70] sm:$0xff]
    %v2496 = vld [vmem:[%s11 + $0x78] sm:$0xff]
    %v2497 = vld [vmem:[%s11 + $0x80] sm:$0xff]
    %v2498 = vld [vmem:[%s11 + $0x88] sm:$0xff]
    %v2499 = vld [vmem:[%s11 + $0x90] sm:$0xff]
    %v2500 = vld [vmem:[%s11 + $0x98] sm:$0xff]
    %v2501 = vld [vmem:[%s11 + $0xa0] sm:$0xff]
    %v2502 = vld [vmem:[%s11 + $0xa8] sm:$0xff]
    %v2503 = vld [vmem:[%s11 + $0xb0] sm:$0xff]
    %v2504 = vld [vmem:[%s11 + $0xb8] sm:$0xff]
    %v2505 = vld [vmem:[%s11 + $0xc0] sm:$0xff]
    %v2506 = vld [vmem:[%s11 + $0xc8] sm:$0xff]
    %v2507 = vld [vmem:[%s11 + $0xd0] sm:$0xff]
    %v2508 = vld [vmem:[%s11 + $0xd8] sm:$0xff]
    %v2509 = vld [vmem:[%s11 + $0xe0] sm:$0xff]
    %v2510 = vld [vmem:[%s11 + $0xe8] sm:$0xff]
    %v2511 = vld [vmem:[%s11 + $0xf0] sm:$0xff]
    %v2512 = vld [vmem:[%s11 + $0xf8] sm:$0xff]
    %v2513 = vld [vmem:[%s12] sm:$0x3]
    %v2515 = vlaneseq
    %v2516 = vshrl.u32 %v2515, 7
    %v2517 = vsub.s32 0, %v2516
    %v2518 = vrot.slane %v2513, %v2517
    %v2519 = vlaneseq
    %v2520 = vshrl.u32 %v2519, 7
    %v2521 = vsub.s32 1, %v2520
    %v2522 = vrot.slane %v2513, %v2521
    %2525 = vmatprep.subr.mxu0 %v2482
    %2526 = vmatpush1.msra.mxu0 %v2481
    %2527 = vmatprep.subr.mxu0 %v2484
    %2528 = vmatpush1.msra.mxu0 %v2483
    %2529 = vmatprep.subr.mxu0 %v2486
    %2530 = vmatpush1.msra.mxu0 %v2485
    %2531 = vmatprep.subr.mxu0 %v2488
    %2532 = vmatpush1.msra.mxu0 %v2487
    %2533 = vmatprep.subr.mxu0 %v2490
    %2534 = vmatpush1.msra.mxu0 %v2489
    %2535 = vmatprep.subr.mxu0 %v2492
    %2536 = vmatpush1.msra.mxu0 %v2491
    %2537 = vmatprep.subr.mxu0 %v2494
    %2538 = vmatpush1.msra.mxu0 %v2493
    %2539 = vmatprep.subr.mxu0 %v2496
    %2540 = vmatpush1.msra.mxu0 %v2495
    %2541 = vmatprep.subr.mxu0 %v2498
    %2542 = vmatpush1.msra.mxu0 %v2497
    %2543 = vmatprep.subr.mxu0 %v2500
    %2544 = vmatpush1.msra.mxu0 %v2499
    %2545 = vmatprep.subr.mxu0 %v2502
    %2546 = vmatpush1.msra.mxu0 %v2501
    %2547 = vmatprep.subr.mxu0 %v2504
    %2548 = vmatpush1.msra.mxu0 %v2503
    %2549 = vmatprep.subr.mxu0 %v2506
    %2550 = vmatpush1.msra.mxu0 %v2505
    %2551 = vmatprep.subr.mxu0 %v2508
    %2552 = vmatpush1.msra.mxu0 %v2507
    %2553 = vmatprep.subr.mxu0 %v2510
    %2554 = vmatpush1.msra.mxu0 %v2509
    %2555 = vmatprep.subr.mxu0 %v2512
    %2556 = vmatpush1.msra.mxu0 %v2511
    %2557 = vmatprep.subr.mxu0 0.0
    %2558 = vmatpush1.msra.mxu0 0.0
    %2559 = vmatprep.subr.mxu0 0.0
    %2560 = vmatpush1.msra.mxu0 0.0
    %2561 = vmatprep.subr.mxu0 0.0
    %2562 = vmatpush1.msra.mxu0 0.0
    %2563 = vmatprep.subr.mxu0 0.0
    %2564 = vmatpush1.msra.mxu0 0.0
    %2565 = vmatprep.subr.mxu0 0.0
    %2566 = vmatpush1.msra.mxu0 0.0
    %2567 = vmatprep.subr.mxu0 0.0
    %2568 = vmatpush1.msra.mxu0 0.0
    %2569 = vmatprep.subr.mxu0 0.0
    %2570 = vmatpush1.msra.mxu0 0.0
    %2571 = vmatprep.subr.mxu0 0.0
    %2572 = vmatpush1.msra.mxu0 0.0
    %2573 = vmatprep.subr.mxu0 0.0
    %2574 = vmatpush1.msra.mxu0 0.0
    %2575 = vmatprep.subr.mxu0 0.0
    %2576 = vmatpush1.msra.mxu0 0.0
    %2577 = vmatprep.subr.mxu0 0.0
    %2578 = vmatpush1.msra.mxu0 0.0
    %2579 = vmatprep.subr.mxu0 0.0
    %2580 = vmatpush1.msra.mxu0 0.0
    %2581 = vmatprep.subr.mxu0 0.0
    %2582 = vmatpush1.msra.mxu0 0.0
    %2583 = vmatprep.subr.mxu0 0.0
    %2584 = vmatpush1.msra.mxu0 0.0
    %2585 = vmatprep.subr.mxu0 0.0
    %2586 = vmatpush1.msra.mxu0 0.0
    %2587 = vmatprep.subr.mxu0 0.0
    %2588 = vmatpush1.msra.mxu0 0.0
    %2589 = vmatprep.mubr.f32.mxu0 0.0
    %2590 = vmatmul.mubr.f32.gmra.mrb[0].mxu0 %v1867
    %v2591 = vpop.f32.mrb[0].mxu0
    %v2592 = vadd.f32 %v2518, %v2591
    %v2593 = vpop.f32.mrb[0].mxu0
    %v2594 = vadd.f32 %v2522, %v2593
    %2595 = vdwg.mxu0
    %v2598 = vcombine.low %v2592, %v2594
    %v2600 = vunpack.c.l.s4 1983009808
    %v2601 = vunpack.c.0.s8 %v2600
    %v2602 = vlaneseq
    %v2603 = vshrl.u32 %v2602, 7
    %v2604 = vsub.s32 %v2601, %v2603
    %v2605 = vrot.slane %v2598, %v2604
    %2607 = vst [vmem:[#allocation2] sm:$0xf] %v2605
    // Predicated region
    $region54: #{facial_reaction_forward.1} parent=1 // pred_check
      _
    $region55: #{facial_reaction_forward.1} parent=1 // pred_check_branch
      %2609 = sbr.rel (0) target = $region57
    $region56: #{facial_reaction_forward.1} parent=1 // pred_region
      _
    $region57: #{facial_reaction_forward.1} parent=1 // pred_fallthru
      _
    // Predicated region
    $region58: #{facial_reaction_forward.1} parent=1 // pred_check
      _
    $region59: #{facial_reaction_forward.1} parent=1 // pred_check_branch
      %2611 = sbr.rel (0) target = $region61
    $region60: #{facial_reaction_forward.1} parent=1 // pred_region
      _
    $region61: #{facial_reaction_forward.1} parent=1 // pred_fallthru
      _
    // Predicated region
    $region62: #{facial_reaction_forward.1} parent=1 // pred_check
      _
    $region63: #{facial_reaction_forward.1} parent=1 // pred_check_branch
      %2613 = sbr.rel (0) target = $region65
    $region64: #{facial_reaction_forward.1} parent=1 // pred_region
      %s2615 = ssub.s32 64, 64
      %2616 = vsyncadd [#allocation3], %s2615
      %s2618 = sshll.u32 [#allocation2], 4
      %s2619 = int_to_ptr.vmem [resolvable:$true] %s2618
      %2621 = dma.vmem_to_hbm [thread:$0]  %s2619, 64, %s15, [#allocation3]
    $region65: #{facial_reaction_forward.1} parent=1 // pred_fallthru
      _
    // Predicated region
    $region66: #{facial_reaction_forward.1} parent=1 // pred_check
      _
    $region67: #{facial_reaction_forward.1} parent=1 // pred_check_branch
      %2623 = sbr.rel (0) target = $region69
    $region68: #{facial_reaction_forward.1} parent=1 // pred_region
      _
    $region69: #{facial_reaction_forward.1} parent=1 // pred_fallthru
      _
    // Predicated region
    $region70: #{facial_reaction_forward.1} parent=1 // pred_check
      _
    $region71: #{facial_reaction_forward.1} parent=1 // pred_check_branch
      %2625 = sbr.rel (0) target = $region73
    $region72: #{facial_reaction_forward.1} parent=1 // pred_region
      _
    $region73: #{facial_reaction_forward.1} parent=1 // pred_fallthru
      _
    // Predicated region
    $region74: #{facial_reaction_forward.1} parent=1 // pred_check
      _
    $region75: #{facial_reaction_forward.1} parent=1 // pred_check_branch
      %2627 = sbr.rel (0) target = $region77
    $region76: #{facial_reaction_forward.1} parent=1 // pred_region
      %2628 = dma.done [#allocation3], 64
    $region77: #{facial_reaction_forward.1} parent=1 // pred_fallthru
      _
    %2629 = vsyncpa [#allocation3], 1

</llo_original>
